<compile_context>
chip_gen: v5e
topology: v5e:2x2
jax: 0.10.0
libtpu: 0.0.40
codegen_flags: <defaults>
</compile_context>

<pallas_src>
import jax
import jax.numpy as jnp
from jax.experimental import pallas as pl
from jax.experimental.pallas import tpu as pltpu


def _round_up(x, m):
    return (x + m - 1) // m * m


def _mm_anomaly_kernel(
    x_ref,        # (1, T, bb, Dseq) bf16  -- one batch block, all time steps
    s_ref,        # (bb, Dstruct)    bf16
    w_ihT_ref,    # (Dseq, 4*Hp)     bf16  -- gate-lane-aligned, zero padded
    w_hhT_ref,    # (Hp, 4*Hp)       bf16
    b_ref,        # (1, 4*Hp)        f32   -- b_ih + b_hh, gate-aligned
    w_sT_ref,     # (Dstruct, Hhp)   bf16
    b_s_ref,      # (1, Hhp)         f32
    w1T_seq_ref,  # (Hp, Hp)         bf16  -- fc1 rows for seq_embed
    w1T_str_ref,  # (Hhp, Hp)        bf16  -- fc1 rows for struct_embed
    b1_ref,       # (1, Hp)          f32
    w2_row_ref,   # (1, Hp)          f32   -- fc2 weight row (out_dim == 1)
    b2_ref,       # (1, 1)           f32
    out_ref,      # (bb, 128)        f32   -- lane-broadcast result row
    gx_scr,       # VMEM (T, bb, 4*Hp) bf16 -- hoisted input projections
):
    _, T, bb, _ = x_ref.shape
    Hp = w_hhT_ref.shape[0]

    # ---- Phase 1: hoisted input projection x_t @ W_ih^T + b for all t ----
    # One time step per iteration bounds the f32 intermediate to (bb, 4Hp);
    # bf16 storage halves scratch VMEM and Phase-1 store traffic.
    @pl.loop(0, T)
    def _(t):
        gx_scr[t] = (
            jnp.dot(x_ref[0, t], w_ihT_ref[...],
                    preferred_element_type=jnp.float32)
            + b_ref[...]
        ).astype(jnp.bfloat16)

    # Hoisted struct branch so its MXU/EUP work overlaps the recurrence
    # prologue instead of serializing after the loop.
    s_emb = jnp.maximum(
        jnp.dot(s_ref[...], w_sT_ref[...], preferred_element_type=jnp.float32)
        + b_s_ref[...],
        0.0)

    # ---- Phase 2: recurrence; h/c are vreg-resident f32 carries ----------
    # Gates produced and consumed one at a time (PyTorch order i, f, g, o);
    # padded lanes stay exactly 0 because c0 = 0, padded W_hh/b are 0 and
    # tanh(0) = 0 (the sigmoid(0)=0.5 factor multiplies a zero c / g).
    def step(t, carry):
        h, c = carry
        h_bf = h.astype(jnp.bfloat16)

        def gate(g, act):
            z = jnp.dot(h_bf, w_hhT_ref[:, g * Hp:(g + 1) * Hp],
                        preferred_element_type=jnp.float32)
            z = z + gx_scr[t, :, g * Hp:(g + 1) * Hp].astype(jnp.float32)
            return act(z)

        i_g = gate(0, jax.nn.sigmoid)
        g_g = gate(2, jnp.tanh)
        c_new = i_g * g_g
        f_g = gate(1, jax.nn.sigmoid)
        c_new = c_new + f_g * c
        o_g = gate(3, jax.nn.sigmoid)
        h_new = o_g * jnp.tanh(c_new)
        return (h_new, c_new)

    h0 = jnp.zeros((bb, Hp), jnp.float32)
    c0 = jnp.zeros((bb, Hp), jnp.float32)
    unroll = T if T <= 16 else 8          # partial unroll once T grows
    h_last, _ = jax.lax.fori_loop(0, T, step, (h0, c0), unroll=unroll)

    # ---- Phase 3: head MLP (split fc1, relu, fc2 reduction, sigmoid) ------
    # fc1 on cat([seq_embed, struct_embed]) == sum of two matmuls (no concat).
    z1 = (
        jnp.dot(h_last.astype(jnp.bfloat16), w1T_seq_ref[...],
                preferred_element_type=jnp.float32)
        + jnp.dot(s_emb.astype(jnp.bfloat16), w1T_str_ref[...],
                  preferred_element_type=jnp.float32)
        + b1_ref[...]
    )
    z1 = jnp.maximum(z1, 0.0)
    # out_dim == 1: VPU multiply + lane reduction instead of a near-empty MXU
    # matmul; broadcast across 128 lanes so the store is a full unmasked vst.
    z2 = jnp.sum(z1 * w2_row_ref[...], axis=-1, keepdims=True) + b2_ref[...]
    out_ref[...] = jnp.broadcast_to(jax.nn.sigmoid(z2), out_ref.shape)


@jax.jit
def multimodal_anomaly_forward(behavior_seq, structured_features, packed):
    """behavior_seq: (B, T, Dseq) f32, structured_features: (B, Dstruct) f32."""
    B, T, Dseq = behavior_seq.shape
    Dstruct = structured_features.shape[1]
    Hp = packed["w_hhT"].shape[0]
    Hhp = packed["w_sT"].shape[1]

    # Batch blocking: rows are a multiple of 16 (bf16 sublane packing) and
    # capped at 64 (bounds the recurrence's vreg live set); when B > 16 we
    # force >= 2 blocks so the "parallel" axis can use v7x's 2nd TensorCore.
    b16 = _round_up(B, 16)
    if b16 <= 16:
        bb = 16
    else:
        bb = min(64, _round_up(-(-b16 // 2), 16))
    Bp = _round_up(b16, bb)
    nb = Bp // bb

    # Lay out behavior_seq as (nb, T, bb, Dseq) bf16: contiguous per-block DMA
    # at half the f32 bytes, no in-kernel reshape or cast.
    x = jnp.zeros((Bp, T, Dseq), jnp.bfloat16).at[:B].set(
        behavior_seq.astype(jnp.bfloat16))
    x = x.reshape(nb, bb, T, Dseq).transpose(0, 2, 1, 3)       # (nb,T,bb,Dseq)
    s = jnp.zeros((Bp, Dstruct), jnp.bfloat16).at[:B].set(
        structured_features.astype(jnp.bfloat16))

    def _const(shape):
        nd = len(shape)
        # Constant (grid-invariant) operand: single-buffer it; default
        # double-buffering would waste 1x the weight footprint of VMEM.
        return pl.BlockSpec(shape, lambda *_: (0,) * nd,
                            pipeline_mode=pl.Buffered(1))

    grid_spec = pltpu.PrefetchScalarGridSpec(
        num_scalar_prefetch=0,
        grid=(nb,),
        in_specs=[
            pl.BlockSpec((1, T, bb, Dseq), lambda i: (i, 0, 0, 0)),
            pl.BlockSpec((bb, Dstruct), lambda i: (i, 0)),
            _const((Dseq, 4 * Hp)),
            _const((Hp, 4 * Hp)),
            _const((1, 4 * Hp)),
            _const((Dstruct, Hhp)),
            _const((1, Hhp)),
            _const((Hp, Hp)),
            _const((Hhp, Hp)),
            _const((1, Hp)),
            _const((1, Hp)),
            _const((1, 1)),
        ],
        out_specs=pl.BlockSpec((bb, 128), lambda i: (i, 0)),
        scratch_shapes=[pltpu.VMEM((T, bb, 4 * Hp), jnp.bfloat16)],
    )

    out = pl.pallas_call(
        _mm_anomaly_kernel,
        out_shape=jax.ShapeDtypeStruct((Bp, 128), jnp.float32),
        grid_spec=grid_spec,
        compiler_params=pltpu.CompilerParams(
            dimension_semantics=("parallel",),       # independent batch blocks
            vmem_limit_bytes=64 * 1024 * 1024,
        ),
    )(
        x, s,
        packed["w_ihT"], packed["w_hhT"], packed["b"],
        packed["w_sT"], packed["b_s"],
        packed["w1T_seq"], packed["w1T_str"], packed["b1"],
        packed["w2_row"], packed["b2"],
    )
    return out[:B, :1]


def pack_params(raw, hidden_dim):
    """Pad / transpose / bf16-cast the raw (PyTorch-layout) weights.

    Each LSTM gate gets its own 128-lane tile (H -> Hp); all padding is zero
    so padded lanes of the state/activations remain exactly zero.
    """
    H = hidden_dim
    Hh = H // 2
    Hp = _round_up(H, 128)
    Hhp = _round_up(Hh, 128)
    assert raw["w2"].shape[0] == 1, "fc2 reduction path assumes output_dim == 1"

    def gate_align_cols(m_T):
        # (fan_in, 4H) -> (fan_in, 4*Hp), each gate in its own lane tile.
        out = jnp.zeros((m_T.shape[0], 4 * Hp), jnp.float32)
        for g in range(4):
            out = out.at[:, g * Hp:g * Hp + H].set(m_T[:, g * H:(g + 1) * H])
        return out

    def pad2(m, rows, cols):
        out = jnp.zeros((rows, cols), jnp.float32)
        return out.at[:m.shape[0], :m.shape[1]].set(m)

    bf = lambda a: a.astype(jnp.bfloat16)

    w_ihT = gate_align_cols(raw["w_ih"].T)                       # (Dseq, 4Hp)
    w_hhT = pad2(gate_align_cols(raw["w_hh"].T), Hp, 4 * Hp)     # (Hp, 4Hp)
    b = gate_align_cols((raw["b_ih"] + raw["b_hh"])[None, :])    # (1, 4Hp)

    w_sT = pad2(raw["w_s"].T, raw["w_s"].shape[1], Hhp)          # (Dstruct, Hhp)
    b_s = pad2(raw["b_s"][None, :], 1, Hhp)                      # (1, Hhp)

    w1T = raw["w1"].T                                            # (H+Hh, H)
    w1T_seq = pad2(w1T[:H, :], Hp, Hp)                           # (Hp, Hp)
    w1T_str = pad2(w1T[H:, :], Hhp, Hp)                          # (Hhp, Hp)
    b1 = pad2(raw["b1"][None, :], 1, Hp)                         # (1, Hp)

    w2_row = pad2(raw["w2"], 1, Hp)                              # (1, Hp) f32
    b2 = raw["b2"].reshape(1, 1)                                 # (1, 1)

    return {
        "w_ihT": bf(w_ihT), "w_hhT": bf(w_hhT), "b": b,
        "w_sT": bf(w_sT), "b_s": b_s,
        "w1T_seq": bf(w1T_seq), "w1T_str": bf(w1T_str), "b1": b1,
        "w2_row": w2_row, "b2": b2,
    }


def init_params(key, seq_feat_dim, struct_feat_dim, hidden_dim, output_dim):
    """Deterministic synthetic parameters in PyTorch layout (f32)."""
    H = hidden_dim
    Hh = H // 2
    comb = H + Hh
    ks = jax.random.split(key, 10)
    u = lambda k, shape, fan: jax.random.uniform(
        k, shape, jnp.float32, -1.0 / jnp.sqrt(fan), 1.0 / jnp.sqrt(fan))
    return {
        "w_ih": u(ks[0], (4 * H, seq_feat_dim), H),   # LSTM weight_ih_l0
        "w_hh": u(ks[1], (4 * H, H), H),              # LSTM weight_hh_l0
        "b_ih": u(ks[2], (4 * H,), H),
        "b_hh": u(ks[3], (4 * H,), H),
        "w_s": u(ks[4], (Hh, struct_feat_dim), struct_feat_dim),
        "b_s": u(ks[5], (Hh,), struct_feat_dim),
        "w1": u(ks[6], (H, comb), comb),
        "b1": u(ks[7], (H,), comb),
        "w2": u(ks[8], (output_dim, H), H),
        "b2": u(ks[9], (output_dim,), H),
    }


def reference_forward(behavior_seq, structured_features, raw, hidden_dim):
    """Pure-JAX f32 reference mirroring the PyTorch module."""
    H = hidden_dim
    B = behavior_seq.shape[0]
    w_ihT = raw["w_ih"].T
    w_hhT = raw["w_hh"].T
    b = (raw["b_ih"] + raw["b_hh"])[None, :]
    h0 = jnp.zeros((B, H), jnp.float32)
    c0 = jnp.zeros((B, H), jnp.float32)

    def step(carry, x_t):
        h, c = carry
        gates = x_t @ w_ihT + h @ w_hhT + b
        i_g = jax.nn.sigmoid(gates[:, 0 * H:1 * H])
        f_g = jax.nn.sigmoid(gates[:, 1 * H:2 * H])
        g_g = jnp.tanh(gates[:, 2 * H:3 * H])
        o_g = jax.nn.sigmoid(gates[:, 3 * H:4 * H])
        c = f_g * c + i_g * g_g
        h = o_g * jnp.tanh(c)
        return (h, c), None

    (h_last, _), _ = jax.lax.scan(
        step, (h0, c0), jnp.transpose(behavior_seq, (1, 0, 2)))
    s_emb = jax.nn.relu(structured_features @ raw["w_s"].T + raw["b_s"][None, :])
    comb = jnp.concatenate([h_last, s_emb], axis=1)
    z1 = jax.nn.relu(comb @ raw["w1"].T + raw["b1"][None, :])
    z2 = z1 @ raw["w2"].T + raw["b2"][None, :]
    return jax.nn.sigmoid(z2)


if __name__ == "__main__":
    B, T = 2, 8
    SEQ_FEAT, STRUCT_FEAT = 32, 16
    HIDDEN, OUT = 32, 1

    key = jax.random.PRNGKey(0)
    k_seq, k_struct, k_params = jax.random.split(key, 3)

    behavior_seq = jax.random.normal(k_seq, (B, T, SEQ_FEAT), jnp.float32)
    structured = jax.random.normal(k_struct, (B, STRUCT_FEAT), jnp.float32)

    raw = init_params(k_params, SEQ_FEAT, STRUCT_FEAT, HIDDEN, OUT)
    packed = pack_params(raw, HIDDEN)

    out = multimodal_anomaly_forward(behavior_seq, structured, packed)
    out = jax.block_until_ready(out)

    ref = reference_forward(behavior_seq, structured, raw, HIDDEN)
    assert out.shape == (B, OUT), out.shape
    # bf16 MXU operands / bf16 gx storage (f32 accumulate) -> small drift vs.
    # the pure-f32 reference; tolerance calibrated for T=8.
    assert jnp.allclose(out, ref, atol=2e-2, rtol=2e-2), (
        out, ref, jnp.max(jnp.abs(out - ref)))

    print("KERNEL_OK")
</pallas_src>

<mosaic_0001>
module attributes {stable_mosaic.version = 11 : i64} {
  func.func @_mm_anomaly_kernel(%arg0: i32, %arg1: memref<1x8x16x32xbf16, #tpu.memory_space<vmem>>, %arg2: memref<16x16xbf16, #tpu.memory_space<vmem>>, %arg3: memref<32x512xbf16, #tpu.memory_space<vmem>>, %arg4: memref<128x512xbf16, #tpu.memory_space<vmem>>, %arg5: memref<1x512xf32, #tpu.memory_space<vmem>>, %arg6: memref<16x128xbf16, #tpu.memory_space<vmem>>, %arg7: memref<1x128xf32, #tpu.memory_space<vmem>>, %arg8: memref<128x128xbf16, #tpu.memory_space<vmem>>, %arg9: memref<128x128xbf16, #tpu.memory_space<vmem>>, %arg10: memref<1x128xf32, #tpu.memory_space<vmem>>, %arg11: memref<1x128xf32, #tpu.memory_space<vmem>>, %arg12: memref<1x1xf32, #tpu.memory_space<vmem>>, %arg13: memref<16x128xf32, #tpu.memory_space<vmem>>, %arg14: memref<8x16x512xbf16, #tpu.memory_space<vmem>>) attributes {dimension_semantics = [#tpu.dimension_semantics<parallel>], iteration_bounds = array<i64: 1>, scalar_prefetch = 0 : i64, scratch_operands = 1 : i64, tpu.core_type = #tpu.core_type<tc>, window_params = [{transform_indices = @transform_0, window_bounds = array<i64: 1, 8, 16, 32>}, {transform_indices = @transform_1, window_bounds = array<i64: 16, 16>}, {pipeline_mode = #tpu.pipeline_mode<synchronous>, transform_indices = @transform_2, window_bounds = array<i64: 32, 512>}, {pipeline_mode = #tpu.pipeline_mode<synchronous>, transform_indices = @transform_3, window_bounds = array<i64: 128, 512>}, {pipeline_mode = #tpu.pipeline_mode<synchronous>, transform_indices = @transform_4, window_bounds = array<i64: 1, 512>}, {pipeline_mode = #tpu.pipeline_mode<synchronous>, transform_indices = @transform_5, window_bounds = array<i64: 16, 128>}, {pipeline_mode = #tpu.pipeline_mode<synchronous>, transform_indices = @transform_6, window_bounds = array<i64: 1, 128>}, {pipeline_mode = #tpu.pipeline_mode<synchronous>, transform_indices = @transform_7, window_bounds = array<i64: 128, 128>}, {pipeline_mode = #tpu.pipeline_mode<synchronous>, transform_indices = @transform_8, window_bounds = array<i64: 128, 128>}, {pipeline_mode = #tpu.pipeline_mode<synchronous>, transform_indices = @transform_9, window_bounds = array<i64: 1, 128>}, {pipeline_mode = #tpu.pipeline_mode<synchronous>, transform_indices = @transform_10, window_bounds = array<i64: 1, 128>}, {pipeline_mode = #tpu.pipeline_mode<synchronous>, transform_indices = @transform_11, window_bounds = array<i64: 1, 1>}, {transform_indices = @transform_12, window_bounds = array<i64: 16, 128>}]} {
    %c0_i32 = arith.constant 0 : i32
    %c8_i32 = arith.constant 8 : i32
    %0 = arith.addi %c0_i32, %c8_i32 : i32
    %c1_i32 = arith.constant 1 : i32
    scf.for %arg15 = %c0_i32 to %0 step %c1_i32  : i32 {
      %c1_i32_210 = arith.constant 1 : i32
      %439 = arith.muli %arg15, %c1_i32_210 : i32
      %c0_i32_211 = arith.constant 0 : i32
      %440 = arith.addi %c0_i32_211, %439 : i32
      %c0_212 = arith.constant 0 : index
      %441 = arith.index_cast %440 : i32 to index
      %c0_213 = arith.constant 0 : index
      %c0_214 = arith.constant 0 : index
      %442 = vector.load %arg1[%c0_212, %441, %c0_213, %c0_214] : memref<1x8x16x32xbf16, #tpu.memory_space<vmem>>, vector<1x1x16x32xbf16>
      %443 = vector.shape_cast %442 : vector<1x1x16x32xbf16> to vector<16x32xbf16>
      %c0_215 = arith.constant 0 : index
      %c0_216 = arith.constant 0 : index
      %444 = vector.load %arg3[%c0_215, %c0_216] : memref<32x512xbf16, #tpu.memory_space<vmem>>, vector<32x512xbf16>
      %cst_217 = arith.constant dense<0.000000e+00> : vector<16x512xf32>
      %445 = tpu.matmul %443, %444, %cst_217 {dimension_numbers = #tpu.dot_dimension_numbers<[1], [0], [0], [1], [0, 0, 1, 1], [], []>} : vector<16x32xbf16>, vector<32x512xbf16>, vector<16x512xf32> -> vector<16x512xf32>
      %c0_218 = arith.constant 0 : index
      %c0_219 = arith.constant 0 : index
      %446 = vector.load %arg5[%c0_218, %c0_219] : memref<1x512xf32, #tpu.memory_space<vmem>>, vector<1x512xf32>
      %447 = vector.broadcast %446 : vector<1x512xf32> to vector<16x512xf32>
      %448 = arith.addf %445, %447 : vector<16x512xf32>
      %449 = arith.truncf %448 : vector<16x512xf32> to vector<16x512xbf16>
      %450 = arith.index_cast %440 : i32 to index
      %c0_220 = arith.constant 0 : index
      %c0_221 = arith.constant 0 : index
      %451 = vector.load %arg14[%450, %c0_220, %c0_221] : memref<8x16x512xbf16, #tpu.memory_space<vmem>>, vector<1x16x512xbf16>
      %452 = vector.shape_cast %451 : vector<1x16x512xbf16> to vector<16x512xbf16>
      %453 = vector.shape_cast %449 : vector<16x512xbf16> to vector<1x16x512xbf16>
      tpu.vector_store %arg14[%450, %c0_220, %c0_221], %453 {strides = array<i32>} : memref<8x16x512xbf16, #tpu.memory_space<vmem>>, vector<1x16x512xbf16>,
    }
    %c8_i32_0 = arith.constant 8 : i32
    %c0 = arith.constant 0 : index
    %c0_1 = arith.constant 0 : index
    %1 = vector.load %arg2[%c0, %c0_1] : memref<16x16xbf16, #tpu.memory_space<vmem>>, vector<16x16xbf16>
    %c0_2 = arith.constant 0 : index
    %c0_3 = arith.constant 0 : index
    %2 = vector.load %arg6[%c0_2, %c0_3] : memref<16x128xbf16, #tpu.memory_space<vmem>>, vector<16x128xbf16>
    %cst = arith.constant dense<0.000000e+00> : vector<16x128xf32>
    %3 = tpu.matmul %1, %2, %cst {dimension_numbers = #tpu.dot_dimension_numbers<[1], [0], [0], [1], [0, 0, 1, 1], [], []>} : vector<16x16xbf16>, vector<16x128xbf16>, vector<16x128xf32> -> vector<16x128xf32>
    %c0_4 = arith.constant 0 : index
    %c0_5 = arith.constant 0 : index
    %4 = vector.load %arg7[%c0_4, %c0_5] : memref<1x128xf32, #tpu.memory_space<vmem>>, vector<1x128xf32>
    %5 = vector.broadcast %4 : vector<1x128xf32> to vector<16x128xf32>
    %6 = arith.addf %3, %5 : vector<16x128xf32>
    %cst_6 = arith.constant 0.000000e+00 : f32
    %7 = vector.broadcast %cst_6 : f32 to vector<16x128xf32>
    %8 = arith.maximumf %6, %7 : vector<16x128xf32>
    %cst_7 = arith.constant 0.000000e+00 : f32
    %9 = vector.broadcast %cst_7 : f32 to vector<16x128xf32>
    %cst_8 = arith.constant 0.000000e+00 : f32
    %10 = vector.broadcast %cst_8 : f32 to vector<16x128xf32>
    %c0_i32_9 = arith.constant 0 : i32
    %11 = arith.truncf %9 : vector<16x128xf32> to vector<16x128xbf16>
    %c0_10 = arith.constant 0 : index
    %c0_11 = arith.constant 0 : index
    %12 = vector.load %arg4[%c0_10, %c0_11] : memref<128x512xbf16, #tpu.memory_space<vmem>>, vector<128x128xbf16>
    %cst_12 = arith.constant dense<0.000000e+00> : vector<16x128xf32>
    %13 = tpu.matmul %11, %12, %cst_12 {dimension_numbers = #tpu.dot_dimension_numbers<[1], [0], [0], [1], [0, 0, 1, 1], [], []>} : vector<16x128xbf16>, vector<128x128xbf16>, vector<16x128xf32> -> vector<16x128xf32>
    %14 = arith.index_cast %c0_i32_9 : i32 to index
    %c0_13 = arith.constant 0 : index
    %c0_14 = arith.constant 0 : index
    %15 = vector.load %arg14[%14, %c0_13, %c0_14] : memref<8x16x512xbf16, #tpu.memory_space<vmem>>, vector<1x16x128xbf16>
    %16 = vector.shape_cast %15 : vector<1x16x128xbf16> to vector<16x128xbf16>
    %17 = arith.extf %16 : vector<16x128xbf16> to vector<16x128xf32>
    %18 = arith.addf %13, %17 : vector<16x128xf32>
    %19 = arith.negf %18 : vector<16x128xf32>
    %20 = math.exp %19 : vector<16x128xf32>
    %cst_15 = arith.constant 1.000000e+00 : f32
    %21 = vector.broadcast %cst_15 : f32 to vector<16x128xf32>
    %22 = arith.addf %21, %20 : vector<16x128xf32>
    %23 = arith.divf %21, %22 : vector<16x128xf32>
    %c0_16 = arith.constant 0 : index
    %c256 = arith.constant 256 : index
    %24 = vector.load %arg4[%c0_16, %c256] : memref<128x512xbf16, #tpu.memory_space<vmem>>, vector<128x128xbf16>
    %cst_17 = arith.constant dense<0.000000e+00> : vector<16x128xf32>
    %25 = tpu.matmul %11, %24, %cst_17 {dimension_numbers = #tpu.dot_dimension_numbers<[1], [0], [0], [1], [0, 0, 1, 1], [], []>} : vector<16x128xbf16>, vector<128x128xbf16>, vector<16x128xf32> -> vector<16x128xf32>
    %26 = arith.index_cast %c0_i32_9 : i32 to index
    %c0_18 = arith.constant 0 : index
    %c256_19 = arith.constant 256 : index
    %27 = vector.load %arg14[%26, %c0_18, %c256_19] : memref<8x16x512xbf16, #tpu.memory_space<vmem>>, vector<1x16x128xbf16>
    %28 = vector.shape_cast %27 : vector<1x16x128xbf16> to vector<16x128xbf16>
    %29 = arith.extf %28 : vector<16x128xbf16> to vector<16x128xf32>
    %30 = arith.addf %25, %29 : vector<16x128xf32>
    %31 = math.tanh %30 : vector<16x128xf32>
    %32 = arith.mulf %23, %31 : vector<16x128xf32>
    %c0_20 = arith.constant 0 : index
    %c128 = arith.constant 128 : index
    %33 = vector.load %arg4[%c0_20, %c128] : memref<128x512xbf16, #tpu.memory_space<vmem>>, vector<128x128xbf16>
    %cst_21 = arith.constant dense<0.000000e+00> : vector<16x128xf32>
    %34 = tpu.matmul %11, %33, %cst_21 {dimension_numbers = #tpu.dot_dimension_numbers<[1], [0], [0], [1], [0, 0, 1, 1], [], []>} : vector<16x128xbf16>, vector<128x128xbf16>, vector<16x128xf32> -> vector<16x128xf32>
    %35 = arith.index_cast %c0_i32_9 : i32 to index
    %c0_22 = arith.constant 0 : index
    %c128_23 = arith.constant 128 : index
    %36 = vector.load %arg14[%35, %c0_22, %c128_23] : memref<8x16x512xbf16, #tpu.memory_space<vmem>>, vector<1x16x128xbf16>
    %37 = vector.shape_cast %36 : vector<1x16x128xbf16> to vector<16x128xbf16>
    %38 = arith.extf %37 : vector<16x128xbf16> to vector<16x128xf32>
    %39 = arith.addf %34, %38 : vector<16x128xf32>
    %40 = arith.negf %39 : vector<16x128xf32>
    %41 = math.exp %40 : vector<16x128xf32>
    %cst_24 = arith.constant 1.000000e+00 : f32
    %42 = vector.broadcast %cst_24 : f32 to vector<16x128xf32>
    %43 = arith.addf %42, %41 : vector<16x128xf32>
    %44 = arith.divf %42, %43 : vector<16x128xf32>
    %45 = arith.mulf %44, %10 : vector<16x128xf32>
    %46 = arith.addf %32, %45 : vector<16x128xf32>
    %c0_25 = arith.constant 0 : index
    %c384 = arith.constant 384 : index
    %47 = vector.load %arg4[%c0_25, %c384] : memref<128x512xbf16, #tpu.memory_space<vmem>>, vector<128x128xbf16>
    %cst_26 = arith.constant dense<0.000000e+00> : vector<16x128xf32>
    %48 = tpu.matmul %11, %47, %cst_26 {dimension_numbers = #tpu.dot_dimension_numbers<[1], [0], [0], [1], [0, 0, 1, 1], [], []>} : vector<16x128xbf16>, vector<128x128xbf16>, vector<16x128xf32> -> vector<16x128xf32>
    %49 = arith.index_cast %c0_i32_9 : i32 to index
    %c0_27 = arith.constant 0 : index
    %c384_28 = arith.constant 384 : index
    %50 = vector.load %arg14[%49, %c0_27, %c384_28] : memref<8x16x512xbf16, #tpu.memory_space<vmem>>, vector<1x16x128xbf16>
    %51 = vector.shape_cast %50 : vector<1x16x128xbf16> to vector<16x128xbf16>
    %52 = arith.extf %51 : vector<16x128xbf16> to vector<16x128xf32>
    %53 = arith.addf %48, %52 : vector<16x128xf32>
    %54 = arith.negf %53 : vector<16x128xf32>
    %55 = math.exp %54 : vector<16x128xf32>
    %cst_29 = arith.constant 1.000000e+00 : f32
    %56 = vector.broadcast %cst_29 : f32 to vector<16x128xf32>
    %57 = arith.addf %56, %55 : vector<16x128xf32>
    %58 = arith.divf %56, %57 : vector<16x128xf32>
    %59 = math.tanh %46 : vector<16x128xf32>
    %60 = arith.mulf %58, %59 : vector<16x128xf32>
    %c1_i32_30 = arith.constant 1 : i32
    %61 = arith.truncf %60 : vector<16x128xf32> to vector<16x128xbf16>
    %c0_31 = arith.constant 0 : index
    %c0_32 = arith.constant 0 : index
    %62 = vector.load %arg4[%c0_31, %c0_32] : memref<128x512xbf16, #tpu.memory_space<vmem>>, vector<128x128xbf16>
    %cst_33 = arith.constant dense<0.000000e+00> : vector<16x128xf32>
    %63 = tpu.matmul %61, %62, %cst_33 {dimension_numbers = #tpu.dot_dimension_numbers<[1], [0], [0], [1], [0, 0, 1, 1], [], []>} : vector<16x128xbf16>, vector<128x128xbf16>, vector<16x128xf32> -> vector<16x128xf32>
    %64 = arith.index_cast %c1_i32_30 : i32 to index
    %c0_34 = arith.constant 0 : index
    %c0_35 = arith.constant 0 : index
    %65 = vector.load %arg14[%64, %c0_34, %c0_35] : memref<8x16x512xbf16, #tpu.memory_space<vmem>>, vector<1x16x128xbf16>
    %66 = vector.shape_cast %65 : vector<1x16x128xbf16> to vector<16x128xbf16>
    %67 = arith.extf %66 : vector<16x128xbf16> to vector<16x128xf32>
    %68 = arith.addf %63, %67 : vector<16x128xf32>
    %69 = arith.negf %68 : vector<16x128xf32>
    %70 = math.exp %69 : vector<16x128xf32>
    %cst_36 = arith.constant 1.000000e+00 : f32
    %71 = vector.broadcast %cst_36 : f32 to vector<16x128xf32>
    %72 = arith.addf %71, %70 : vector<16x128xf32>
    %73 = arith.divf %71, %72 : vector<16x128xf32>
    %c0_37 = arith.constant 0 : index
    %c256_38 = arith.constant 256 : index
    %74 = vector.load %arg4[%c0_37, %c256_38] : memref<128x512xbf16, #tpu.memory_space<vmem>>, vector<128x128xbf16>
    %cst_39 = arith.constant dense<0.000000e+00> : vector<16x128xf32>
    %75 = tpu.matmul %61, %74, %cst_39 {dimension_numbers = #tpu.dot_dimension_numbers<[1], [0], [0], [1], [0, 0, 1, 1], [], []>} : vector<16x128xbf16>, vector<128x128xbf16>, vector<16x128xf32> -> vector<16x128xf32>
    %76 = arith.index_cast %c1_i32_30 : i32 to index
    %c0_40 = arith.constant 0 : index
    %c256_41 = arith.constant 256 : index
    %77 = vector.load %arg14[%76, %c0_40, %c256_41] : memref<8x16x512xbf16, #tpu.memory_space<vmem>>, vector<1x16x128xbf16>
    %78 = vector.shape_cast %77 : vector<1x16x128xbf16> to vector<16x128xbf16>
    %79 = arith.extf %78 : vector<16x128xbf16> to vector<16x128xf32>
    %80 = arith.addf %75, %79 : vector<16x128xf32>
    %81 = math.tanh %80 : vector<16x128xf32>
    %82 = arith.mulf %73, %81 : vector<16x128xf32>
    %c0_42 = arith.constant 0 : index
    %c128_43 = arith.constant 128 : index
    %83 = vector.load %arg4[%c0_42, %c128_43] : memref<128x512xbf16, #tpu.memory_space<vmem>>, vector<128x128xbf16>
    %cst_44 = arith.constant dense<0.000000e+00> : vector<16x128xf32>
    %84 = tpu.matmul %61, %83, %cst_44 {dimension_numbers = #tpu.dot_dimension_numbers<[1], [0], [0], [1], [0, 0, 1, 1], [], []>} : vector<16x128xbf16>, vector<128x128xbf16>, vector<16x128xf32> -> vector<16x128xf32>
    %85 = arith.index_cast %c1_i32_30 : i32 to index
    %c0_45 = arith.constant 0 : index
    %c128_46 = arith.constant 128 : index
    %86 = vector.load %arg14[%85, %c0_45, %c128_46] : memref<8x16x512xbf16, #tpu.memory_space<vmem>>, vector<1x16x128xbf16>
    %87 = vector.shape_cast %86 : vector<1x16x128xbf16> to vector<16x128xbf16>
    %88 = arith.extf %87 : vector<16x128xbf16> to vector<16x128xf32>
    %89 = arith.addf %84, %88 : vector<16x128xf32>
    %90 = arith.negf %89 : vector<16x128xf32>
    %91 = math.exp %90 : vector<16x128xf32>
    %cst_47 = arith.constant 1.000000e+00 : f32
    %92 = vector.broadcast %cst_47 : f32 to vector<16x128xf32>
    %93 = arith.addf %92, %91 : vector<16x128xf32>
    %94 = arith.divf %92, %93 : vector<16x128xf32>
    %95 = arith.mulf %94, %46 : vector<16x128xf32>
    %96 = arith.addf %82, %95 : vector<16x128xf32>
    %c0_48 = arith.constant 0 : index
    %c384_49 = arith.constant 384 : index
    %97 = vector.load %arg4[%c0_48, %c384_49] : memref<128x512xbf16, #tpu.memory_space<vmem>>, vector<128x128xbf16>
    %cst_50 = arith.constant dense<0.000000e+00> : vector<16x128xf32>
    %98 = tpu.matmul %61, %97, %cst_50 {dimension_numbers = #tpu.dot_dimension_numbers<[1], [0], [0], [1], [0, 0, 1, 1], [], []>} : vector<16x128xbf16>, vector<128x128xbf16>, vector<16x128xf32> -> vector<16x128xf32>
    %99 = arith.index_cast %c1_i32_30 : i32 to index
    %c0_51 = arith.constant 0 : index
    %c384_52 = arith.constant 384 : index
    %100 = vector.load %arg14[%99, %c0_51, %c384_52] : memref<8x16x512xbf16, #tpu.memory_space<vmem>>, vector<1x16x128xbf16>
    %101 = vector.shape_cast %100 : vector<1x16x128xbf16> to vector<16x128xbf16>
    %102 = arith.extf %101 : vector<16x128xbf16> to vector<16x128xf32>
    %103 = arith.addf %98, %102 : vector<16x128xf32>
    %104 = arith.negf %103 : vector<16x128xf32>
    %105 = math.exp %104 : vector<16x128xf32>
    %cst_53 = arith.constant 1.000000e+00 : f32
    %106 = vector.broadcast %cst_53 : f32 to vector<16x128xf32>
    %107 = arith.addf %106, %105 : vector<16x128xf32>
    %108 = arith.divf %106, %107 : vector<16x128xf32>
    %109 = math.tanh %96 : vector<16x128xf32>
    %110 = arith.mulf %108, %109 : vector<16x128xf32>
    %c2_i32 = arith.constant 2 : i32
    %111 = arith.truncf %110 : vector<16x128xf32> to vector<16x128xbf16>
    %c0_54 = arith.constant 0 : index
    %c0_55 = arith.constant 0 : index
    %112 = vector.load %arg4[%c0_54, %c0_55] : memref<128x512xbf16, #tpu.memory_space<vmem>>, vector<128x128xbf16>
    %cst_56 = arith.constant dense<0.000000e+00> : vector<16x128xf32>
    %113 = tpu.matmul %111, %112, %cst_56 {dimension_numbers = #tpu.dot_dimension_numbers<[1], [0], [0], [1], [0, 0, 1, 1], [], []>} : vector<16x128xbf16>, vector<128x128xbf16>, vector<16x128xf32> -> vector<16x128xf32>
    %114 = arith.index_cast %c2_i32 : i32 to index
    %c0_57 = arith.constant 0 : index
    %c0_58 = arith.constant 0 : index
    %115 = vector.load %arg14[%114, %c0_57, %c0_58] : memref<8x16x512xbf16, #tpu.memory_space<vmem>>, vector<1x16x128xbf16>
    %116 = vector.shape_cast %115 : vector<1x16x128xbf16> to vector<16x128xbf16>
    %117 = arith.extf %116 : vector<16x128xbf16> to vector<16x128xf32>
    %118 = arith.addf %113, %117 : vector<16x128xf32>
    %119 = arith.negf %118 : vector<16x128xf32>
    %120 = math.exp %119 : vector<16x128xf32>
    %cst_59 = arith.constant 1.000000e+00 : f32
    %121 = vector.broadcast %cst_59 : f32 to vector<16x128xf32>
    %122 = arith.addf %121, %120 : vector<16x128xf32>
    %123 = arith.divf %121, %122 : vector<16x128xf32>
    %c0_60 = arith.constant 0 : index
    %c256_61 = arith.constant 256 : index
    %124 = vector.load %arg4[%c0_60, %c256_61] : memref<128x512xbf16, #tpu.memory_space<vmem>>, vector<128x128xbf16>
    %cst_62 = arith.constant dense<0.000000e+00> : vector<16x128xf32>
    %125 = tpu.matmul %111, %124, %cst_62 {dimension_numbers = #tpu.dot_dimension_numbers<[1], [0], [0], [1], [0, 0, 1, 1], [], []>} : vector<16x128xbf16>, vector<128x128xbf16>, vector<16x128xf32> -> vector<16x128xf32>
    %126 = arith.index_cast %c2_i32 : i32 to index
    %c0_63 = arith.constant 0 : index
    %c256_64 = arith.constant 256 : index
    %127 = vector.load %arg14[%126, %c0_63, %c256_64] : memref<8x16x512xbf16, #tpu.memory_space<vmem>>, vector<1x16x128xbf16>
    %128 = vector.shape_cast %127 : vector<1x16x128xbf16> to vector<16x128xbf16>
    %129 = arith.extf %128 : vector<16x128xbf16> to vector<16x128xf32>
    %130 = arith.addf %125, %129 : vector<16x128xf32>
    %131 = math.tanh %130 : vector<16x128xf32>
    %132 = arith.mulf %123, %131 : vector<16x128xf32>
    %c0_65 = arith.constant 0 : index
    %c128_66 = arith.constant 128 : index
    %133 = vector.load %arg4[%c0_65, %c128_66] : memref<128x512xbf16, #tpu.memory_space<vmem>>, vector<128x128xbf16>
    %cst_67 = arith.constant dense<0.000000e+00> : vector<16x128xf32>
    %134 = tpu.matmul %111, %133, %cst_67 {dimension_numbers = #tpu.dot_dimension_numbers<[1], [0], [0], [1], [0, 0, 1, 1], [], []>} : vector<16x128xbf16>, vector<128x128xbf16>, vector<16x128xf32> -> vector<16x128xf32>
    %135 = arith.index_cast %c2_i32 : i32 to index
    %c0_68 = arith.constant 0 : index
    %c128_69 = arith.constant 128 : index
    %136 = vector.load %arg14[%135, %c0_68, %c128_69] : memref<8x16x512xbf16, #tpu.memory_space<vmem>>, vector<1x16x128xbf16>
    %137 = vector.shape_cast %136 : vector<1x16x128xbf16> to vector<16x128xbf16>
    %138 = arith.extf %137 : vector<16x128xbf16> to vector<16x128xf32>
    %139 = arith.addf %134, %138 : vector<16x128xf32>
    %140 = arith.negf %139 : vector<16x128xf32>
    %141 = math.exp %140 : vector<16x128xf32>
    %cst_70 = arith.constant 1.000000e+00 : f32
    %142 = vector.broadcast %cst_70 : f32 to vector<16x128xf32>
    %143 = arith.addf %142, %141 : vector<16x128xf32>
    %144 = arith.divf %142, %143 : vector<16x128xf32>
    %145 = arith.mulf %144, %96 : vector<16x128xf32>
    %146 = arith.addf %132, %145 : vector<16x128xf32>
    %c0_71 = arith.constant 0 : index
    %c384_72 = arith.constant 384 : index
    %147 = vector.load %arg4[%c0_71, %c384_72] : memref<128x512xbf16, #tpu.memory_space<vmem>>, vector<128x128xbf16>
    %cst_73 = arith.constant dense<0.000000e+00> : vector<16x128xf32>
    %148 = tpu.matmul %111, %147, %cst_73 {dimension_numbers = #tpu.dot_dimension_numbers<[1], [0], [0], [1], [0, 0, 1, 1], [], []>} : vector<16x128xbf16>, vector<128x128xbf16>, vector<16x128xf32> -> vector<16x128xf32>
    %149 = arith.index_cast %c2_i32 : i32 to index
    %c0_74 = arith.constant 0 : index
    %c384_75 = arith.constant 384 : index
    %150 = vector.load %arg14[%149, %c0_74, %c384_75] : memref<8x16x512xbf16, #tpu.memory_space<vmem>>, vector<1x16x128xbf16>
    %151 = vector.shape_cast %150 : vector<1x16x128xbf16> to vector<16x128xbf16>
    %152 = arith.extf %151 : vector<16x128xbf16> to vector<16x128xf32>
    %153 = arith.addf %148, %152 : vector<16x128xf32>
    %154 = arith.negf %153 : vector<16x128xf32>
    %155 = math.exp %154 : vector<16x128xf32>
    %cst_76 = arith.constant 1.000000e+00 : f32
    %156 = vector.broadcast %cst_76 : f32 to vector<16x128xf32>
    %157 = arith.addf %156, %155 : vector<16x128xf32>
    %158 = arith.divf %156, %157 : vector<16x128xf32>
    %159 = math.tanh %146 : vector<16x128xf32>
    %160 = arith.mulf %158, %159 : vector<16x128xf32>
    %c3_i32 = arith.constant 3 : i32
    %161 = arith.truncf %160 : vector<16x128xf32> to vector<16x128xbf16>
    %c0_77 = arith.constant 0 : index
    %c0_78 = arith.constant 0 : index
    %162 = vector.load %arg4[%c0_77, %c0_78] : memref<128x512xbf16, #tpu.memory_space<vmem>>, vector<128x128xbf16>
    %cst_79 = arith.constant dense<0.000000e+00> : vector<16x128xf32>
    %163 = tpu.matmul %161, %162, %cst_79 {dimension_numbers = #tpu.dot_dimension_numbers<[1], [0], [0], [1], [0, 0, 1, 1], [], []>} : vector<16x128xbf16>, vector<128x128xbf16>, vector<16x128xf32> -> vector<16x128xf32>
    %164 = arith.index_cast %c3_i32 : i32 to index
    %c0_80 = arith.constant 0 : index
    %c0_81 = arith.constant 0 : index
    %165 = vector.load %arg14[%164, %c0_80, %c0_81] : memref<8x16x512xbf16, #tpu.memory_space<vmem>>, vector<1x16x128xbf16>
    %166 = vector.shape_cast %165 : vector<1x16x128xbf16> to vector<16x128xbf16>
    %167 = arith.extf %166 : vector<16x128xbf16> to vector<16x128xf32>
    %168 = arith.addf %163, %167 : vector<16x128xf32>
    %169 = arith.negf %168 : vector<16x128xf32>
    %170 = math.exp %169 : vector<16x128xf32>
    %cst_82 = arith.constant 1.000000e+00 : f32
    %171 = vector.broadcast %cst_82 : f32 to vector<16x128xf32>
    %172 = arith.addf %171, %170 : vector<16x128xf32>
    %173 = arith.divf %171, %172 : vector<16x128xf32>
    %c0_83 = arith.constant 0 : index
    %c256_84 = arith.constant 256 : index
    %174 = vector.load %arg4[%c0_83, %c256_84] : memref<128x512xbf16, #tpu.memory_space<vmem>>, vector<128x128xbf16>
    %cst_85 = arith.constant dense<0.000000e+00> : vector<16x128xf32>
    %175 = tpu.matmul %161, %174, %cst_85 {dimension_numbers = #tpu.dot_dimension_numbers<[1], [0], [0], [1], [0, 0, 1, 1], [], []>} : vector<16x128xbf16>, vector<128x128xbf16>, vector<16x128xf32> -> vector<16x128xf32>
    %176 = arith.index_cast %c3_i32 : i32 to index
    %c0_86 = arith.constant 0 : index
    %c256_87 = arith.constant 256 : index
    %177 = vector.load %arg14[%176, %c0_86, %c256_87] : memref<8x16x512xbf16, #tpu.memory_space<vmem>>, vector<1x16x128xbf16>
    %178 = vector.shape_cast %177 : vector<1x16x128xbf16> to vector<16x128xbf16>
    %179 = arith.extf %178 : vector<16x128xbf16> to vector<16x128xf32>
    %180 = arith.addf %175, %179 : vector<16x128xf32>
    %181 = math.tanh %180 : vector<16x128xf32>
    %182 = arith.mulf %173, %181 : vector<16x128xf32>
    %c0_88 = arith.constant 0 : index
    %c128_89 = arith.constant 128 : index
    %183 = vector.load %arg4[%c0_88, %c128_89] : memref<128x512xbf16, #tpu.memory_space<vmem>>, vector<128x128xbf16>
    %cst_90 = arith.constant dense<0.000000e+00> : vector<16x128xf32>
    %184 = tpu.matmul %161, %183, %cst_90 {dimension_numbers = #tpu.dot_dimension_numbers<[1], [0], [0], [1], [0, 0, 1, 1], [], []>} : vector<16x128xbf16>, vector<128x128xbf16>, vector<16x128xf32> -> vector<16x128xf32>
    %185 = arith.index_cast %c3_i32 : i32 to index
    %c0_91 = arith.constant 0 : index
    %c128_92 = arith.constant 128 : index
    %186 = vector.load %arg14[%185, %c0_91, %c128_92] : memref<8x16x512xbf16, #tpu.memory_space<vmem>>, vector<1x16x128xbf16>
    %187 = vector.shape_cast %186 : vector<1x16x128xbf16> to vector<16x128xbf16>
    %188 = arith.extf %187 : vector<16x128xbf16> to vector<16x128xf32>
    %189 = arith.addf %184, %188 : vector<16x128xf32>
    %190 = arith.negf %189 : vector<16x128xf32>
    %191 = math.exp %190 : vector<16x128xf32>
    %cst_93 = arith.constant 1.000000e+00 : f32
    %192 = vector.broadcast %cst_93 : f32 to vector<16x128xf32>
    %193 = arith.addf %192, %191 : vector<16x128xf32>
    %194 = arith.divf %192, %193 : vector<16x128xf32>
    %195 = arith.mulf %194, %146 : vector<16x128xf32>
    %196 = arith.addf %182, %195 : vector<16x128xf32>
    %c0_94 = arith.constant 0 : index
    %c384_95 = arith.constant 384 : index
    %197 = vector.load %arg4[%c0_94, %c384_95] : memref<128x512xbf16, #tpu.memory_space<vmem>>, vector<128x128xbf16>
    %cst_96 = arith.constant dense<0.000000e+00> : vector<16x128xf32>
    %198 = tpu.matmul %161, %197, %cst_96 {dimension_numbers = #tpu.dot_dimension_numbers<[1], [0], [0], [1], [0, 0, 1, 1], [], []>} : vector<16x128xbf16>, vector<128x128xbf16>, vector<16x128xf32> -> vector<16x128xf32>
    %199 = arith.index_cast %c3_i32 : i32 to index
    %c0_97 = arith.constant 0 : index
    %c384_98 = arith.constant 384 : index
    %200 = vector.load %arg14[%199, %c0_97, %c384_98] : memref<8x16x512xbf16, #tpu.memory_space<vmem>>, vector<1x16x128xbf16>
    %201 = vector.shape_cast %200 : vector<1x16x128xbf16> to vector<16x128xbf16>
    %202 = arith.extf %201 : vector<16x128xbf16> to vector<16x128xf32>
    %203 = arith.addf %198, %202 : vector<16x128xf32>
    %204 = arith.negf %203 : vector<16x128xf32>
    %205 = math.exp %204 : vector<16x128xf32>
    %cst_99 = arith.constant 1.000000e+00 : f32
    %206 = vector.broadcast %cst_99 : f32 to vector<16x128xf32>
    %207 = arith.addf %206, %205 : vector<16x128xf32>
    %208 = arith.divf %206, %207 : vector<16x128xf32>
    %209 = math.tanh %196 : vector<16x128xf32>
    %210 = arith.mulf %208, %209 : vector<16x128xf32>
    %c4_i32 = arith.constant 4 : i32
    %211 = arith.truncf %210 : vector<16x128xf32> to vector<16x128xbf16>
    %c0_100 = arith.constant 0 : index
    %c0_101 = arith.constant 0 : index
    %212 = vector.load %arg4[%c0_100, %c0_101] : memref<128x512xbf16, #tpu.memory_space<vmem>>, vector<128x128xbf16>
    %cst_102 = arith.constant dense<0.000000e+00> : vector<16x128xf32>
    %213 = tpu.matmul %211, %212, %cst_102 {dimension_numbers = #tpu.dot_dimension_numbers<[1], [0], [0], [1], [0, 0, 1, 1], [], []>} : vector<16x128xbf16>, vector<128x128xbf16>, vector<16x128xf32> -> vector<16x128xf32>
    %214 = arith.index_cast %c4_i32 : i32 to index
    %c0_103 = arith.constant 0 : index
    %c0_104 = arith.constant 0 : index
    %215 = vector.load %arg14[%214, %c0_103, %c0_104] : memref<8x16x512xbf16, #tpu.memory_space<vmem>>, vector<1x16x128xbf16>
    %216 = vector.shape_cast %215 : vector<1x16x128xbf16> to vector<16x128xbf16>
    %217 = arith.extf %216 : vector<16x128xbf16> to vector<16x128xf32>
    %218 = arith.addf %213, %217 : vector<16x128xf32>
    %219 = arith.negf %218 : vector<16x128xf32>
    %220 = math.exp %219 : vector<16x128xf32>
    %cst_105 = arith.constant 1.000000e+00 : f32
    %221 = vector.broadcast %cst_105 : f32 to vector<16x128xf32>
    %222 = arith.addf %221, %220 : vector<16x128xf32>
    %223 = arith.divf %221, %222 : vector<16x128xf32>
    %c0_106 = arith.constant 0 : index
    %c256_107 = arith.constant 256 : index
    %224 = vector.load %arg4[%c0_106, %c256_107] : memref<128x512xbf16, #tpu.memory_space<vmem>>, vector<128x128xbf16>
    %cst_108 = arith.constant dense<0.000000e+00> : vector<16x128xf32>
    %225 = tpu.matmul %211, %224, %cst_108 {dimension_numbers = #tpu.dot_dimension_numbers<[1], [0], [0], [1], [0, 0, 1, 1], [], []>} : vector<16x128xbf16>, vector<128x128xbf16>, vector<16x128xf32> -> vector<16x128xf32>
    %226 = arith.index_cast %c4_i32 : i32 to index
    %c0_109 = arith.constant 0 : index
    %c256_110 = arith.constant 256 : index
    %227 = vector.load %arg14[%226, %c0_109, %c256_110] : memref<8x16x512xbf16, #tpu.memory_space<vmem>>, vector<1x16x128xbf16>
    %228 = vector.shape_cast %227 : vector<1x16x128xbf16> to vector<16x128xbf16>
    %229 = arith.extf %228 : vector<16x128xbf16> to vector<16x128xf32>
    %230 = arith.addf %225, %229 : vector<16x128xf32>
    %231 = math.tanh %230 : vector<16x128xf32>
    %232 = arith.mulf %223, %231 : vector<16x128xf32>
    %c0_111 = arith.constant 0 : index
    %c128_112 = arith.constant 128 : index
    %233 = vector.load %arg4[%c0_111, %c128_112] : memref<128x512xbf16, #tpu.memory_space<vmem>>, vector<128x128xbf16>
    %cst_113 = arith.constant dense<0.000000e+00> : vector<16x128xf32>
    %234 = tpu.matmul %211, %233, %cst_113 {dimension_numbers = #tpu.dot_dimension_numbers<[1], [0], [0], [1], [0, 0, 1, 1], [], []>} : vector<16x128xbf16>, vector<128x128xbf16>, vector<16x128xf32> -> vector<16x128xf32>
    %235 = arith.index_cast %c4_i32 : i32 to index
    %c0_114 = arith.constant 0 : index
    %c128_115 = arith.constant 128 : index
    %236 = vector.load %arg14[%235, %c0_114, %c128_115] : memref<8x16x512xbf16, #tpu.memory_space<vmem>>, vector<1x16x128xbf16>
    %237 = vector.shape_cast %236 : vector<1x16x128xbf16> to vector<16x128xbf16>
    %238 = arith.extf %237 : vector<16x128xbf16> to vector<16x128xf32>
    %239 = arith.addf %234, %238 : vector<16x128xf32>
    %240 = arith.negf %239 : vector<16x128xf32>
    %241 = math.exp %240 : vector<16x128xf32>
    %cst_116 = arith.constant 1.000000e+00 : f32
    %242 = vector.broadcast %cst_116 : f32 to vector<16x128xf32>
    %243 = arith.addf %242, %241 : vector<16x128xf32>
    %244 = arith.divf %242, %243 : vector<16x128xf32>
    %245 = arith.mulf %244, %196 : vector<16x128xf32>
    %246 = arith.addf %232, %245 : vector<16x128xf32>
    %c0_117 = arith.constant 0 : index
    %c384_118 = arith.constant 384 : index
    %247 = vector.load %arg4[%c0_117, %c384_118] : memref<128x512xbf16, #tpu.memory_space<vmem>>, vector<128x128xbf16>
    %cst_119 = arith.constant dense<0.000000e+00> : vector<16x128xf32>
    %248 = tpu.matmul %211, %247, %cst_119 {dimension_numbers = #tpu.dot_dimension_numbers<[1], [0], [0], [1], [0, 0, 1, 1], [], []>} : vector<16x128xbf16>, vector<128x128xbf16>, vector<16x128xf32> -> vector<16x128xf32>
    %249 = arith.index_cast %c4_i32 : i32 to index
    %c0_120 = arith.constant 0 : index
    %c384_121 = arith.constant 384 : index
    %250 = vector.load %arg14[%249, %c0_120, %c384_121] : memref<8x16x512xbf16, #tpu.memory_space<vmem>>, vector<1x16x128xbf16>
    %251 = vector.shape_cast %250 : vector<1x16x128xbf16> to vector<16x128xbf16>
    %252 = arith.extf %251 : vector<16x128xbf16> to vector<16x128xf32>
    %253 = arith.addf %248, %252 : vector<16x128xf32>
    %254 = arith.negf %253 : vector<16x128xf32>
    %255 = math.exp %254 : vector<16x128xf32>
    %cst_122 = arith.constant 1.000000e+00 : f32
    %256 = vector.broadcast %cst_122 : f32 to vector<16x128xf32>
    %257 = arith.addf %256, %255 : vector<16x128xf32>
    %258 = arith.divf %256, %257 : vector<16x128xf32>
    %259 = math.tanh %246 : vector<16x128xf32>
    %260 = arith.mulf %258, %259 : vector<16x128xf32>
    %c5_i32 = arith.constant 5 : i32
    %261 = arith.truncf %260 : vector<16x128xf32> to vector<16x128xbf16>
    %c0_123 = arith.constant 0 : index
    %c0_124 = arith.constant 0 : index
    %262 = vector.load %arg4[%c0_123, %c0_124] : memref<128x512xbf16, #tpu.memory_space<vmem>>, vector<128x128xbf16>
    %cst_125 = arith.constant dense<0.000000e+00> : vector<16x128xf32>
    %263 = tpu.matmul %261, %262, %cst_125 {dimension_numbers = #tpu.dot_dimension_numbers<[1], [0], [0], [1], [0, 0, 1, 1], [], []>} : vector<16x128xbf16>, vector<128x128xbf16>, vector<16x128xf32> -> vector<16x128xf32>
    %264 = arith.index_cast %c5_i32 : i32 to index
    %c0_126 = arith.constant 0 : index
    %c0_127 = arith.constant 0 : index
    %265 = vector.load %arg14[%264, %c0_126, %c0_127] : memref<8x16x512xbf16, #tpu.memory_space<vmem>>, vector<1x16x128xbf16>
    %266 = vector.shape_cast %265 : vector<1x16x128xbf16> to vector<16x128xbf16>
    %267 = arith.extf %266 : vector<16x128xbf16> to vector<16x128xf32>
    %268 = arith.addf %263, %267 : vector<16x128xf32>
    %269 = arith.negf %268 : vector<16x128xf32>
    %270 = math.exp %269 : vector<16x128xf32>
    %cst_128 = arith.constant 1.000000e+00 : f32
    %271 = vector.broadcast %cst_128 : f32 to vector<16x128xf32>
    %272 = arith.addf %271, %270 : vector<16x128xf32>
    %273 = arith.divf %271, %272 : vector<16x128xf32>
    %c0_129 = arith.constant 0 : index
    %c256_130 = arith.constant 256 : index
    %274 = vector.load %arg4[%c0_129, %c256_130] : memref<128x512xbf16, #tpu.memory_space<vmem>>, vector<128x128xbf16>
    %cst_131 = arith.constant dense<0.000000e+00> : vector<16x128xf32>
    %275 = tpu.matmul %261, %274, %cst_131 {dimension_numbers = #tpu.dot_dimension_numbers<[1], [0], [0], [1], [0, 0, 1, 1], [], []>} : vector<16x128xbf16>, vector<128x128xbf16>, vector<16x128xf32> -> vector<16x128xf32>
    %276 = arith.index_cast %c5_i32 : i32 to index
    %c0_132 = arith.constant 0 : index
    %c256_133 = arith.constant 256 : index
    %277 = vector.load %arg14[%276, %c0_132, %c256_133] : memref<8x16x512xbf16, #tpu.memory_space<vmem>>, vector<1x16x128xbf16>
    %278 = vector.shape_cast %277 : vector<1x16x128xbf16> to vector<16x128xbf16>
    %279 = arith.extf %278 : vector<16x128xbf16> to vector<16x128xf32>
    %280 = arith.addf %275, %279 : vector<16x128xf32>
    %281 = math.tanh %280 : vector<16x128xf32>
    %282 = arith.mulf %273, %281 : vector<16x128xf32>
    %c0_134 = arith.constant 0 : index
    %c128_135 = arith.constant 128 : index
    %283 = vector.load %arg4[%c0_134, %c128_135] : memref<128x512xbf16, #tpu.memory_space<vmem>>, vector<128x128xbf16>
    %cst_136 = arith.constant dense<0.000000e+00> : vector<16x128xf32>
    %284 = tpu.matmul %261, %283, %cst_136 {dimension_numbers = #tpu.dot_dimension_numbers<[1], [0], [0], [1], [0, 0, 1, 1], [], []>} : vector<16x128xbf16>, vector<128x128xbf16>, vector<16x128xf32> -> vector<16x128xf32>
    %285 = arith.index_cast %c5_i32 : i32 to index
    %c0_137 = arith.constant 0 : index
    %c128_138 = arith.constant 128 : index
    %286 = vector.load %arg14[%285, %c0_137, %c128_138] : memref<8x16x512xbf16, #tpu.memory_space<vmem>>, vector<1x16x128xbf16>
    %287 = vector.shape_cast %286 : vector<1x16x128xbf16> to vector<16x128xbf16>
    %288 = arith.extf %287 : vector<16x128xbf16> to vector<16x128xf32>
    %289 = arith.addf %284, %288 : vector<16x128xf32>
    %290 = arith.negf %289 : vector<16x128xf32>
    %291 = math.exp %290 : vector<16x128xf32>
    %cst_139 = arith.constant 1.000000e+00 : f32
    %292 = vector.broadcast %cst_139 : f32 to vector<16x128xf32>
    %293 = arith.addf %292, %291 : vector<16x128xf32>
    %294 = arith.divf %292, %293 : vector<16x128xf32>
    %295 = arith.mulf %294, %246 : vector<16x128xf32>
    %296 = arith.addf %282, %295 : vector<16x128xf32>
    %c0_140 = arith.constant 0 : index
    %c384_141 = arith.constant 384 : index
    %297 = vector.load %arg4[%c0_140, %c384_141] : memref<128x512xbf16, #tpu.memory_space<vmem>>, vector<128x128xbf16>
    %cst_142 = arith.constant dense<0.000000e+00> : vector<16x128xf32>
    %298 = tpu.matmul %261, %297, %cst_142 {dimension_numbers = #tpu.dot_dimension_numbers<[1], [0], [0], [1], [0, 0, 1, 1], [], []>} : vector<16x128xbf16>, vector<128x128xbf16>, vector<16x128xf32> -> vector<16x128xf32>
    %299 = arith.index_cast %c5_i32 : i32 to index
    %c0_143 = arith.constant 0 : index
    %c384_144 = arith.constant 384 : index
    %300 = vector.load %arg14[%299, %c0_143, %c384_144] : memref<8x16x512xbf16, #tpu.memory_space<vmem>>, vector<1x16x128xbf16>
    %301 = vector.shape_cast %300 : vector<1x16x128xbf16> to vector<16x128xbf16>
    %302 = arith.extf %301 : vector<16x128xbf16> to vector<16x128xf32>
    %303 = arith.addf %298, %302 : vector<16x128xf32>
    %304 = arith.negf %303 : vector<16x128xf32>
    %305 = math.exp %304 : vector<16x128xf32>
    %cst_145 = arith.constant 1.000000e+00 : f32
    %306 = vector.broadcast %cst_145 : f32 to vector<16x128xf32>
    %307 = arith.addf %306, %305 : vector<16x128xf32>
    %308 = arith.divf %306, %307 : vector<16x128xf32>
    %309 = math.tanh %296 : vector<16x128xf32>
    %310 = arith.mulf %308, %309 : vector<16x128xf32>
    %c6_i32 = arith.constant 6 : i32
    %311 = arith.truncf %310 : vector<16x128xf32> to vector<16x128xbf16>
    %c0_146 = arith.constant 0 : index
    %c0_147 = arith.constant 0 : index
    %312 = vector.load %arg4[%c0_146, %c0_147] : memref<128x512xbf16, #tpu.memory_space<vmem>>, vector<128x128xbf16>
    %cst_148 = arith.constant dense<0.000000e+00> : vector<16x128xf32>
    %313 = tpu.matmul %311, %312, %cst_148 {dimension_numbers = #tpu.dot_dimension_numbers<[1], [0], [0], [1], [0, 0, 1, 1], [], []>} : vector<16x128xbf16>, vector<128x128xbf16>, vector<16x128xf32> -> vector<16x128xf32>
    %314 = arith.index_cast %c6_i32 : i32 to index
    %c0_149 = arith.constant 0 : index
    %c0_150 = arith.constant 0 : index
    %315 = vector.load %arg14[%314, %c0_149, %c0_150] : memref<8x16x512xbf16, #tpu.memory_space<vmem>>, vector<1x16x128xbf16>
    %316 = vector.shape_cast %315 : vector<1x16x128xbf16> to vector<16x128xbf16>
    %317 = arith.extf %316 : vector<16x128xbf16> to vector<16x128xf32>
    %318 = arith.addf %313, %317 : vector<16x128xf32>
    %319 = arith.negf %318 : vector<16x128xf32>
    %320 = math.exp %319 : vector<16x128xf32>
    %cst_151 = arith.constant 1.000000e+00 : f32
    %321 = vector.broadcast %cst_151 : f32 to vector<16x128xf32>
    %322 = arith.addf %321, %320 : vector<16x128xf32>
    %323 = arith.divf %321, %322 : vector<16x128xf32>
    %c0_152 = arith.constant 0 : index
    %c256_153 = arith.constant 256 : index
    %324 = vector.load %arg4[%c0_152, %c256_153] : memref<128x512xbf16, #tpu.memory_space<vmem>>, vector<128x128xbf16>
    %cst_154 = arith.constant dense<0.000000e+00> : vector<16x128xf32>
    %325 = tpu.matmul %311, %324, %cst_154 {dimension_numbers = #tpu.dot_dimension_numbers<[1], [0], [0], [1], [0, 0, 1, 1], [], []>} : vector<16x128xbf16>, vector<128x128xbf16>, vector<16x128xf32> -> vector<16x128xf32>
    %326 = arith.index_cast %c6_i32 : i32 to index
    %c0_155 = arith.constant 0 : index
    %c256_156 = arith.constant 256 : index
    %327 = vector.load %arg14[%326, %c0_155, %c256_156] : memref<8x16x512xbf16, #tpu.memory_space<vmem>>, vector<1x16x128xbf16>
    %328 = vector.shape_cast %327 : vector<1x16x128xbf16> to vector<16x128xbf16>
    %329 = arith.extf %328 : vector<16x128xbf16> to vector<16x128xf32>
    %330 = arith.addf %325, %329 : vector<16x128xf32>
    %331 = math.tanh %330 : vector<16x128xf32>
    %332 = arith.mulf %323, %331 : vector<16x128xf32>
    %c0_157 = arith.constant 0 : index
    %c128_158 = arith.constant 128 : index
    %333 = vector.load %arg4[%c0_157, %c128_158] : memref<128x512xbf16, #tpu.memory_space<vmem>>, vector<128x128xbf16>
    %cst_159 = arith.constant dense<0.000000e+00> : vector<16x128xf32>
    %334 = tpu.matmul %311, %333, %cst_159 {dimension_numbers = #tpu.dot_dimension_numbers<[1], [0], [0], [1], [0, 0, 1, 1], [], []>} : vector<16x128xbf16>, vector<128x128xbf16>, vector<16x128xf32> -> vector<16x128xf32>
    %335 = arith.index_cast %c6_i32 : i32 to index
    %c0_160 = arith.constant 0 : index
    %c128_161 = arith.constant 128 : index
    %336 = vector.load %arg14[%335, %c0_160, %c128_161] : memref<8x16x512xbf16, #tpu.memory_space<vmem>>, vector<1x16x128xbf16>
    %337 = vector.shape_cast %336 : vector<1x16x128xbf16> to vector<16x128xbf16>
    %338 = arith.extf %337 : vector<16x128xbf16> to vector<16x128xf32>
    %339 = arith.addf %334, %338 : vector<16x128xf32>
    %340 = arith.negf %339 : vector<16x128xf32>
    %341 = math.exp %340 : vector<16x128xf32>
    %cst_162 = arith.constant 1.000000e+00 : f32
    %342 = vector.broadcast %cst_162 : f32 to vector<16x128xf32>
    %343 = arith.addf %342, %341 : vector<16x128xf32>
    %344 = arith.divf %342, %343 : vector<16x128xf32>
    %345 = arith.mulf %344, %296 : vector<16x128xf32>
    %346 = arith.addf %332, %345 : vector<16x128xf32>
    %c0_163 = arith.constant 0 : index
    %c384_164 = arith.constant 384 : index
    %347 = vector.load %arg4[%c0_163, %c384_164] : memref<128x512xbf16, #tpu.memory_space<vmem>>, vector<128x128xbf16>
    %cst_165 = arith.constant dense<0.000000e+00> : vector<16x128xf32>
    %348 = tpu.matmul %311, %347, %cst_165 {dimension_numbers = #tpu.dot_dimension_numbers<[1], [0], [0], [1], [0, 0, 1, 1], [], []>} : vector<16x128xbf16>, vector<128x128xbf16>, vector<16x128xf32> -> vector<16x128xf32>
    %349 = arith.index_cast %c6_i32 : i32 to index
    %c0_166 = arith.constant 0 : index
    %c384_167 = arith.constant 384 : index
    %350 = vector.load %arg14[%349, %c0_166, %c384_167] : memref<8x16x512xbf16, #tpu.memory_space<vmem>>, vector<1x16x128xbf16>
    %351 = vector.shape_cast %350 : vector<1x16x128xbf16> to vector<16x128xbf16>
    %352 = arith.extf %351 : vector<16x128xbf16> to vector<16x128xf32>
    %353 = arith.addf %348, %352 : vector<16x128xf32>
    %354 = arith.negf %353 : vector<16x128xf32>
    %355 = math.exp %354 : vector<16x128xf32>
    %cst_168 = arith.constant 1.000000e+00 : f32
    %356 = vector.broadcast %cst_168 : f32 to vector<16x128xf32>
    %357 = arith.addf %356, %355 : vector<16x128xf32>
    %358 = arith.divf %356, %357 : vector<16x128xf32>
    %359 = math.tanh %346 : vector<16x128xf32>
    %360 = arith.mulf %358, %359 : vector<16x128xf32>
    %c7_i32 = arith.constant 7 : i32
    %361 = arith.truncf %360 : vector<16x128xf32> to vector<16x128xbf16>
    %c0_169 = arith.constant 0 : index
    %c0_170 = arith.constant 0 : index
    %362 = vector.load %arg4[%c0_169, %c0_170] : memref<128x512xbf16, #tpu.memory_space<vmem>>, vector<128x128xbf16>
    %cst_171 = arith.constant dense<0.000000e+00> : vector<16x128xf32>
    %363 = tpu.matmul %361, %362, %cst_171 {dimension_numbers = #tpu.dot_dimension_numbers<[1], [0], [0], [1], [0, 0, 1, 1], [], []>} : vector<16x128xbf16>, vector<128x128xbf16>, vector<16x128xf32> -> vector<16x128xf32>
    %364 = arith.index_cast %c7_i32 : i32 to index
    %c0_172 = arith.constant 0 : index
    %c0_173 = arith.constant 0 : index
    %365 = vector.load %arg14[%364, %c0_172, %c0_173] : memref<8x16x512xbf16, #tpu.memory_space<vmem>>, vector<1x16x128xbf16>
    %366 = vector.shape_cast %365 : vector<1x16x128xbf16> to vector<16x128xbf16>
    %367 = arith.extf %366 : vector<16x128xbf16> to vector<16x128xf32>
    %368 = arith.addf %363, %367 : vector<16x128xf32>
    %369 = arith.negf %368 : vector<16x128xf32>
    %370 = math.exp %369 : vector<16x128xf32>
    %cst_174 = arith.constant 1.000000e+00 : f32
    %371 = vector.broadcast %cst_174 : f32 to vector<16x128xf32>
    %372 = arith.addf %371, %370 : vector<16x128xf32>
    %373 = arith.divf %371, %372 : vector<16x128xf32>
    %c0_175 = arith.constant 0 : index
    %c256_176 = arith.constant 256 : index
    %374 = vector.load %arg4[%c0_175, %c256_176] : memref<128x512xbf16, #tpu.memory_space<vmem>>, vector<128x128xbf16>
    %cst_177 = arith.constant dense<0.000000e+00> : vector<16x128xf32>
    %375 = tpu.matmul %361, %374, %cst_177 {dimension_numbers = #tpu.dot_dimension_numbers<[1], [0], [0], [1], [0, 0, 1, 1], [], []>} : vector<16x128xbf16>, vector<128x128xbf16>, vector<16x128xf32> -> vector<16x128xf32>
    %376 = arith.index_cast %c7_i32 : i32 to index
    %c0_178 = arith.constant 0 : index
    %c256_179 = arith.constant 256 : index
    %377 = vector.load %arg14[%376, %c0_178, %c256_179] : memref<8x16x512xbf16, #tpu.memory_space<vmem>>, vector<1x16x128xbf16>
    %378 = vector.shape_cast %377 : vector<1x16x128xbf16> to vector<16x128xbf16>
    %379 = arith.extf %378 : vector<16x128xbf16> to vector<16x128xf32>
    %380 = arith.addf %375, %379 : vector<16x128xf32>
    %381 = math.tanh %380 : vector<16x128xf32>
    %382 = arith.mulf %373, %381 : vector<16x128xf32>
    %c0_180 = arith.constant 0 : index
    %c128_181 = arith.constant 128 : index
    %383 = vector.load %arg4[%c0_180, %c128_181] : memref<128x512xbf16, #tpu.memory_space<vmem>>, vector<128x128xbf16>
    %cst_182 = arith.constant dense<0.000000e+00> : vector<16x128xf32>
    %384 = tpu.matmul %361, %383, %cst_182 {dimension_numbers = #tpu.dot_dimension_numbers<[1], [0], [0], [1], [0, 0, 1, 1], [], []>} : vector<16x128xbf16>, vector<128x128xbf16>, vector<16x128xf32> -> vector<16x128xf32>
    %385 = arith.index_cast %c7_i32 : i32 to index
    %c0_183 = arith.constant 0 : index
    %c128_184 = arith.constant 128 : index
    %386 = vector.load %arg14[%385, %c0_183, %c128_184] : memref<8x16x512xbf16, #tpu.memory_space<vmem>>, vector<1x16x128xbf16>
    %387 = vector.shape_cast %386 : vector<1x16x128xbf16> to vector<16x128xbf16>
    %388 = arith.extf %387 : vector<16x128xbf16> to vector<16x128xf32>
    %389 = arith.addf %384, %388 : vector<16x128xf32>
    %390 = arith.negf %389 : vector<16x128xf32>
    %391 = math.exp %390 : vector<16x128xf32>
    %cst_185 = arith.constant 1.000000e+00 : f32
    %392 = vector.broadcast %cst_185 : f32 to vector<16x128xf32>
    %393 = arith.addf %392, %391 : vector<16x128xf32>
    %394 = arith.divf %392, %393 : vector<16x128xf32>
    %395 = arith.mulf %394, %346 : vector<16x128xf32>
    %396 = arith.addf %382, %395 : vector<16x128xf32>
    %c0_186 = arith.constant 0 : index
    %c384_187 = arith.constant 384 : index
    %397 = vector.load %arg4[%c0_186, %c384_187] : memref<128x512xbf16, #tpu.memory_space<vmem>>, vector<128x128xbf16>
    %cst_188 = arith.constant dense<0.000000e+00> : vector<16x128xf32>
    %398 = tpu.matmul %361, %397, %cst_188 {dimension_numbers = #tpu.dot_dimension_numbers<[1], [0], [0], [1], [0, 0, 1, 1], [], []>} : vector<16x128xbf16>, vector<128x128xbf16>, vector<16x128xf32> -> vector<16x128xf32>
    %399 = arith.index_cast %c7_i32 : i32 to index
    %c0_189 = arith.constant 0 : index
    %c384_190 = arith.constant 384 : index
    %400 = vector.load %arg14[%399, %c0_189, %c384_190] : memref<8x16x512xbf16, #tpu.memory_space<vmem>>, vector<1x16x128xbf16>
    %401 = vector.shape_cast %400 : vector<1x16x128xbf16> to vector<16x128xbf16>
    %402 = arith.extf %401 : vector<16x128xbf16> to vector<16x128xf32>
    %403 = arith.addf %398, %402 : vector<16x128xf32>
    %404 = arith.negf %403 : vector<16x128xf32>
    %405 = math.exp %404 : vector<16x128xf32>
    %cst_191 = arith.constant 1.000000e+00 : f32
    %406 = vector.broadcast %cst_191 : f32 to vector<16x128xf32>
    %407 = arith.addf %406, %405 : vector<16x128xf32>
    %408 = arith.divf %406, %407 : vector<16x128xf32>
    %409 = math.tanh %396 : vector<16x128xf32>
    %410 = arith.mulf %408, %409 : vector<16x128xf32>
    %c8_i32_192 = arith.constant 8 : i32
    %411 = arith.truncf %410 : vector<16x128xf32> to vector<16x128xbf16>
    %c0_193 = arith.constant 0 : index
    %c0_194 = arith.constant 0 : index
    %412 = vector.load %arg8[%c0_193, %c0_194] : memref<128x128xbf16, #tpu.memory_space<vmem>>, vector<128x128xbf16>
    %cst_195 = arith.constant dense<0.000000e+00> : vector<16x128xf32>
    %413 = tpu.matmul %411, %412, %cst_195 {dimension_numbers = #tpu.dot_dimension_numbers<[1], [0], [0], [1], [0, 0, 1, 1], [], []>} : vector<16x128xbf16>, vector<128x128xbf16>, vector<16x128xf32> -> vector<16x128xf32>
    %414 = arith.truncf %8 : vector<16x128xf32> to vector<16x128xbf16>
    %c0_196 = arith.constant 0 : index
    %c0_197 = arith.constant 0 : index
    %415 = vector.load %arg9[%c0_196, %c0_197] : memref<128x128xbf16, #tpu.memory_space<vmem>>, vector<128x128xbf16>
    %cst_198 = arith.constant dense<0.000000e+00> : vector<16x128xf32>
    %416 = tpu.matmul %414, %415, %cst_198 {dimension_numbers = #tpu.dot_dimension_numbers<[1], [0], [0], [1], [0, 0, 1, 1], [], []>} : vector<16x128xbf16>, vector<128x128xbf16>, vector<16x128xf32> -> vector<16x128xf32>
    %417 = arith.addf %413, %416 : vector<16x128xf32>
    %c0_199 = arith.constant 0 : index
    %c0_200 = arith.constant 0 : index
    %418 = vector.load %arg10[%c0_199, %c0_200] : memref<1x128xf32, #tpu.memory_space<vmem>>, vector<1x128xf32>
    %419 = vector.broadcast %418 : vector<1x128xf32> to vector<16x128xf32>
    %420 = arith.addf %417, %419 : vector<16x128xf32>
    %cst_201 = arith.constant 0.000000e+00 : f32
    %421 = vector.broadcast %cst_201 : f32 to vector<16x128xf32>
    %422 = arith.maximumf %420, %421 : vector<16x128xf32>
    %c0_202 = arith.constant 0 : index
    %c0_203 = arith.constant 0 : index
    %423 = vector.load %arg11[%c0_202, %c0_203] : memref<1x128xf32, #tpu.memory_space<vmem>>, vector<1x128xf32>
    %424 = vector.broadcast %423 : vector<1x128xf32> to vector<16x128xf32>
    %425 = arith.mulf %422, %424 : vector<16x128xf32>
    %cst_204 = arith.constant dense<0.000000e+00> : vector<16xf32>
    %426 = vector.multi_reduction <add>, %425, %cst_204 [1] : vector<16x128xf32> to vector<16xf32>
    %427 = vector.shape_cast %426 : vector<16xf32> to vector<16x1xf32>
    %c0_205 = arith.constant 0 : index
    %c0_206 = arith.constant 0 : index
    %428 = vector.load %arg12[%c0_205, %c0_206] : memref<1x1xf32, #tpu.memory_space<vmem>>, vector<1x1xf32>
    %429 = vector.broadcast %428 : vector<1x1xf32> to vector<16x1xf32>
    %430 = arith.addf %427, %429 : vector<16x1xf32>
    %431 = arith.negf %430 : vector<16x1xf32>
    %432 = math.exp %431 : vector<16x1xf32>
    %cst_207 = arith.constant 1.000000e+00 : f32
    %433 = vector.broadcast %cst_207 : f32 to vector<16x1xf32>
    %434 = arith.addf %433, %432 : vector<16x1xf32>
    %435 = arith.divf %433, %434 : vector<16x1xf32>
    %436 = vector.shape_cast %435 : vector<16x1xf32> to vector<16x1xf32>
    %437 = vector.broadcast %436 : vector<16x1xf32> to vector<16x128xf32>
    %c0_208 = arith.constant 0 : index
    %c0_209 = arith.constant 0 : index
    %438 = vector.load %arg13[%c0_208, %c0_209] : memref<16x128xf32, #tpu.memory_space<vmem>>, vector<16x128xf32>
    tpu.vector_store %arg13[%c0_208, %c0_209], %437 {strides = array<i32>} : memref<16x128xf32, #tpu.memory_space<vmem>>, vector<16x128xf32>,
    return
  }
  func.func @transform_0(%arg0: i32) -> (i32, i32, i32, i32) {
    %c0_i32 = arith.constant 0 : i32
    %c0_i32_0 = arith.constant 0 : i32
    %c0_i32_1 = arith.constant 0 : i32
    %c0_i32_2 = arith.constant 0 : i32
    return %arg0, %c0_i32, %c0_i32_0, %c0_i32_1 : i32, i32, i32, i32
  }
  func.func @transform_1(%arg0: i32) -> (i32, i32) {
    %c0_i32 = arith.constant 0 : i32
    %c0_i32_0 = arith.constant 0 : i32
    return %arg0, %c0_i32 : i32, i32
  }
  func.func @transform_2(%arg0: i32) -> (i32, i32) {
    %c0_i32 = arith.constant 0 : i32
    %c0_i32_0 = arith.constant 0 : i32
    %c0_i32_1 = arith.constant 0 : i32
    return %c0_i32, %c0_i32_0 : i32, i32
  }
  func.func @transform_3(%arg0: i32) -> (i32, i32) {
    %c0_i32 = arith.constant 0 : i32
    %c0_i32_0 = arith.constant 0 : i32
    %c0_i32_1 = arith.constant 0 : i32
    return %c0_i32, %c0_i32_0 : i32, i32
  }
  func.func @transform_4(%arg0: i32) -> (i32, i32) {
    %c0_i32 = arith.constant 0 : i32
    %c0_i32_0 = arith.constant 0 : i32
    %c0_i32_1 = arith.constant 0 : i32
    return %c0_i32, %c0_i32_0 : i32, i32
  }
  func.func @transform_5(%arg0: i32) -> (i32, i32) {
    %c0_i32 = arith.constant 0 : i32
    %c0_i32_0 = arith.constant 0 : i32
    %c0_i32_1 = arith.constant 0 : i32
    return %c0_i32, %c0_i32_0 : i32, i32
  }
  func.func @transform_6(%arg0: i32) -> (i32, i32) {
    %c0_i32 = arith.constant 0 : i32
    %c0_i32_0 = arith.constant 0 : i32
    %c0_i32_1 = arith.constant 0 : i32
    return %c0_i32, %c0_i32_0 : i32, i32
  }
  func.func @transform_7(%arg0: i32) -> (i32, i32) {
    %c0_i32 = arith.constant 0 : i32
    %c0_i32_0 = arith.constant 0 : i32
    %c0_i32_1 = arith.constant 0 : i32
    return %c0_i32, %c0_i32_0 : i32, i32
  }
  func.func @transform_8(%arg0: i32) -> (i32, i32) {
    %c0_i32 = arith.constant 0 : i32
    %c0_i32_0 = arith.constant 0 : i32
    %c0_i32_1 = arith.constant 0 : i32
    return %c0_i32, %c0_i32_0 : i32, i32
  }
  func.func @transform_9(%arg0: i32) -> (i32, i32) {
    %c0_i32 = arith.constant 0 : i32
    %c0_i32_0 = arith.constant 0 : i32
    %c0_i32_1 = arith.constant 0 : i32
    return %c0_i32, %c0_i32_0 : i32, i32
  }
  func.func @transform_10(%arg0: i32) -> (i32, i32) {
    %c0_i32 = arith.constant 0 : i32
    %c0_i32_0 = arith.constant 0 : i32
    %c0_i32_1 = arith.constant 0 : i32
    return %c0_i32, %c0_i32_0 : i32, i32
  }
  func.func @transform_11(%arg0: i32) -> (i32, i32) {
    %c0_i32 = arith.constant 0 : i32
    %c0_i32_0 = arith.constant 0 : i32
    %c0_i32_1 = arith.constant 0 : i32
    return %c0_i32, %c0_i32_0 : i32, i32
  }
  func.func @transform_12(%arg0: i32) -> (i32, i32) {
    %c0_i32 = arith.constant 0 : i32
    %c0_i32_0 = arith.constant 0 : i32
    return %arg0, %c0_i32 : i32, i32
  }
}

</mosaic_0001>

<llo_original>
// kernel: multimodal_anomaly_forward.1
$region0: #{multimodal_anomaly_forward.1}
  #allocation0 [shape = 'u32[]', space=smem, size = 0x4, offset = 0x4, fixed_abs, tag = 'smem constant byte address 0x4 - core index']
  #allocation1 [shape = 'u32[72,128]{1,0:T(1,128)}', space=vmem, size = 0x9000, scoped, tag = 'internal scratch']
  #allocation2 [shape = 'bf16[8,16,512]{2,1,0:T(8,128)(2,1)}', space=vmem, size = 0x20000, scoped, tag = 'scratch operand']
  #allocation3 [shape = 'f32[1,1]{1,0:T(1,128)S(1)}', space=vmem, size = 0x200, scoped, tag = 'scoped memory for multimodal_anomaly_forward.1']
  %s0 = inlined_call_operand.vmem [shape: bf16[1,8,16,32], index: 0, kind: input, shape index: {}]
  %s1 = inlined_call_operand.vmem [shape: bf16[16,16], index: 1, kind: input, shape index: {}]
  %s2 = inlined_call_operand.vmem [shape: bf16[32,512], index: 2, kind: input, shape index: {}]
  %s3 = inlined_call_operand.hbm [shape: bf16[128,512], index: 3, kind: input, shape index: {}]
  %s4 = inlined_call_operand.vmem [shape: f32[1,512], index: 4, kind: input, shape index: {}]
  %s5 = inlined_call_operand.vmem [shape: bf16[16,128], index: 5, kind: input, shape index: {}]
  %s6 = inlined_call_operand.vmem [shape: f32[1,128], index: 6, kind: input, shape index: {}]
  %s7 = inlined_call_operand.hbm [shape: bf16[128,128], index: 7, kind: input, shape index: {}]
  %s8 = inlined_call_operand.hbm [shape: bf16[128,128], index: 8, kind: input, shape index: {}]
  %s9 = inlined_call_operand.vmem [shape: f32[1,128], index: 9, kind: input, shape index: {}]
  %s10 = inlined_call_operand.vmem [shape: f32[1,128], index: 10, kind: input, shape index: {}]
  %s11 = inlined_call_operand.<no memory space> [shape: f32[1,1], index: 11, kind: input, shape index: {}]
  %s12 = inlined_call_operand.vmem [shape: f32[16,128], index: 12, kind: output, shape index: {}]
  %s13 = sld [smem:[#allocation0]]
  $region77: #{multimodal_anomaly_forward.1} parent=0
    _
  %s15 = ssub.s32 1, %s13
  %s16 = scalar_select 0, %s15, %s13
  %v17 = vstv %s11
  %18 = vst [vmem:[#allocation3] sm:$0x1] %v17
  $region1: #{multimodal_anomaly_forward.1} parent=0
    #allocation4 [shape = 'u8[131072]{0}', space=vmem, size = 0x20000, scoped, tag = 'input window, operand 3, single buffered']
    #allocation5 [shape = 's32[1]{0}', space=sflag, size = 0x4, scoped, tag = 'scoped memory for multimodal_anomaly_forward.1']
    #allocation6 [shape = 'u8[32768]{0}', space=vmem, size = 0x8000, scoped, tag = 'input window, operand 7, single buffered']
    #allocation7 [shape = 's32[1]{0}', space=sflag, size = 0x4, scoped, tag = 'scoped memory for multimodal_anomaly_forward.1']
    #allocation8 [shape = 'u8[32768]{0}', space=vmem, size = 0x8000, scoped, tag = 'input window, operand 8, single buffered']
    %19 = vsyncpa [#allocation5], 0
    %20 = vsyncpa [#allocation7], 0
    // Predicated region
    $region2: #{multimodal_anomaly_forward.1} parent=1 // pred_check
      _
    $region3: #{multimodal_anomaly_forward.1} parent=1 // pred_check_branch
      %22 = sbr.rel (0) target = $region5
    $region4: #{multimodal_anomaly_forward.1} parent=1 // pred_region
      _
    $region5: #{multimodal_anomaly_forward.1} parent=1 // pred_fallthru
      _
    // Predicated region
    $region6: #{multimodal_anomaly_forward.1} parent=1 // pred_check
      _
    $region7: #{multimodal_anomaly_forward.1} parent=1 // pred_check_branch
      %24 = sbr.rel (0) target = $region9
    $region8: #{multimodal_anomaly_forward.1} parent=1 // pred_region
      _
    $region9: #{multimodal_anomaly_forward.1} parent=1 // pred_fallthru
      _
    // Predicated region
    $region10: #{multimodal_anomaly_forward.1} parent=1 // pred_check
      _
    $region11: #{multimodal_anomaly_forward.1} parent=1 // pred_check_branch
      %26 = sbr.rel (0) target = $region13
    $region12: #{multimodal_anomaly_forward.1} parent=1 // pred_region
      _
    $region13: #{multimodal_anomaly_forward.1} parent=1 // pred_fallthru
      _
    // Predicated region
    $region14: #{multimodal_anomaly_forward.1} parent=1 // pred_check
      _
    $region15: #{multimodal_anomaly_forward.1} parent=1 // pred_check_branch
      %28 = sbr.rel (0) target = $region17
    $region16: #{multimodal_anomaly_forward.1} parent=1 // pred_region
      %30 = vsyncadd [#allocation5], 0
      %s31 = sshll.u32 %s3, 4
      %s32 = int_to_ptr.hbm [resolvable:$true] %s31
      %s33 = sshll.u32 [#allocation4], 4
      %s34 = int_to_ptr.vmem [resolvable:$true] %s33
      %39 = dma.hbm_to_vmem [thread:$0]  %s32, 4096, %s34, [#allocation5], 256, 256, 16
    $region17: #{multimodal_anomaly_forward.1} parent=1 // pred_fallthru
      _
    // Predicated region
    $region18: #{multimodal_anomaly_forward.1} parent=1 // pred_check
      _
    $region19: #{multimodal_anomaly_forward.1} parent=1 // pred_check_branch
      %41 = sbr.rel (0) target = $region21
    $region20: #{multimodal_anomaly_forward.1} parent=1 // pred_region
      _
    $region21: #{multimodal_anomaly_forward.1} parent=1 // pred_fallthru
      _
    // Predicated region
    $region22: #{multimodal_anomaly_forward.1} parent=1 // pred_check
      _
    $region23: #{multimodal_anomaly_forward.1} parent=1 // pred_check_branch
      %43 = sbr.rel (0) target = $region25
    $region24: #{multimodal_anomaly_forward.1} parent=1 // pred_region
      _
    $region25: #{multimodal_anomaly_forward.1} parent=1 // pred_fallthru
      _
    // Predicated region
    $region26: #{multimodal_anomaly_forward.1} parent=1 // pred_check
      _
    $region27: #{multimodal_anomaly_forward.1} parent=1 // pred_check_branch
      %45 = sbr.rel (0) target = $region29
    $region28: #{multimodal_anomaly_forward.1} parent=1 // pred_region
      _
    $region29: #{multimodal_anomaly_forward.1} parent=1 // pred_fallthru
      _
    // Predicated region
    $region30: #{multimodal_anomaly_forward.1} parent=1 // pred_check
      _
    $region31: #{multimodal_anomaly_forward.1} parent=1 // pred_check_branch
      %47 = sbr.rel (0) target = $region33
    $region32: #{multimodal_anomaly_forward.1} parent=1 // pred_region
      %49 = vsyncadd [#allocation7], 0
      %s50 = sshll.u32 %s7, 4
      %s51 = int_to_ptr.hbm [resolvable:$true] %s50
      %s52 = sshll.u32 [#allocation6], 4
      %s53 = int_to_ptr.vmem [resolvable:$true] %s52
      %58 = dma.hbm_to_vmem [thread:$0]  %s51, 1024, %s53, [#allocation7], 64, 64, 4
    $region33: #{multimodal_anomaly_forward.1} parent=1 // pred_fallthru
      _
    // Predicated region
    $region34: #{multimodal_anomaly_forward.1} parent=1 // pred_check
      _
    $region35: #{multimodal_anomaly_forward.1} parent=1 // pred_check_branch
      %60 = sbr.rel (0) target = $region37
    $region36: #{multimodal_anomaly_forward.1} parent=1 // pred_region
      %62 = vsyncadd [#allocation7], 0
      %s63 = sshll.u32 %s8, 4
      %s64 = int_to_ptr.hbm [resolvable:$true] %s63
      %s65 = sshll.u32 [#allocation8], 4
      %s66 = int_to_ptr.vmem [resolvable:$true] %s65
      %71 = dma.hbm_to_vmem [thread:$0]  %s64, 1024, %s66, [#allocation7], 64, 64, 4
    $region37: #{multimodal_anomaly_forward.1} parent=1 // pred_fallthru
      _
    // Predicated region
    $region38: #{multimodal_anomaly_forward.1} parent=1 // pred_check
      _
    $region39: #{multimodal_anomaly_forward.1} parent=1 // pred_check_branch
      %73 = sbr.rel (0) target = $region41
    $region40: #{multimodal_anomaly_forward.1} parent=1 // pred_region
      _
    $region41: #{multimodal_anomaly_forward.1} parent=1 // pred_fallthru
      _
    // Predicated region
    $region42: #{multimodal_anomaly_forward.1} parent=1 // pred_check
      _
    $region43: #{multimodal_anomaly_forward.1} parent=1 // pred_check_branch
      %75 = sbr.rel (0) target = $region45
    $region44: #{multimodal_anomaly_forward.1} parent=1 // pred_region
      _
    $region45: #{multimodal_anomaly_forward.1} parent=1 // pred_fallthru
      _
    // Predicated region
    $region46: #{multimodal_anomaly_forward.1} parent=1 // pred_check
      _
    $region47: #{multimodal_anomaly_forward.1} parent=1 // pred_check_branch
      %77 = sbr.rel (0) target = $region49
    $region48: #{multimodal_anomaly_forward.1} parent=1 // pred_region
      _
    $region49: #{multimodal_anomaly_forward.1} parent=1 // pred_fallthru
      _
    // Predicated region
    $region50: #{multimodal_anomaly_forward.1} parent=1 // pred_check
      _
    $region51: #{multimodal_anomaly_forward.1} parent=1 // pred_check_branch
      %79 = sbr.rel (0) target = $region53
    $region52: #{multimodal_anomaly_forward.1} parent=1 // pred_region
      %81 = dma.done [#allocation5], 4096
    $region53: #{multimodal_anomaly_forward.1} parent=1 // pred_fallthru
      _
    // Predicated region
    $region54: #{multimodal_anomaly_forward.1} parent=1 // pred_check
      _
    $region55: #{multimodal_anomaly_forward.1} parent=1 // pred_check_branch
      %83 = sbr.rel (0) target = $region57
    $region56: #{multimodal_anomaly_forward.1} parent=1 // pred_region
      %85 = dma.done [#allocation7], 1024
    $region57: #{multimodal_anomaly_forward.1} parent=1 // pred_fallthru
      _
    // Predicated region
    $region58: #{multimodal_anomaly_forward.1} parent=1 // pred_check
      _
    $region59: #{multimodal_anomaly_forward.1} parent=1 // pred_check_branch
      %87 = sbr.rel (0) target = $region61
    $region60: #{multimodal_anomaly_forward.1} parent=1 // pred_region
      %89 = dma.done [#allocation7], 1024
    $region61: #{multimodal_anomaly_forward.1} parent=1 // pred_fallthru
      _
    loop: start=0, step=1, limit=8
    $region62: #{multimodal_anomaly_forward.1} parent=1 // loop_pre_header
      _
    $region63: #{multimodal_anomaly_forward.1} parent=1 // loop_header
      %s92 = sphi 0, %s96
      %p93 = scmp.ge.s32.totalorder %s92, 8
    $region64: #{multimodal_anomaly_forward.1} parent=1 // loop_header_branch
      %95 = sbr.rel (%p93) target = $region68
    $region65: #{multimodal_anomaly_forward.1} parent=1 // loop_body
      %s97 = smul.u32 %s92, 2
      %s98 = smul.addr %s97, 4
      %s99 = scalar_lea.vmem %s0, %s98
      %v100 = vld [vmem:[%s99] sm:$0xf]
      %v101 = vld [vmem:[%s99 + $0x4] sm:$0xf]
      %v102 = vld [vmem:[%s2] sm:$0xff]
      %v103 = vld [vmem:[%s2 + $0x8] sm:$0xff]
      %v104 = vld [vmem:[%s2 + $0x10] sm:$0xff]
      %v105 = vld [vmem:[%s2 + $0x18] sm:$0xff]
      %v106 = vld [vmem:[%s2 + $0x20] sm:$0xff]
      %v107 = vld [vmem:[%s2 + $0x28] sm:$0xff]
      %v108 = vld [vmem:[%s2 + $0x30] sm:$0xff]
      %v109 = vld [vmem:[%s2 + $0x38] sm:$0xff]
      %v110 = vld [vmem:[%s4] sm:$0xf]
      %v112 = vperm.slane %v110, 0
      %v113 = vperm.slane %v110, 1
      %v114 = vperm.slane %v110, 2
      %v115 = vperm.slane %v110, 3
      %v122 = vunpack.c.l.b16 %v100
      %v123 = vunpack.c.l.b16 %v101
      %v124 = vpack.c.b16 %v123, %v122
      %v133 = vunpack.c.l.b16 %v102
      %v134 = vunpack.c.h.b16 %v102
      %v135 = vunpack.c.l.b16 %v103
      %v136 = vunpack.c.h.b16 %v103
      %v137 = vunpack.c.l.b16 %v104
      %v138 = vunpack.c.h.b16 %v104
      %v139 = vunpack.c.l.b16 %v105
      %v140 = vunpack.c.h.b16 %v105
      %v141 = vunpack.c.l.b16 %v106
      %v142 = vunpack.c.h.b16 %v106
      %v143 = vunpack.c.l.b16 %v107
      %v144 = vunpack.c.h.b16 %v107
      %v145 = vunpack.c.l.b16 %v108
      %v146 = vunpack.c.h.b16 %v108
      %v147 = vunpack.c.l.b16 %v109
      %v148 = vunpack.c.h.b16 %v109
      %v149 = vpack.c.b16 %v137, %v133
      %v150 = vpack.c.b16 %v138, %v134
      %v151 = vpack.c.b16 %v139, %v135
      %v152 = vpack.c.b16 %v140, %v136
      %v153 = vpack.c.b16 %v145, %v141
      %v154 = vpack.c.b16 %v146, %v142
      %v155 = vpack.c.b16 %v147, %v143
      %v156 = vpack.c.b16 %v148, %v144
      %vm165 = vcmask 261120
      %v167 = vsel %vm165, %v124, 0
      %169 = vmatpush.bf16.msra.mxu0 0
      %170 = vmatpush.bf16.msra.mxu0 0
      %171 = vmatpush.bf16.msra.mxu0 0
      %172 = vmatpush.bf16.msra.mxu0 0
      %173 = vmatpush.bf16.msra.mxu0 0
      %174 = vmatpush.bf16.msra.mxu0 0
      %175 = vmatpush.bf16.msra.mxu0 %v153
      %176 = vmatpush.bf16.msra.mxu0 %v149
      %177 = vmatmul.bf16.gmra.mxu0 %v167
      %v178 = vpop.f32.mrf.mxu0
      %v179 = vadd.f32 %v112, %v178
      %v180 = vpop.f32.mrf.mxu0
      %v181 = vadd.f32 %v112, %v180
      %182 = vdwg.mxu0
      %183 = vmatpush.bf16.msra.mxu0 0
      %184 = vmatpush.bf16.msra.mxu0 0
      %185 = vmatpush.bf16.msra.mxu0 0
      %186 = vmatpush.bf16.msra.mxu0 0
      %187 = vmatpush.bf16.msra.mxu0 0
      %188 = vmatpush.bf16.msra.mxu0 0
      %189 = vmatpush.bf16.msra.mxu0 %v154
      %190 = vmatpush.bf16.msra.mxu0 %v150
      %191 = vmatmul.bf16.gmra.mxu0 %v167
      %v192 = vpop.f32.mrf.mxu0
      %v193 = vadd.f32 %v113, %v192
      %v194 = vpop.f32.mrf.mxu0
      %v195 = vadd.f32 %v113, %v194
      %196 = vdwg.mxu0
      %197 = vmatpush.bf16.msra.mxu0 0
      %198 = vmatpush.bf16.msra.mxu0 0
      %199 = vmatpush.bf16.msra.mxu0 0
      %200 = vmatpush.bf16.msra.mxu0 0
      %201 = vmatpush.bf16.msra.mxu0 0
      %202 = vmatpush.bf16.msra.mxu0 0
      %203 = vmatpush.bf16.msra.mxu0 %v155
      %204 = vmatpush.bf16.msra.mxu0 %v151
      %205 = vmatmul.bf16.gmra.mxu0 %v167
      %v206 = vpop.f32.mrf.mxu0
      %v207 = vadd.f32 %v114, %v206
      %v208 = vpop.f32.mrf.mxu0
      %v209 = vadd.f32 %v114, %v208
      %210 = vdwg.mxu0
      %211 = vmatpush.bf16.msra.mxu0 0
      %212 = vmatpush.bf16.msra.mxu0 0
      %213 = vmatpush.bf16.msra.mxu0 0
      %214 = vmatpush.bf16.msra.mxu0 0
      %215 = vmatpush.bf16.msra.mxu0 0
      %216 = vmatpush.bf16.msra.mxu0 0
      %217 = vmatpush.bf16.msra.mxu0 %v156
      %218 = vmatpush.bf16.msra.mxu0 %v152
      %219 = vmatmul.bf16.gmra.mxu0 %v167
      %v220 = vpop.f32.mrf.mxu0
      %v221 = vadd.f32 %v115, %v220
      %v222 = vpop.f32.mrf.mxu0
      %v223 = vadd.f32 %v115, %v222
      %224 = vdwg.mxu0
      %v225 = vpack.c.bf16 %v193, %v179
      %v226 = vpack.c.bf16 %v221, %v207
      %v227 = vpack.c.bf16 %v195, %v181
      %v228 = vpack.c.bf16 %v223, %v209
      %s229 = smul.u32 %s92, 8
      %s230 = smul.addr %s229, 4
      %s231 = scalar_lea.vmem [#allocation2], %s230
      %232 = vst [vmem:[%s231] sm:$0xff] %v225
      %233 = vst [vmem:[%s231 + $0x8] sm:$0xff] %v226
      %234 = vst [vmem:[%s231 + $0x10] sm:$0xff] %v227
      %235 = vst [vmem:[%s231 + $0x18] sm:$0xff] %v228
    $region66: #{multimodal_anomaly_forward.1} parent=1 // loop_footer
      %s96 = sadd.s32 1, %s92
    $region67: #{multimodal_anomaly_forward.1} parent=1 // loop_footer_branch
      %91 = sbr.rel target = $region63
    $region68: #{multimodal_anomaly_forward.1} parent=1 // loop_exit
      _
    %v236 = vld [vmem:[%s1] sm:$0xf]
    %v237 = vld [vmem:[%s1 + $0x4] sm:$0xf]
    %v238 = vld [vmem:[%s5] sm:$0xf]
    %v239 = vld [vmem:[%s5 + $0x4] sm:$0xf]
    %v240 = vld [vmem:[%s6] sm:$0x1]
    %v242 = vperm.slane %v240, 0
    %v246 = vunpack.c.l.b16 %v236
    %v247 = vunpack.c.l.b16 %v237
    %v248 = vpack.c.b16 %v247, %v246
    %v251 = vunpack.c.l.b16 %v238
    %v252 = vunpack.c.l.b16 %v239
    %v253 = vpack.c.b16 %v252, %v251
    %vm255 = vcmask 130048
    %v257 = vsel %vm255, %v248, 0
    %259 = vmatpush.bf16.msra.mxu0 0
    %260 = vmatpush.bf16.msra.mxu0 0
    %261 = vmatpush.bf16.msra.mxu0 0
    %262 = vmatpush.bf16.msra.mxu0 0
    %263 = vmatpush.bf16.msra.mxu0 0
    %264 = vmatpush.bf16.msra.mxu0 0
    %265 = vmatpush.bf16.msra.mxu0 0
    %266 = vmatpush.bf16.msra.mxu0 %v253
    %267 = vmatmul.bf16.gmra.mxu0 %v257
    %v268 = vpop.f32.mrf.mxu0
    %v269 = vadd.f32 %v242, %v268
    %v270 = vpop.f32.mrf.mxu0
    %v271 = vadd.f32 %v242, %v270
    %272 = vdwg.mxu0
    %v273 = vmax.f32 %v269, 0.0
    %v274 = vmax.f32 %v271, 0.0
    %v275 = vld [vmem:[#allocation4] sm:$0xf]
    %v276 = vld [vmem:[#allocation4 + $0x10] sm:$0xf]
    %v277 = vld [vmem:[#allocation4 + $0x20] sm:$0xf]
    %v278 = vld [vmem:[#allocation4 + $0x30] sm:$0xf]
    %v279 = vld [vmem:[#allocation4 + $0x40] sm:$0xf]
    %v280 = vld [vmem:[#allocation4 + $0x50] sm:$0xf]
    %v281 = vld [vmem:[#allocation4 + $0x60] sm:$0xf]
    %v282 = vld [vmem:[#allocation4 + $0x70] sm:$0xf]
    %v283 = vld [vmem:[#allocation4 + $0x80] sm:$0xf]
    %v284 = vld [vmem:[#allocation4 + $0x90] sm:$0xf]
    %v285 = vld [vmem:[#allocation4 + $0xa0] sm:$0xf]
    %v286 = vld [vmem:[#allocation4 + $0xb0] sm:$0xf]
    %v287 = vld [vmem:[#allocation4 + $0xc0] sm:$0xf]
    %v288 = vld [vmem:[#allocation4 + $0xd0] sm:$0xf]
    %v289 = vld [vmem:[#allocation4 + $0xe0] sm:$0xf]
    %v290 = vld [vmem:[#allocation4 + $0xf0] sm:$0xf]
    %v291 = vld [vmem:[#allocation2] sm:$0xf]
    %v292 = vld [vmem:[#allocation2 + $0x10] sm:$0xf]
    %v293 = vunpack.c.l.bf16 %v291
    %v294 = vunpack.c.l.bf16 %v292
    %v311 = vunpack.c.l.b16 %v275
    %v312 = vunpack.c.l.b16 %v276
    %v313 = vunpack.c.l.b16 %v277
    %v314 = vunpack.c.l.b16 %v278
    %v315 = vunpack.c.l.b16 %v279
    %v316 = vunpack.c.l.b16 %v280
    %v317 = vunpack.c.l.b16 %v281
    %v318 = vunpack.c.l.b16 %v282
    %v319 = vunpack.c.l.b16 %v283
    %v320 = vunpack.c.l.b16 %v284
    %v321 = vunpack.c.l.b16 %v285
    %v322 = vunpack.c.l.b16 %v286
    %v323 = vunpack.c.l.b16 %v287
    %v324 = vunpack.c.l.b16 %v288
    %v325 = vunpack.c.l.b16 %v289
    %v326 = vunpack.c.l.b16 %v290
    %v327 = vpack.c.b16 %v312, %v311
    %v328 = vpack.c.b16 %v314, %v313
    %v329 = vpack.c.b16 %v316, %v315
    %v330 = vpack.c.b16 %v318, %v317
    %v331 = vpack.c.b16 %v320, %v319
    %v332 = vpack.c.b16 %v322, %v321
    %v333 = vpack.c.b16 %v324, %v323
    %v334 = vpack.c.b16 %v326, %v325
    %343 = vmatpush.bf16.msra.mxu0 %v334
    %344 = vmatpush.bf16.msra.mxu0 %v333
    %345 = vmatpush.bf16.msra.mxu0 %v332
    %346 = vmatpush.bf16.msra.mxu0 %v331
    %347 = vmatpush.bf16.msra.mxu0 %v330
    %348 = vmatpush.bf16.msra.mxu0 %v329
    %349 = vmatpush.bf16.msra.mxu0 %v328
    %350 = vmatpush.bf16.msra.mxu0 %v327
    %351 = vmatmul.bf16.gmra.mxu0 0
    %v352 = vpop.f32.mrf.mxu0
    %v353 = vadd.f32 %v293, %v352
    %v354 = vpop.f32.mrf.mxu0
    %v355 = vadd.f32 %v294, %v354
    %356 = vdwg.mxu0
    %v357 = vxor.u32 %v353, 2147483648
    %v358 = vxor.u32 %v355, 2147483648
    %v359 = vmul.f32 %v357, 1.442695
    %v360 = vpow.pop %v359
    %v361 = vmul.f32 %v358, 1.442695
    %v362 = vpow.pop %v361
    %v363 = vadd.f32 %v360, 1.0
    %v364 = vadd.f32 %v362, 1.0
    %v365 = vrcp.pop %v363
    %v366 = vmul.f32 %v363, %v365
    %v367 = vsub.f32 1.0, %v366
    %v368 = vmul.f32 %v365, %v367
    %v369 = vadd.f32 %v365, %v368
    %vm370 = vweird.f32 %v363
    %vm371 = vweird.f32 %v365
    %vm372 = vmor %vm370, %vm371
    %v373 = vsel %vm372, %v365, %v369
    %v374 = vand.u32 2147483647, %v363
    %vm375 = vcmp.eq.f32.partialorder %v374, 8.507059e+37
    %v376 = vand.u32 %v363, 2147483648
    %v377 = vor.u32 1.1754944e-38, %v376
    %v378 = vsel %vm375, %v377, %v373
    %v379 = vmul.f32 1.0, %v378
    %v380 = vrcp.pop %v364
    %v381 = vmul.f32 %v364, %v380
    %v382 = vsub.f32 1.0, %v381
    %v383 = vmul.f32 %v380, %v382
    %v384 = vadd.f32 %v380, %v383
    %vm385 = vweird.f32 %v364
    %vm386 = vweird.f32 %v380
    %vm387 = vmor %vm385, %vm386
    %v388 = vsel %vm387, %v380, %v384
    %v389 = vand.u32 2147483647, %v364
    %vm390 = vcmp.eq.f32.partialorder %v389, 8.507059e+37
    %v391 = vand.u32 %v364, 2147483648
    %v392 = vor.u32 1.1754944e-38, %v391
    %v393 = vsel %vm390, %v392, %v388
    %v394 = vmul.f32 1.0, %v393
    %v395 = vld [vmem:[#allocation4 + $0x8] sm:$0xf]
    %v396 = vld [vmem:[#allocation4 + $0x18] sm:$0xf]
    %v397 = vld [vmem:[#allocation4 + $0x28] sm:$0xf]
    %v398 = vld [vmem:[#allocation4 + $0x38] sm:$0xf]
    %v399 = vld [vmem:[#allocation4 + $0x48] sm:$0xf]
    %v400 = vld [vmem:[#allocation4 + $0x58] sm:$0xf]
    %v401 = vld [vmem:[#allocation4 + $0x68] sm:$0xf]
    %v402 = vld [vmem:[#allocation4 + $0x78] sm:$0xf]
    %v403 = vld [vmem:[#allocation4 + $0x88] sm:$0xf]
    %v404 = vld [vmem:[#allocation4 + $0x98] sm:$0xf]
    %v405 = vld [vmem:[#allocation4 + $0xa8] sm:$0xf]
    %v406 = vld [vmem:[#allocation4 + $0xb8] sm:$0xf]
    %v407 = vld [vmem:[#allocation4 + $0xc8] sm:$0xf]
    %v408 = vld [vmem:[#allocation4 + $0xd8] sm:$0xf]
    %v409 = vld [vmem:[#allocation4 + $0xe8] sm:$0xf]
    %v410 = vld [vmem:[#allocation4 + $0xf8] sm:$0xf]
    %v411 = vld [vmem:[#allocation2 + $0x8] sm:$0xf]
    %v412 = vld [vmem:[#allocation2 + $0x18] sm:$0xf]
    %v413 = vunpack.c.l.bf16 %v411
    %v414 = vunpack.c.l.bf16 %v412
    %v431 = vunpack.c.l.b16 %v395
    %v432 = vunpack.c.l.b16 %v396
    %v433 = vunpack.c.l.b16 %v397
    %v434 = vunpack.c.l.b16 %v398
    %v435 = vunpack.c.l.b16 %v399
    %v436 = vunpack.c.l.b16 %v400
    %v437 = vunpack.c.l.b16 %v401
    %v438 = vunpack.c.l.b16 %v402
    %v439 = vunpack.c.l.b16 %v403
    %v440 = vunpack.c.l.b16 %v404
    %v441 = vunpack.c.l.b16 %v405
    %v442 = vunpack.c.l.b16 %v406
    %v443 = vunpack.c.l.b16 %v407
    %v444 = vunpack.c.l.b16 %v408
    %v445 = vunpack.c.l.b16 %v409
    %v446 = vunpack.c.l.b16 %v410
    %v447 = vpack.c.b16 %v432, %v431
    %v448 = vpack.c.b16 %v434, %v433
    %v449 = vpack.c.b16 %v436, %v435
    %v450 = vpack.c.b16 %v438, %v437
    %v451 = vpack.c.b16 %v440, %v439
    %v452 = vpack.c.b16 %v442, %v441
    %v453 = vpack.c.b16 %v444, %v443
    %v454 = vpack.c.b16 %v446, %v445
    %463 = vmatpush.bf16.msra.mxu0 %v454
    %464 = vmatpush.bf16.msra.mxu0 %v453
    %465 = vmatpush.bf16.msra.mxu0 %v452
    %466 = vmatpush.bf16.msra.mxu0 %v451
    %467 = vmatpush.bf16.msra.mxu0 %v450
    %468 = vmatpush.bf16.msra.mxu0 %v449
    %469 = vmatpush.bf16.msra.mxu0 %v448
    %470 = vmatpush.bf16.msra.mxu0 %v447
    %471 = vmatmul.bf16.gmra.mxu0 0
    %v472 = vpop.f32.mrf.mxu0
    %v473 = vadd.f32 %v413, %v472
    %v474 = vpop.f32.mrf.mxu0
    %v475 = vadd.f32 %v414, %v474
    %476 = vdwg.mxu0
    %v477 = vtanh.pop %v473
    %v478 = vtanh.pop %v475
    %v479 = vmul.f32 %v379, %v477
    %v480 = vmul.f32 %v394, %v478
    %v481 = vld [vmem:[#allocation4 + $0x4] sm:$0xf]
    %v482 = vld [vmem:[#allocation4 + $0x14] sm:$0xf]
    %v483 = vld [vmem:[#allocation4 + $0x24] sm:$0xf]
    %v484 = vld [vmem:[#allocation4 + $0x34] sm:$0xf]
    %v485 = vld [vmem:[#allocation4 + $0x44] sm:$0xf]
    %v486 = vld [vmem:[#allocation4 + $0x54] sm:$0xf]
    %v487 = vld [vmem:[#allocation4 + $0x64] sm:$0xf]
    %v488 = vld [vmem:[#allocation4 + $0x74] sm:$0xf]
    %v489 = vld [vmem:[#allocation4 + $0x84] sm:$0xf]
    %v490 = vld [vmem:[#allocation4 + $0x94] sm:$0xf]
    %v491 = vld [vmem:[#allocation4 + $0xa4] sm:$0xf]
    %v492 = vld [vmem:[#allocation4 + $0xb4] sm:$0xf]
    %v493 = vld [vmem:[#allocation4 + $0xc4] sm:$0xf]
    %v494 = vld [vmem:[#allocation4 + $0xd4] sm:$0xf]
    %v495 = vld [vmem:[#allocation4 + $0xe4] sm:$0xf]
    %v496 = vld [vmem:[#allocation4 + $0xf4] sm:$0xf]
    %v497 = vld [vmem:[#allocation2 + $0x4] sm:$0xf]
    %v498 = vld [vmem:[#allocation2 + $0x14] sm:$0xf]
    %v499 = vunpack.c.l.bf16 %v497
    %v500 = vunpack.c.l.bf16 %v498
    %v517 = vunpack.c.l.b16 %v481
    %v518 = vunpack.c.l.b16 %v482
    %v519 = vunpack.c.l.b16 %v483
    %v520 = vunpack.c.l.b16 %v484
    %v521 = vunpack.c.l.b16 %v485
    %v522 = vunpack.c.l.b16 %v486
    %v523 = vunpack.c.l.b16 %v487
    %v524 = vunpack.c.l.b16 %v488
    %v525 = vunpack.c.l.b16 %v489
    %v526 = vunpack.c.l.b16 %v490
    %v527 = vunpack.c.l.b16 %v491
    %v528 = vunpack.c.l.b16 %v492
    %v529 = vunpack.c.l.b16 %v493
    %v530 = vunpack.c.l.b16 %v494
    %v531 = vunpack.c.l.b16 %v495
    %v532 = vunpack.c.l.b16 %v496
    %v533 = vpack.c.b16 %v518, %v517
    %v534 = vpack.c.b16 %v520, %v519
    %v535 = vpack.c.b16 %v522, %v521
    %v536 = vpack.c.b16 %v524, %v523
    %v537 = vpack.c.b16 %v526, %v525
    %v538 = vpack.c.b16 %v528, %v527
    %v539 = vpack.c.b16 %v530, %v529
    %v540 = vpack.c.b16 %v532, %v531
    %549 = vmatpush.bf16.msra.mxu0 %v540
    %550 = vmatpush.bf16.msra.mxu0 %v539
    %551 = vmatpush.bf16.msra.mxu0 %v538
    %552 = vmatpush.bf16.msra.mxu0 %v537
    %553 = vmatpush.bf16.msra.mxu0 %v536
    %554 = vmatpush.bf16.msra.mxu0 %v535
    %555 = vmatpush.bf16.msra.mxu0 %v534
    %556 = vmatpush.bf16.msra.mxu0 %v533
    %557 = vmatmul.bf16.gmra.mxu0 0
    %v558 = vpop.f32.mrf.mxu0
    %v559 = vadd.f32 %v499, %v558
    %v560 = vpop.f32.mrf.mxu0
    %v561 = vadd.f32 %v500, %v560
    %562 = vdwg.mxu0
    %v563 = vxor.u32 %v559, 2147483648
    %v564 = vxor.u32 %v561, 2147483648
    %v565 = vmul.f32 %v563, 1.442695
    %v566 = vpow.pop %v565
    %v567 = vmul.f32 %v564, 1.442695
    %v568 = vpow.pop %v567
    %v569 = vadd.f32 %v566, 1.0
    %v570 = vadd.f32 %v568, 1.0
    %v571 = vrcp.pop %v569
    %v572 = vmul.f32 %v569, %v571
    %v573 = vsub.f32 1.0, %v572
    %v574 = vmul.f32 %v571, %v573
    %v575 = vadd.f32 %v571, %v574
    %vm576 = vweird.f32 %v569
    %vm577 = vweird.f32 %v571
    %vm578 = vmor %vm576, %vm577
    %v579 = vsel %vm578, %v571, %v575
    %v580 = vand.u32 2147483647, %v569
    %vm581 = vcmp.eq.f32.partialorder %v580, 8.507059e+37
    %v582 = vand.u32 %v569, 2147483648
    %v583 = vor.u32 1.1754944e-38, %v582
    %v584 = vsel %vm581, %v583, %v579
    %v585 = vmul.f32 1.0, %v584
    %v586 = vrcp.pop %v570
    %v587 = vmul.f32 %v570, %v586
    %v588 = vsub.f32 1.0, %v587
    %v589 = vmul.f32 %v586, %v588
    %v590 = vadd.f32 %v586, %v589
    %vm591 = vweird.f32 %v570
    %vm592 = vweird.f32 %v586
    %vm593 = vmor %vm591, %vm592
    %v594 = vsel %vm593, %v586, %v590
    %v595 = vand.u32 2147483647, %v570
    %vm596 = vcmp.eq.f32.partialorder %v595, 8.507059e+37
    %v597 = vand.u32 %v570, 2147483648
    %v598 = vor.u32 1.1754944e-38, %v597
    %v599 = vsel %vm596, %v598, %v594
    %v600 = vmul.f32 1.0, %v599
    %v601 = vmul.f32 %v585, 0.0
    %v602 = vmul.f32 %v600, 0.0
    %v603 = vadd.f32 %v479, %v601
    %v604 = vadd.f32 %v480, %v602
    %v605 = vld [vmem:[#allocation4 + $0xc] sm:$0xf]
    %v606 = vld [vmem:[#allocation4 + $0x1c] sm:$0xf]
    %v607 = vld [vmem:[#allocation4 + $0x2c] sm:$0xf]
    %v608 = vld [vmem:[#allocation4 + $0x3c] sm:$0xf]
    %v609 = vld [vmem:[#allocation4 + $0x4c] sm:$0xf]
    %v610 = vld [vmem:[#allocation4 + $0x5c] sm:$0xf]
    %v611 = vld [vmem:[#allocation4 + $0x6c] sm:$0xf]
    %v612 = vld [vmem:[#allocation4 + $0x7c] sm:$0xf]
    %v613 = vld [vmem:[#allocation4 + $0x8c] sm:$0xf]
    %v614 = vld [vmem:[#allocation4 + $0x9c] sm:$0xf]
    %v615 = vld [vmem:[#allocation4 + $0xac] sm:$0xf]
    %v616 = vld [vmem:[#allocation4 + $0xbc] sm:$0xf]
    %v617 = vld [vmem:[#allocation4 + $0xcc] sm:$0xf]
    %v618 = vld [vmem:[#allocation4 + $0xdc] sm:$0xf]
    %v619 = vld [vmem:[#allocation4 + $0xec] sm:$0xf]
    %v620 = vld [vmem:[#allocation4 + $0xfc] sm:$0xf]
    %v621 = vld [vmem:[#allocation2 + $0xc] sm:$0xf]
    %v622 = vld [vmem:[#allocation2 + $0x1c] sm:$0xf]
    %v623 = vunpack.c.l.bf16 %v621
    %v624 = vunpack.c.l.bf16 %v622
    %v641 = vunpack.c.l.b16 %v605
    %v642 = vunpack.c.l.b16 %v606
    %v643 = vunpack.c.l.b16 %v607
    %v644 = vunpack.c.l.b16 %v608
    %v645 = vunpack.c.l.b16 %v609
    %v646 = vunpack.c.l.b16 %v610
    %v647 = vunpack.c.l.b16 %v611
    %v648 = vunpack.c.l.b16 %v612
    %v649 = vunpack.c.l.b16 %v613
    %v650 = vunpack.c.l.b16 %v614
    %v651 = vunpack.c.l.b16 %v615
    %v652 = vunpack.c.l.b16 %v616
    %v653 = vunpack.c.l.b16 %v617
    %v654 = vunpack.c.l.b16 %v618
    %v655 = vunpack.c.l.b16 %v619
    %v656 = vunpack.c.l.b16 %v620
    %v657 = vpack.c.b16 %v642, %v641
    %v658 = vpack.c.b16 %v644, %v643
    %v659 = vpack.c.b16 %v646, %v645
    %v660 = vpack.c.b16 %v648, %v647
    %v661 = vpack.c.b16 %v650, %v649
    %v662 = vpack.c.b16 %v652, %v651
    %v663 = vpack.c.b16 %v654, %v653
    %v664 = vpack.c.b16 %v656, %v655
    %673 = vmatpush.bf16.msra.mxu0 %v664
    %674 = vmatpush.bf16.msra.mxu0 %v663
    %675 = vmatpush.bf16.msra.mxu0 %v662
    %676 = vmatpush.bf16.msra.mxu0 %v661
    %677 = vmatpush.bf16.msra.mxu0 %v660
    %678 = vmatpush.bf16.msra.mxu0 %v659
    %679 = vmatpush.bf16.msra.mxu0 %v658
    %680 = vmatpush.bf16.msra.mxu0 %v657
    %681 = vmatmul.bf16.gmra.mxu0 0
    %v682 = vpop.f32.mrf.mxu0
    %v683 = vadd.f32 %v623, %v682
    %v684 = vpop.f32.mrf.mxu0
    %v685 = vadd.f32 %v624, %v684
    %686 = vdwg.mxu0
    %v687 = vxor.u32 %v683, 2147483648
    %v688 = vxor.u32 %v685, 2147483648
    %v689 = vmul.f32 %v687, 1.442695
    %v690 = vpow.pop %v689
    %v691 = vmul.f32 %v688, 1.442695
    %v692 = vpow.pop %v691
    %v693 = vadd.f32 %v690, 1.0
    %v694 = vadd.f32 %v692, 1.0
    %v695 = vrcp.pop %v693
    %v696 = vmul.f32 %v693, %v695
    %v697 = vsub.f32 1.0, %v696
    %v698 = vmul.f32 %v695, %v697
    %v699 = vadd.f32 %v695, %v698
    %vm700 = vweird.f32 %v693
    %vm701 = vweird.f32 %v695
    %vm702 = vmor %vm700, %vm701
    %v703 = vsel %vm702, %v695, %v699
    %v704 = vand.u32 2147483647, %v693
    %vm705 = vcmp.eq.f32.partialorder %v704, 8.507059e+37
    %v706 = vand.u32 %v693, 2147483648
    %v707 = vor.u32 1.1754944e-38, %v706
    %v708 = vsel %vm705, %v707, %v703
    %v709 = vmul.f32 1.0, %v708
    %v710 = vrcp.pop %v694
    %v711 = vmul.f32 %v694, %v710
    %v712 = vsub.f32 1.0, %v711
    %v713 = vmul.f32 %v710, %v712
    %v714 = vadd.f32 %v710, %v713
    %vm715 = vweird.f32 %v694
    %vm716 = vweird.f32 %v710
    %vm717 = vmor %vm715, %vm716
    %v718 = vsel %vm717, %v710, %v714
    %v719 = vand.u32 2147483647, %v694
    %vm720 = vcmp.eq.f32.partialorder %v719, 8.507059e+37
    %v721 = vand.u32 %v694, 2147483648
    %v722 = vor.u32 1.1754944e-38, %v721
    %v723 = vsel %vm720, %v722, %v718
    %v724 = vmul.f32 1.0, %v723
    %v725 = vtanh.pop %v603
    %v726 = vtanh.pop %v604
    %v727 = vmul.f32 %v709, %v725
    %v728 = vmul.f32 %v724, %v726
    %v729 = vpack.c.bf16 %v728, %v727
    %s730 = scalar_lea.vmem [#allocation2], 32
    %v731 = vld [vmem:[%s730] sm:$0xf]
    %v732 = vld [vmem:[%s730 + $0x10] sm:$0xf]
    %v733 = vunpack.c.l.bf16 %v731
    %v734 = vunpack.c.l.bf16 %v732
    %735 = vmatpush.bf16.msra.mxu0 %v334
    %736 = vmatpush.bf16.msra.mxu0 %v333
    %737 = vmatpush.bf16.msra.mxu0 %v332
    %738 = vmatpush.bf16.msra.mxu0 %v331
    %739 = vmatpush.bf16.msra.mxu0 %v330
    %740 = vmatpush.bf16.msra.mxu0 %v329
    %741 = vmatpush.bf16.msra.mxu0 %v328
    %742 = vmatpush.bf16.msra.mxu0 %v327
    %743 = vmatmul.bf16.gmra.mxu0 %v729
    %v744 = vpop.f32.mrf.mxu0
    %v745 = vadd.f32 %v733, %v744
    %v746 = vpop.f32.mrf.mxu0
    %v747 = vadd.f32 %v734, %v746
    %748 = vdwg.mxu0
    %v749 = vxor.u32 %v745, 2147483648
    %v750 = vxor.u32 %v747, 2147483648
    %v751 = vmul.f32 %v749, 1.442695
    %v752 = vpow.pop %v751
    %v753 = vmul.f32 %v750, 1.442695
    %v754 = vpow.pop %v753
    %v755 = vadd.f32 %v752, 1.0
    %v756 = vadd.f32 %v754, 1.0
    %v757 = vrcp.pop %v755
    %v758 = vmul.f32 %v755, %v757
    %v759 = vsub.f32 1.0, %v758
    %v760 = vmul.f32 %v757, %v759
    %v761 = vadd.f32 %v757, %v760
    %vm762 = vweird.f32 %v755
    %vm763 = vweird.f32 %v757
    %vm764 = vmor %vm762, %vm763
    %v765 = vsel %vm764, %v757, %v761
    %v766 = vand.u32 2147483647, %v755
    %vm767 = vcmp.eq.f32.partialorder %v766, 8.507059e+37
    %v768 = vand.u32 %v755, 2147483648
    %v769 = vor.u32 1.1754944e-38, %v768
    %v770 = vsel %vm767, %v769, %v765
    %v771 = vmul.f32 1.0, %v770
    %v772 = vrcp.pop %v756
    %v773 = vmul.f32 %v756, %v772
    %v774 = vsub.f32 1.0, %v773
    %v775 = vmul.f32 %v772, %v774
    %v776 = vadd.f32 %v772, %v775
    %vm777 = vweird.f32 %v756
    %vm778 = vweird.f32 %v772
    %vm779 = vmor %vm777, %vm778
    %v780 = vsel %vm779, %v772, %v776
    %v781 = vand.u32 2147483647, %v756
    %vm782 = vcmp.eq.f32.partialorder %v781, 8.507059e+37
    %v783 = vand.u32 %v756, 2147483648
    %v784 = vor.u32 1.1754944e-38, %v783
    %v785 = vsel %vm782, %v784, %v780
    %v786 = vmul.f32 1.0, %v785
    %v787 = vld [vmem:[%s730 + $0x8] sm:$0xf]
    %v788 = vld [vmem:[%s730 + $0x18] sm:$0xf]
    %v789 = vunpack.c.l.bf16 %v787
    %v790 = vunpack.c.l.bf16 %v788
    %791 = vmatpush.bf16.msra.mxu0 %v454
    %792 = vmatpush.bf16.msra.mxu0 %v453
    %793 = vmatpush.bf16.msra.mxu0 %v452
    %794 = vmatpush.bf16.msra.mxu0 %v451
    %795 = vmatpush.bf16.msra.mxu0 %v450
    %796 = vmatpush.bf16.msra.mxu0 %v449
    %797 = vmatpush.bf16.msra.mxu0 %v448
    %798 = vmatpush.bf16.msra.mxu0 %v447
    %799 = vmatmul.bf16.gmra.mxu0 %v729
    %v800 = vpop.f32.mrf.mxu0
    %v801 = vadd.f32 %v789, %v800
    %v802 = vpop.f32.mrf.mxu0
    %v803 = vadd.f32 %v790, %v802
    %804 = vdwg.mxu0
    %v805 = vtanh.pop %v801
    %v806 = vtanh.pop %v803
    %v807 = vmul.f32 %v771, %v805
    %v808 = vmul.f32 %v786, %v806
    %v809 = vld [vmem:[%s730 + $0x4] sm:$0xf]
    %v810 = vld [vmem:[%s730 + $0x14] sm:$0xf]
    %v811 = vunpack.c.l.bf16 %v809
    %v812 = vunpack.c.l.bf16 %v810
    %813 = vmatpush.bf16.msra.mxu0 %v540
    %814 = vmatpush.bf16.msra.mxu0 %v539
    %815 = vmatpush.bf16.msra.mxu0 %v538
    %816 = vmatpush.bf16.msra.mxu0 %v537
    %817 = vmatpush.bf16.msra.mxu0 %v536
    %818 = vmatpush.bf16.msra.mxu0 %v535
    %819 = vmatpush.bf16.msra.mxu0 %v534
    %820 = vmatpush.bf16.msra.mxu0 %v533
    %821 = vmatmul.bf16.gmra.mxu0 %v729
    %v822 = vpop.f32.mrf.mxu0
    %v823 = vadd.f32 %v811, %v822
    %v824 = vpop.f32.mrf.mxu0
    %v825 = vadd.f32 %v812, %v824
    %826 = vdwg.mxu0
    %v827 = vxor.u32 %v823, 2147483648
    %v828 = vxor.u32 %v825, 2147483648
    %v829 = vmul.f32 %v827, 1.442695
    %v830 = vpow.pop %v829
    %v831 = vmul.f32 %v828, 1.442695
    %v832 = vpow.pop %v831
    %v833 = vadd.f32 %v830, 1.0
    %v834 = vadd.f32 %v832, 1.0
    %v835 = vrcp.pop %v833
    %v836 = vmul.f32 %v833, %v835
    %v837 = vsub.f32 1.0, %v836
    %v838 = vmul.f32 %v835, %v837
    %v839 = vadd.f32 %v835, %v838
    %vm840 = vweird.f32 %v833
    %vm841 = vweird.f32 %v835
    %vm842 = vmor %vm840, %vm841
    %v843 = vsel %vm842, %v835, %v839
    %v844 = vand.u32 2147483647, %v833
    %vm845 = vcmp.eq.f32.partialorder %v844, 8.507059e+37
    %v846 = vand.u32 %v833, 2147483648
    %v847 = vor.u32 1.1754944e-38, %v846
    %v848 = vsel %vm845, %v847, %v843
    %v849 = vmul.f32 1.0, %v848
    %v850 = vrcp.pop %v834
    %v851 = vmul.f32 %v834, %v850
    %v852 = vsub.f32 1.0, %v851
    %v853 = vmul.f32 %v850, %v852
    %v854 = vadd.f32 %v850, %v853
    %vm855 = vweird.f32 %v834
    %vm856 = vweird.f32 %v850
    %vm857 = vmor %vm855, %vm856
    %v858 = vsel %vm857, %v850, %v854
    %v859 = vand.u32 2147483647, %v834
    %vm860 = vcmp.eq.f32.partialorder %v859, 8.507059e+37
    %v861 = vand.u32 %v834, 2147483648
    %v862 = vor.u32 1.1754944e-38, %v861
    %v863 = vsel %vm860, %v862, %v858
    %v864 = vmul.f32 1.0, %v863
    %v865 = vmul.f32 %v849, %v603
    %v866 = vmul.f32 %v864, %v604
    %v867 = vadd.f32 %v807, %v865
    %v868 = vadd.f32 %v808, %v866
    %v869 = vld [vmem:[%s730 + $0xc] sm:$0xf]
    %v870 = vld [vmem:[%s730 + $0x1c] sm:$0xf]
    %v871 = vunpack.c.l.bf16 %v869
    %v872 = vunpack.c.l.bf16 %v870
    %873 = vmatpush.bf16.msra.mxu0 %v664
    %874 = vmatpush.bf16.msra.mxu0 %v663
    %875 = vmatpush.bf16.msra.mxu0 %v662
    %876 = vmatpush.bf16.msra.mxu0 %v661
    %877 = vmatpush.bf16.msra.mxu0 %v660
    %878 = vmatpush.bf16.msra.mxu0 %v659
    %879 = vmatpush.bf16.msra.mxu0 %v658
    %880 = vmatpush.bf16.msra.mxu0 %v657
    %881 = vmatmul.bf16.gmra.mxu0 %v729
    %v882 = vpop.f32.mrf.mxu0
    %v883 = vadd.f32 %v871, %v882
    %v884 = vpop.f32.mrf.mxu0
    %v885 = vadd.f32 %v872, %v884
    %886 = vdwg.mxu0
    %v887 = vxor.u32 %v883, 2147483648
    %v888 = vxor.u32 %v885, 2147483648
    %v889 = vmul.f32 %v887, 1.442695
    %v890 = vpow.pop %v889
    %v891 = vmul.f32 %v888, 1.442695
    %v892 = vpow.pop %v891
    %v893 = vadd.f32 %v890, 1.0
    %v894 = vadd.f32 %v892, 1.0
    %v895 = vrcp.pop %v893
    %v896 = vmul.f32 %v893, %v895
    %v897 = vsub.f32 1.0, %v896
    %v898 = vmul.f32 %v895, %v897
    %v899 = vadd.f32 %v895, %v898
    %vm900 = vweird.f32 %v893
    %vm901 = vweird.f32 %v895
    %vm902 = vmor %vm900, %vm901
    %v903 = vsel %vm902, %v895, %v899
    %v904 = vand.u32 2147483647, %v893
    %vm905 = vcmp.eq.f32.partialorder %v904, 8.507059e+37
    %v906 = vand.u32 %v893, 2147483648
    %v907 = vor.u32 1.1754944e-38, %v906
    %v908 = vsel %vm905, %v907, %v903
    %v909 = vmul.f32 1.0, %v908
    %v910 = vrcp.pop %v894
    %v911 = vmul.f32 %v894, %v910
    %v912 = vsub.f32 1.0, %v911
    %v913 = vmul.f32 %v910, %v912
    %v914 = vadd.f32 %v910, %v913
    %vm915 = vweird.f32 %v894
    %vm916 = vweird.f32 %v910
    %vm917 = vmor %vm915, %vm916
    %v918 = vsel %vm917, %v910, %v914
    %v919 = vand.u32 2147483647, %v894
    %vm920 = vcmp.eq.f32.partialorder %v919, 8.507059e+37
    %v921 = vand.u32 %v894, 2147483648
    %v922 = vor.u32 1.1754944e-38, %v921
    %v923 = vsel %vm920, %v922, %v918
    %v924 = vmul.f32 1.0, %v923
    %v925 = vtanh.pop %v867
    %v926 = vtanh.pop %v868
    %v927 = vmul.f32 %v909, %v925
    %v928 = vmul.f32 %v924, %v926
    %v929 = vpack.c.bf16 %v928, %v927
    %s930 = scalar_lea.vmem [#allocation2], 64
    %v931 = vld [vmem:[%s930] sm:$0xf]
    %v932 = vld [vmem:[%s930 + $0x10] sm:$0xf]
    %v933 = vunpack.c.l.bf16 %v931
    %v934 = vunpack.c.l.bf16 %v932
    %935 = vmatpush.bf16.msra.mxu0 %v334
    %936 = vmatpush.bf16.msra.mxu0 %v333
    %937 = vmatpush.bf16.msra.mxu0 %v332
    %938 = vmatpush.bf16.msra.mxu0 %v331
    %939 = vmatpush.bf16.msra.mxu0 %v330
    %940 = vmatpush.bf16.msra.mxu0 %v329
    %941 = vmatpush.bf16.msra.mxu0 %v328
    %942 = vmatpush.bf16.msra.mxu0 %v327
    %943 = vmatmul.bf16.gmra.mxu0 %v929
    %v944 = vpop.f32.mrf.mxu0
    %v945 = vadd.f32 %v933, %v944
    %v946 = vpop.f32.mrf.mxu0
    %v947 = vadd.f32 %v934, %v946
    %948 = vdwg.mxu0
    %v949 = vxor.u32 %v945, 2147483648
    %v950 = vxor.u32 %v947, 2147483648
    %v951 = vmul.f32 %v949, 1.442695
    %v952 = vpow.pop %v951
    %v953 = vmul.f32 %v950, 1.442695
    %v954 = vpow.pop %v953
    %v955 = vadd.f32 %v952, 1.0
    %v956 = vadd.f32 %v954, 1.0
    %v957 = vrcp.pop %v955
    %v958 = vmul.f32 %v955, %v957
    %v959 = vsub.f32 1.0, %v958
    %v960 = vmul.f32 %v957, %v959
    %v961 = vadd.f32 %v957, %v960
    %vm962 = vweird.f32 %v955
    %vm963 = vweird.f32 %v957
    %vm964 = vmor %vm962, %vm963
    %v965 = vsel %vm964, %v957, %v961
    %v966 = vand.u32 2147483647, %v955
    %vm967 = vcmp.eq.f32.partialorder %v966, 8.507059e+37
    %v968 = vand.u32 %v955, 2147483648
    %v969 = vor.u32 1.1754944e-38, %v968
    %v970 = vsel %vm967, %v969, %v965
    %v971 = vmul.f32 1.0, %v970
    %v972 = vrcp.pop %v956
    %v973 = vmul.f32 %v956, %v972
    %v974 = vsub.f32 1.0, %v973
    %v975 = vmul.f32 %v972, %v974
    %v976 = vadd.f32 %v972, %v975
    %vm977 = vweird.f32 %v956
    %vm978 = vweird.f32 %v972
    %vm979 = vmor %vm977, %vm978
    %v980 = vsel %vm979, %v972, %v976
    %v981 = vand.u32 2147483647, %v956
    %vm982 = vcmp.eq.f32.partialorder %v981, 8.507059e+37
    %v983 = vand.u32 %v956, 2147483648
    %v984 = vor.u32 1.1754944e-38, %v983
    %v985 = vsel %vm982, %v984, %v980
    %v986 = vmul.f32 1.0, %v985
    %v987 = vld [vmem:[%s930 + $0x8] sm:$0xf]
    %v988 = vld [vmem:[%s930 + $0x18] sm:$0xf]
    %v989 = vunpack.c.l.bf16 %v987
    %v990 = vunpack.c.l.bf16 %v988
    %991 = vmatpush.bf16.msra.mxu0 %v454
    %992 = vmatpush.bf16.msra.mxu0 %v453
    %993 = vmatpush.bf16.msra.mxu0 %v452
    %994 = vmatpush.bf16.msra.mxu0 %v451
    %995 = vmatpush.bf16.msra.mxu0 %v450
    %996 = vmatpush.bf16.msra.mxu0 %v449
    %997 = vmatpush.bf16.msra.mxu0 %v448
    %998 = vmatpush.bf16.msra.mxu0 %v447
    %999 = vmatmul.bf16.gmra.mxu0 %v929
    %v1000 = vpop.f32.mrf.mxu0
    %v1001 = vadd.f32 %v989, %v1000
    %v1002 = vpop.f32.mrf.mxu0
    %v1003 = vadd.f32 %v990, %v1002
    %1004 = vdwg.mxu0
    %v1005 = vtanh.pop %v1001
    %v1006 = vtanh.pop %v1003
    %v1007 = vmul.f32 %v971, %v1005
    %v1008 = vmul.f32 %v986, %v1006
    %v1009 = vld [vmem:[%s930 + $0x4] sm:$0xf]
    %v1010 = vld [vmem:[%s930 + $0x14] sm:$0xf]
    %v1011 = vunpack.c.l.bf16 %v1009
    %v1012 = vunpack.c.l.bf16 %v1010
    %1013 = vmatpush.bf16.msra.mxu0 %v540
    %1014 = vmatpush.bf16.msra.mxu0 %v539
    %1015 = vmatpush.bf16.msra.mxu0 %v538
    %1016 = vmatpush.bf16.msra.mxu0 %v537
    %1017 = vmatpush.bf16.msra.mxu0 %v536
    %1018 = vmatpush.bf16.msra.mxu0 %v535
    %1019 = vmatpush.bf16.msra.mxu0 %v534
    %1020 = vmatpush.bf16.msra.mxu0 %v533
    %1021 = vmatmul.bf16.gmra.mxu0 %v929
    %v1022 = vpop.f32.mrf.mxu0
    %v1023 = vadd.f32 %v1011, %v1022
    %v1024 = vpop.f32.mrf.mxu0
    %v1025 = vadd.f32 %v1012, %v1024
    %1026 = vdwg.mxu0
    %v1027 = vxor.u32 %v1023, 2147483648
    %v1028 = vxor.u32 %v1025, 2147483648
    %v1029 = vmul.f32 %v1027, 1.442695
    %v1030 = vpow.pop %v1029
    %v1031 = vmul.f32 %v1028, 1.442695
    %v1032 = vpow.pop %v1031
    %v1033 = vadd.f32 %v1030, 1.0
    %v1034 = vadd.f32 %v1032, 1.0
    %v1035 = vrcp.pop %v1033
    %v1036 = vmul.f32 %v1033, %v1035
    %v1037 = vsub.f32 1.0, %v1036
    %v1038 = vmul.f32 %v1035, %v1037
    %v1039 = vadd.f32 %v1035, %v1038
    %vm1040 = vweird.f32 %v1033
    %vm1041 = vweird.f32 %v1035
    %vm1042 = vmor %vm1040, %vm1041
    %v1043 = vsel %vm1042, %v1035, %v1039
    %v1044 = vand.u32 2147483647, %v1033
    %vm1045 = vcmp.eq.f32.partialorder %v1044, 8.507059e+37
    %v1046 = vand.u32 %v1033, 2147483648
    %v1047 = vor.u32 1.1754944e-38, %v1046
    %v1048 = vsel %vm1045, %v1047, %v1043
    %v1049 = vmul.f32 1.0, %v1048
    %v1050 = vrcp.pop %v1034
    %v1051 = vmul.f32 %v1034, %v1050
    %v1052 = vsub.f32 1.0, %v1051
    %v1053 = vmul.f32 %v1050, %v1052
    %v1054 = vadd.f32 %v1050, %v1053
    %vm1055 = vweird.f32 %v1034
    %vm1056 = vweird.f32 %v1050
    %vm1057 = vmor %vm1055, %vm1056
    %v1058 = vsel %vm1057, %v1050, %v1054
    %v1059 = vand.u32 2147483647, %v1034
    %vm1060 = vcmp.eq.f32.partialorder %v1059, 8.507059e+37
    %v1061 = vand.u32 %v1034, 2147483648
    %v1062 = vor.u32 1.1754944e-38, %v1061
    %v1063 = vsel %vm1060, %v1062, %v1058
    %v1064 = vmul.f32 1.0, %v1063
    %v1065 = vmul.f32 %v1049, %v867
    %v1066 = vmul.f32 %v1064, %v868
    %v1067 = vadd.f32 %v1007, %v1065
    %v1068 = vadd.f32 %v1008, %v1066
    %v1069 = vld [vmem:[%s930 + $0xc] sm:$0xf]
    %v1070 = vld [vmem:[%s930 + $0x1c] sm:$0xf]
    %v1071 = vunpack.c.l.bf16 %v1069
    %v1072 = vunpack.c.l.bf16 %v1070
    %1073 = vmatpush.bf16.msra.mxu0 %v664
    %1074 = vmatpush.bf16.msra.mxu0 %v663
    %1075 = vmatpush.bf16.msra.mxu0 %v662
    %1076 = vmatpush.bf16.msra.mxu0 %v661
    %1077 = vmatpush.bf16.msra.mxu0 %v660
    %1078 = vmatpush.bf16.msra.mxu0 %v659
    %1079 = vmatpush.bf16.msra.mxu0 %v658
    %1080 = vmatpush.bf16.msra.mxu0 %v657
    %1081 = vmatmul.bf16.gmra.mxu0 %v929
    %v1082 = vpop.f32.mrf.mxu0
    %v1083 = vadd.f32 %v1071, %v1082
    %v1084 = vpop.f32.mrf.mxu0
    %v1085 = vadd.f32 %v1072, %v1084
    %1086 = vdwg.mxu0
    %v1087 = vxor.u32 %v1083, 2147483648
    %v1088 = vxor.u32 %v1085, 2147483648
    %v1089 = vmul.f32 %v1087, 1.442695
    %v1090 = vpow.pop %v1089
    %v1091 = vmul.f32 %v1088, 1.442695
    %v1092 = vpow.pop %v1091
    %v1093 = vadd.f32 %v1090, 1.0
    %v1094 = vadd.f32 %v1092, 1.0
    %v1095 = vrcp.pop %v1093
    %v1096 = vmul.f32 %v1093, %v1095
    %v1097 = vsub.f32 1.0, %v1096
    %v1098 = vmul.f32 %v1095, %v1097
    %v1099 = vadd.f32 %v1095, %v1098
    %vm1100 = vweird.f32 %v1093
    %vm1101 = vweird.f32 %v1095
    %vm1102 = vmor %vm1100, %vm1101
    %v1103 = vsel %vm1102, %v1095, %v1099
    %v1104 = vand.u32 2147483647, %v1093
    %vm1105 = vcmp.eq.f32.partialorder %v1104, 8.507059e+37
    %v1106 = vand.u32 %v1093, 2147483648
    %v1107 = vor.u32 1.1754944e-38, %v1106
    %v1108 = vsel %vm1105, %v1107, %v1103
    %v1109 = vmul.f32 1.0, %v1108
    %v1110 = vrcp.pop %v1094
    %v1111 = vmul.f32 %v1094, %v1110
    %v1112 = vsub.f32 1.0, %v1111
    %v1113 = vmul.f32 %v1110, %v1112
    %v1114 = vadd.f32 %v1110, %v1113
    %vm1115 = vweird.f32 %v1094
    %vm1116 = vweird.f32 %v1110
    %vm1117 = vmor %vm1115, %vm1116
    %v1118 = vsel %vm1117, %v1110, %v1114
    %v1119 = vand.u32 2147483647, %v1094
    %vm1120 = vcmp.eq.f32.partialorder %v1119, 8.507059e+37
    %v1121 = vand.u32 %v1094, 2147483648
    %v1122 = vor.u32 1.1754944e-38, %v1121
    %v1123 = vsel %vm1120, %v1122, %v1118
    %v1124 = vmul.f32 1.0, %v1123
    %v1125 = vtanh.pop %v1067
    %v1126 = vtanh.pop %v1068
    %v1127 = vmul.f32 %v1109, %v1125
    %v1128 = vmul.f32 %v1124, %v1126
    %v1129 = vpack.c.bf16 %v1128, %v1127
    %s1130 = scalar_lea.vmem [#allocation2], 96
    %v1131 = vld [vmem:[%s1130] sm:$0xf]
    %v1132 = vld [vmem:[%s1130 + $0x10] sm:$0xf]
    %v1133 = vunpack.c.l.bf16 %v1131
    %v1134 = vunpack.c.l.bf16 %v1132
    %1135 = vmatpush.bf16.msra.mxu0 %v334
    %1136 = vmatpush.bf16.msra.mxu0 %v333
    %1137 = vmatpush.bf16.msra.mxu0 %v332
    %1138 = vmatpush.bf16.msra.mxu0 %v331
    %1139 = vmatpush.bf16.msra.mxu0 %v330
    %1140 = vmatpush.bf16.msra.mxu0 %v329
    %1141 = vmatpush.bf16.msra.mxu0 %v328
    %1142 = vmatpush.bf16.msra.mxu0 %v327
    %1143 = vmatmul.bf16.gmra.mxu0 %v1129
    %v1144 = vpop.f32.mrf.mxu0
    %v1145 = vadd.f32 %v1133, %v1144
    %v1146 = vpop.f32.mrf.mxu0
    %v1147 = vadd.f32 %v1134, %v1146
    %1148 = vdwg.mxu0
    %v1149 = vxor.u32 %v1145, 2147483648
    %v1150 = vxor.u32 %v1147, 2147483648
    %v1151 = vmul.f32 %v1149, 1.442695
    %v1152 = vpow.pop %v1151
    %v1153 = vmul.f32 %v1150, 1.442695
    %v1154 = vpow.pop %v1153
    %v1155 = vadd.f32 %v1152, 1.0
    %v1156 = vadd.f32 %v1154, 1.0
    %v1157 = vrcp.pop %v1155
    %v1158 = vmul.f32 %v1155, %v1157
    %v1159 = vsub.f32 1.0, %v1158
    %v1160 = vmul.f32 %v1157, %v1159
    %v1161 = vadd.f32 %v1157, %v1160
    %vm1162 = vweird.f32 %v1155
    %vm1163 = vweird.f32 %v1157
    %vm1164 = vmor %vm1162, %vm1163
    %v1165 = vsel %vm1164, %v1157, %v1161
    %v1166 = vand.u32 2147483647, %v1155
    %vm1167 = vcmp.eq.f32.partialorder %v1166, 8.507059e+37
    %v1168 = vand.u32 %v1155, 2147483648
    %v1169 = vor.u32 1.1754944e-38, %v1168
    %v1170 = vsel %vm1167, %v1169, %v1165
    %v1171 = vmul.f32 1.0, %v1170
    %v1172 = vrcp.pop %v1156
    %v1173 = vmul.f32 %v1156, %v1172
    %v1174 = vsub.f32 1.0, %v1173
    %v1175 = vmul.f32 %v1172, %v1174
    %v1176 = vadd.f32 %v1172, %v1175
    %vm1177 = vweird.f32 %v1156
    %vm1178 = vweird.f32 %v1172
    %vm1179 = vmor %vm1177, %vm1178
    %v1180 = vsel %vm1179, %v1172, %v1176
    %v1181 = vand.u32 2147483647, %v1156
    %vm1182 = vcmp.eq.f32.partialorder %v1181, 8.507059e+37
    %v1183 = vand.u32 %v1156, 2147483648
    %v1184 = vor.u32 1.1754944e-38, %v1183
    %v1185 = vsel %vm1182, %v1184, %v1180
    %v1186 = vmul.f32 1.0, %v1185
    %v1187 = vld [vmem:[%s1130 + $0x8] sm:$0xf]
    %v1188 = vld [vmem:[%s1130 + $0x18] sm:$0xf]
    %v1189 = vunpack.c.l.bf16 %v1187
    %v1190 = vunpack.c.l.bf16 %v1188
    %1191 = vmatpush.bf16.msra.mxu0 %v454
    %1192 = vmatpush.bf16.msra.mxu0 %v453
    %1193 = vmatpush.bf16.msra.mxu0 %v452
    %1194 = vmatpush.bf16.msra.mxu0 %v451
    %1195 = vmatpush.bf16.msra.mxu0 %v450
    %1196 = vmatpush.bf16.msra.mxu0 %v449
    %1197 = vmatpush.bf16.msra.mxu0 %v448
    %1198 = vmatpush.bf16.msra.mxu0 %v447
    %1199 = vmatmul.bf16.gmra.mxu0 %v1129
    %v1200 = vpop.f32.mrf.mxu0
    %v1201 = vadd.f32 %v1189, %v1200
    %v1202 = vpop.f32.mrf.mxu0
    %v1203 = vadd.f32 %v1190, %v1202
    %1204 = vdwg.mxu0
    %v1205 = vtanh.pop %v1201
    %v1206 = vtanh.pop %v1203
    %v1207 = vmul.f32 %v1171, %v1205
    %v1208 = vmul.f32 %v1186, %v1206
    %v1209 = vld [vmem:[%s1130 + $0x4] sm:$0xf]
    %v1210 = vld [vmem:[%s1130 + $0x14] sm:$0xf]
    %v1211 = vunpack.c.l.bf16 %v1209
    %v1212 = vunpack.c.l.bf16 %v1210
    %1213 = vmatpush.bf16.msra.mxu0 %v540
    %1214 = vmatpush.bf16.msra.mxu0 %v539
    %1215 = vmatpush.bf16.msra.mxu0 %v538
    %1216 = vmatpush.bf16.msra.mxu0 %v537
    %1217 = vmatpush.bf16.msra.mxu0 %v536
    %1218 = vmatpush.bf16.msra.mxu0 %v535
    %1219 = vmatpush.bf16.msra.mxu0 %v534
    %1220 = vmatpush.bf16.msra.mxu0 %v533
    %1221 = vmatmul.bf16.gmra.mxu0 %v1129
    %v1222 = vpop.f32.mrf.mxu0
    %v1223 = vadd.f32 %v1211, %v1222
    %v1224 = vpop.f32.mrf.mxu0
    %v1225 = vadd.f32 %v1212, %v1224
    %1226 = vdwg.mxu0
    %v1227 = vxor.u32 %v1223, 2147483648
    %v1228 = vxor.u32 %v1225, 2147483648
    %v1229 = vmul.f32 %v1227, 1.442695
    %v1230 = vpow.pop %v1229
    %v1231 = vmul.f32 %v1228, 1.442695
    %v1232 = vpow.pop %v1231
    %v1233 = vadd.f32 %v1230, 1.0
    %v1234 = vadd.f32 %v1232, 1.0
    %v1235 = vrcp.pop %v1233
    %v1236 = vmul.f32 %v1233, %v1235
    %v1237 = vsub.f32 1.0, %v1236
    %v1238 = vmul.f32 %v1235, %v1237
    %v1239 = vadd.f32 %v1235, %v1238
    %vm1240 = vweird.f32 %v1233
    %vm1241 = vweird.f32 %v1235
    %vm1242 = vmor %vm1240, %vm1241
    %v1243 = vsel %vm1242, %v1235, %v1239
    %v1244 = vand.u32 2147483647, %v1233
    %vm1245 = vcmp.eq.f32.partialorder %v1244, 8.507059e+37
    %v1246 = vand.u32 %v1233, 2147483648
    %v1247 = vor.u32 1.1754944e-38, %v1246
    %v1248 = vsel %vm1245, %v1247, %v1243
    %v1249 = vmul.f32 1.0, %v1248
    %v1250 = vrcp.pop %v1234
    %v1251 = vmul.f32 %v1234, %v1250
    %v1252 = vsub.f32 1.0, %v1251
    %v1253 = vmul.f32 %v1250, %v1252
    %v1254 = vadd.f32 %v1250, %v1253
    %vm1255 = vweird.f32 %v1234
    %vm1256 = vweird.f32 %v1250
    %vm1257 = vmor %vm1255, %vm1256
    %v1258 = vsel %vm1257, %v1250, %v1254
    %v1259 = vand.u32 2147483647, %v1234
    %vm1260 = vcmp.eq.f32.partialorder %v1259, 8.507059e+37
    %v1261 = vand.u32 %v1234, 2147483648
    %v1262 = vor.u32 1.1754944e-38, %v1261
    %v1263 = vsel %vm1260, %v1262, %v1258
    %v1264 = vmul.f32 1.0, %v1263
    %v1265 = vmul.f32 %v1249, %v1067
    %v1266 = vmul.f32 %v1264, %v1068
    %v1267 = vadd.f32 %v1207, %v1265
    %v1268 = vadd.f32 %v1208, %v1266
    %v1269 = vld [vmem:[%s1130 + $0xc] sm:$0xf]
    %v1270 = vld [vmem:[%s1130 + $0x1c] sm:$0xf]
    %v1271 = vunpack.c.l.bf16 %v1269
    %v1272 = vunpack.c.l.bf16 %v1270
    %1273 = vmatpush.bf16.msra.mxu0 %v664
    %1274 = vmatpush.bf16.msra.mxu0 %v663
    %1275 = vmatpush.bf16.msra.mxu0 %v662
    %1276 = vmatpush.bf16.msra.mxu0 %v661
    %1277 = vmatpush.bf16.msra.mxu0 %v660
    %1278 = vmatpush.bf16.msra.mxu0 %v659
    %1279 = vmatpush.bf16.msra.mxu0 %v658
    %1280 = vmatpush.bf16.msra.mxu0 %v657
    %1281 = vmatmul.bf16.gmra.mxu0 %v1129
    %v1282 = vpop.f32.mrf.mxu0
    %v1283 = vadd.f32 %v1271, %v1282
    %v1284 = vpop.f32.mrf.mxu0
    %v1285 = vadd.f32 %v1272, %v1284
    %1286 = vdwg.mxu0
    %v1287 = vxor.u32 %v1283, 2147483648
    %v1288 = vxor.u32 %v1285, 2147483648
    %v1289 = vmul.f32 %v1287, 1.442695
    %v1290 = vpow.pop %v1289
    %v1291 = vmul.f32 %v1288, 1.442695
    %v1292 = vpow.pop %v1291
    %v1293 = vadd.f32 %v1290, 1.0
    %v1294 = vadd.f32 %v1292, 1.0
    %v1295 = vrcp.pop %v1293
    %v1296 = vmul.f32 %v1293, %v1295
    %v1297 = vsub.f32 1.0, %v1296
    %v1298 = vmul.f32 %v1295, %v1297
    %v1299 = vadd.f32 %v1295, %v1298
    %vm1300 = vweird.f32 %v1293
    %vm1301 = vweird.f32 %v1295
    %vm1302 = vmor %vm1300, %vm1301
    %v1303 = vsel %vm1302, %v1295, %v1299
    %v1304 = vand.u32 2147483647, %v1293
    %vm1305 = vcmp.eq.f32.partialorder %v1304, 8.507059e+37
    %v1306 = vand.u32 %v1293, 2147483648
    %v1307 = vor.u32 1.1754944e-38, %v1306
    %v1308 = vsel %vm1305, %v1307, %v1303
    %v1309 = vmul.f32 1.0, %v1308
    %v1310 = vrcp.pop %v1294
    %v1311 = vmul.f32 %v1294, %v1310
    %v1312 = vsub.f32 1.0, %v1311
    %v1313 = vmul.f32 %v1310, %v1312
    %v1314 = vadd.f32 %v1310, %v1313
    %vm1315 = vweird.f32 %v1294
    %vm1316 = vweird.f32 %v1310
    %vm1317 = vmor %vm1315, %vm1316
    %v1318 = vsel %vm1317, %v1310, %v1314
    %v1319 = vand.u32 2147483647, %v1294
    %vm1320 = vcmp.eq.f32.partialorder %v1319, 8.507059e+37
    %v1321 = vand.u32 %v1294, 2147483648
    %v1322 = vor.u32 1.1754944e-38, %v1321
    %v1323 = vsel %vm1320, %v1322, %v1318
    %v1324 = vmul.f32 1.0, %v1323
    %v1325 = vtanh.pop %v1267
    %v1326 = vtanh.pop %v1268
    %v1327 = vmul.f32 %v1309, %v1325
    %v1328 = vmul.f32 %v1324, %v1326
    %v1329 = vpack.c.bf16 %v1328, %v1327
    %s1330 = scalar_lea.vmem [#allocation2], 128
    %v1331 = vld [vmem:[%s1330] sm:$0xf]
    %v1332 = vld [vmem:[%s1330 + $0x10] sm:$0xf]
    %v1333 = vunpack.c.l.bf16 %v1331
    %v1334 = vunpack.c.l.bf16 %v1332
    %1335 = vmatpush.bf16.msra.mxu0 %v334
    %1336 = vmatpush.bf16.msra.mxu0 %v333
    %1337 = vmatpush.bf16.msra.mxu0 %v332
    %1338 = vmatpush.bf16.msra.mxu0 %v331
    %1339 = vmatpush.bf16.msra.mxu0 %v330
    %1340 = vmatpush.bf16.msra.mxu0 %v329
    %1341 = vmatpush.bf16.msra.mxu0 %v328
    %1342 = vmatpush.bf16.msra.mxu0 %v327
    %1343 = vmatmul.bf16.gmra.mxu0 %v1329
    %v1344 = vpop.f32.mrf.mxu0
    %v1345 = vadd.f32 %v1333, %v1344
    %v1346 = vpop.f32.mrf.mxu0
    %v1347 = vadd.f32 %v1334, %v1346
    %1348 = vdwg.mxu0
    %v1349 = vxor.u32 %v1345, 2147483648
    %v1350 = vxor.u32 %v1347, 2147483648
    %v1351 = vmul.f32 %v1349, 1.442695
    %v1352 = vpow.pop %v1351
    %v1353 = vmul.f32 %v1350, 1.442695
    %v1354 = vpow.pop %v1353
    %v1355 = vadd.f32 %v1352, 1.0
    %v1356 = vadd.f32 %v1354, 1.0
    %v1357 = vrcp.pop %v1355
    %v1358 = vmul.f32 %v1355, %v1357
    %v1359 = vsub.f32 1.0, %v1358
    %v1360 = vmul.f32 %v1357, %v1359
    %v1361 = vadd.f32 %v1357, %v1360
    %vm1362 = vweird.f32 %v1355
    %vm1363 = vweird.f32 %v1357
    %vm1364 = vmor %vm1362, %vm1363
    %v1365 = vsel %vm1364, %v1357, %v1361
    %v1366 = vand.u32 2147483647, %v1355
    %vm1367 = vcmp.eq.f32.partialorder %v1366, 8.507059e+37
    %v1368 = vand.u32 %v1355, 2147483648
    %v1369 = vor.u32 1.1754944e-38, %v1368
    %v1370 = vsel %vm1367, %v1369, %v1365
    %v1371 = vmul.f32 1.0, %v1370
    %v1372 = vrcp.pop %v1356
    %v1373 = vmul.f32 %v1356, %v1372
    %v1374 = vsub.f32 1.0, %v1373
    %v1375 = vmul.f32 %v1372, %v1374
    %v1376 = vadd.f32 %v1372, %v1375
    %vm1377 = vweird.f32 %v1356
    %vm1378 = vweird.f32 %v1372
    %vm1379 = vmor %vm1377, %vm1378
    %v1380 = vsel %vm1379, %v1372, %v1376
    %v1381 = vand.u32 2147483647, %v1356
    %vm1382 = vcmp.eq.f32.partialorder %v1381, 8.507059e+37
    %v1383 = vand.u32 %v1356, 2147483648
    %v1384 = vor.u32 1.1754944e-38, %v1383
    %v1385 = vsel %vm1382, %v1384, %v1380
    %v1386 = vmul.f32 1.0, %v1385
    %v1387 = vld [vmem:[%s1330 + $0x8] sm:$0xf]
    %v1388 = vld [vmem:[%s1330 + $0x18] sm:$0xf]
    %v1389 = vunpack.c.l.bf16 %v1387
    %v1390 = vunpack.c.l.bf16 %v1388
    %1391 = vmatpush.bf16.msra.mxu0 %v454
    %1392 = vmatpush.bf16.msra.mxu0 %v453
    %1393 = vmatpush.bf16.msra.mxu0 %v452
    %1394 = vmatpush.bf16.msra.mxu0 %v451
    %1395 = vmatpush.bf16.msra.mxu0 %v450
    %1396 = vmatpush.bf16.msra.mxu0 %v449
    %1397 = vmatpush.bf16.msra.mxu0 %v448
    %1398 = vmatpush.bf16.msra.mxu0 %v447
    %1399 = vmatmul.bf16.gmra.mxu0 %v1329
    %v1400 = vpop.f32.mrf.mxu0
    %v1401 = vadd.f32 %v1389, %v1400
    %v1402 = vpop.f32.mrf.mxu0
    %v1403 = vadd.f32 %v1390, %v1402
    %1404 = vdwg.mxu0
    %v1405 = vtanh.pop %v1401
    %v1406 = vtanh.pop %v1403
    %v1407 = vmul.f32 %v1371, %v1405
    %v1408 = vmul.f32 %v1386, %v1406
    %v1409 = vld [vmem:[%s1330 + $0x4] sm:$0xf]
    %v1410 = vld [vmem:[%s1330 + $0x14] sm:$0xf]
    %v1411 = vunpack.c.l.bf16 %v1409
    %v1412 = vunpack.c.l.bf16 %v1410
    %1413 = vmatpush.bf16.msra.mxu0 %v540
    %1414 = vmatpush.bf16.msra.mxu0 %v539
    %1415 = vmatpush.bf16.msra.mxu0 %v538
    %1416 = vmatpush.bf16.msra.mxu0 %v537
    %1417 = vmatpush.bf16.msra.mxu0 %v536
    %1418 = vmatpush.bf16.msra.mxu0 %v535
    %1419 = vmatpush.bf16.msra.mxu0 %v534
    %1420 = vmatpush.bf16.msra.mxu0 %v533
    %1421 = vmatmul.bf16.gmra.mxu0 %v1329
    %v1422 = vpop.f32.mrf.mxu0
    %v1423 = vadd.f32 %v1411, %v1422
    %v1424 = vpop.f32.mrf.mxu0
    %v1425 = vadd.f32 %v1412, %v1424
    %1426 = vdwg.mxu0
    %v1427 = vxor.u32 %v1423, 2147483648
    %v1428 = vxor.u32 %v1425, 2147483648
    %v1429 = vmul.f32 %v1427, 1.442695
    %v1430 = vpow.pop %v1429
    %v1431 = vmul.f32 %v1428, 1.442695
    %v1432 = vpow.pop %v1431
    %v1433 = vadd.f32 %v1430, 1.0
    %v1434 = vadd.f32 %v1432, 1.0
    %v1435 = vrcp.pop %v1433
    %v1436 = vmul.f32 %v1433, %v1435
    %v1437 = vsub.f32 1.0, %v1436
    %v1438 = vmul.f32 %v1435, %v1437
    %v1439 = vadd.f32 %v1435, %v1438
    %vm1440 = vweird.f32 %v1433
    %vm1441 = vweird.f32 %v1435
    %vm1442 = vmor %vm1440, %vm1441
    %v1443 = vsel %vm1442, %v1435, %v1439
    %v1444 = vand.u32 2147483647, %v1433
    %vm1445 = vcmp.eq.f32.partialorder %v1444, 8.507059e+37
    %v1446 = vand.u32 %v1433, 2147483648
    %v1447 = vor.u32 1.1754944e-38, %v1446
    %v1448 = vsel %vm1445, %v1447, %v1443
    %v1449 = vmul.f32 1.0, %v1448
    %v1450 = vrcp.pop %v1434
    %v1451 = vmul.f32 %v1434, %v1450
    %v1452 = vsub.f32 1.0, %v1451
    %v1453 = vmul.f32 %v1450, %v1452
    %v1454 = vadd.f32 %v1450, %v1453
    %vm1455 = vweird.f32 %v1434
    %vm1456 = vweird.f32 %v1450
    %vm1457 = vmor %vm1455, %vm1456
    %v1458 = vsel %vm1457, %v1450, %v1454
    %v1459 = vand.u32 2147483647, %v1434
    %vm1460 = vcmp.eq.f32.partialorder %v1459, 8.507059e+37
    %v1461 = vand.u32 %v1434, 2147483648
    %v1462 = vor.u32 1.1754944e-38, %v1461
    %v1463 = vsel %vm1460, %v1462, %v1458
    %v1464 = vmul.f32 1.0, %v1463
    %v1465 = vmul.f32 %v1449, %v1267
    %v1466 = vmul.f32 %v1464, %v1268
    %v1467 = vadd.f32 %v1407, %v1465
    %v1468 = vadd.f32 %v1408, %v1466
    %v1469 = vld [vmem:[%s1330 + $0xc] sm:$0xf]
    %v1470 = vld [vmem:[%s1330 + $0x1c] sm:$0xf]
    %v1471 = vunpack.c.l.bf16 %v1469
    %v1472 = vunpack.c.l.bf16 %v1470
    %1473 = vmatpush.bf16.msra.mxu0 %v664
    %1474 = vmatpush.bf16.msra.mxu0 %v663
    %1475 = vmatpush.bf16.msra.mxu0 %v662
    %1476 = vmatpush.bf16.msra.mxu0 %v661
    %1477 = vmatpush.bf16.msra.mxu0 %v660
    %1478 = vmatpush.bf16.msra.mxu0 %v659
    %1479 = vmatpush.bf16.msra.mxu0 %v658
    %1480 = vmatpush.bf16.msra.mxu0 %v657
    %1481 = vmatmul.bf16.gmra.mxu0 %v1329
    %v1482 = vpop.f32.mrf.mxu0
    %v1483 = vadd.f32 %v1471, %v1482
    %v1484 = vpop.f32.mrf.mxu0
    %v1485 = vadd.f32 %v1472, %v1484
    %1486 = vdwg.mxu0
    %v1487 = vxor.u32 %v1483, 2147483648
    %v1488 = vxor.u32 %v1485, 2147483648
    %v1489 = vmul.f32 %v1487, 1.442695
    %v1490 = vpow.pop %v1489
    %v1491 = vmul.f32 %v1488, 1.442695
    %v1492 = vpow.pop %v1491
    %v1493 = vadd.f32 %v1490, 1.0
    %v1494 = vadd.f32 %v1492, 1.0
    %v1495 = vrcp.pop %v1493
    %v1496 = vmul.f32 %v1493, %v1495
    %v1497 = vsub.f32 1.0, %v1496
    %v1498 = vmul.f32 %v1495, %v1497
    %v1499 = vadd.f32 %v1495, %v1498
    %vm1500 = vweird.f32 %v1493
    %vm1501 = vweird.f32 %v1495
    %vm1502 = vmor %vm1500, %vm1501
    %v1503 = vsel %vm1502, %v1495, %v1499
    %v1504 = vand.u32 2147483647, %v1493
    %vm1505 = vcmp.eq.f32.partialorder %v1504, 8.507059e+37
    %v1506 = vand.u32 %v1493, 2147483648
    %v1507 = vor.u32 1.1754944e-38, %v1506
    %v1508 = vsel %vm1505, %v1507, %v1503
    %v1509 = vmul.f32 1.0, %v1508
    %v1510 = vrcp.pop %v1494
    %v1511 = vmul.f32 %v1494, %v1510
    %v1512 = vsub.f32 1.0, %v1511
    %v1513 = vmul.f32 %v1510, %v1512
    %v1514 = vadd.f32 %v1510, %v1513
    %vm1515 = vweird.f32 %v1494
    %vm1516 = vweird.f32 %v1510
    %vm1517 = vmor %vm1515, %vm1516
    %v1518 = vsel %vm1517, %v1510, %v1514
    %v1519 = vand.u32 2147483647, %v1494
    %vm1520 = vcmp.eq.f32.partialorder %v1519, 8.507059e+37
    %v1521 = vand.u32 %v1494, 2147483648
    %v1522 = vor.u32 1.1754944e-38, %v1521
    %v1523 = vsel %vm1520, %v1522, %v1518
    %v1524 = vmul.f32 1.0, %v1523
    %v1525 = vtanh.pop %v1467
    %v1526 = vtanh.pop %v1468
    %v1527 = vmul.f32 %v1509, %v1525
    %v1528 = vmul.f32 %v1524, %v1526
    %v1529 = vpack.c.bf16 %v1528, %v1527
    %s1530 = scalar_lea.vmem [#allocation2], 160
    %v1531 = vld [vmem:[%s1530] sm:$0xf]
    %v1532 = vld [vmem:[%s1530 + $0x10] sm:$0xf]
    %v1533 = vunpack.c.l.bf16 %v1531
    %v1534 = vunpack.c.l.bf16 %v1532
    %1535 = vmatpush.bf16.msra.mxu0 %v334
    %1536 = vmatpush.bf16.msra.mxu0 %v333
    %1537 = vmatpush.bf16.msra.mxu0 %v332
    %1538 = vmatpush.bf16.msra.mxu0 %v331
    %1539 = vmatpush.bf16.msra.mxu0 %v330
    %1540 = vmatpush.bf16.msra.mxu0 %v329
    %1541 = vmatpush.bf16.msra.mxu0 %v328
    %1542 = vmatpush.bf16.msra.mxu0 %v327
    %1543 = vmatmul.bf16.gmra.mxu0 %v1529
    %v1544 = vpop.f32.mrf.mxu0
    %v1545 = vadd.f32 %v1533, %v1544
    %v1546 = vpop.f32.mrf.mxu0
    %v1547 = vadd.f32 %v1534, %v1546
    %1548 = vdwg.mxu0
    %v1549 = vxor.u32 %v1545, 2147483648
    %v1550 = vxor.u32 %v1547, 2147483648
    %v1551 = vmul.f32 %v1549, 1.442695
    %v1552 = vpow.pop %v1551
    %v1553 = vmul.f32 %v1550, 1.442695
    %v1554 = vpow.pop %v1553
    %v1555 = vadd.f32 %v1552, 1.0
    %v1556 = vadd.f32 %v1554, 1.0
    %v1557 = vrcp.pop %v1555
    %v1558 = vmul.f32 %v1555, %v1557
    %v1559 = vsub.f32 1.0, %v1558
    %v1560 = vmul.f32 %v1557, %v1559
    %v1561 = vadd.f32 %v1557, %v1560
    %vm1562 = vweird.f32 %v1555
    %vm1563 = vweird.f32 %v1557
    %vm1564 = vmor %vm1562, %vm1563
    %v1565 = vsel %vm1564, %v1557, %v1561
    %v1566 = vand.u32 2147483647, %v1555
    %vm1567 = vcmp.eq.f32.partialorder %v1566, 8.507059e+37
    %v1568 = vand.u32 %v1555, 2147483648
    %v1569 = vor.u32 1.1754944e-38, %v1568
    %v1570 = vsel %vm1567, %v1569, %v1565
    %v1571 = vmul.f32 1.0, %v1570
    %v1572 = vrcp.pop %v1556
    %v1573 = vmul.f32 %v1556, %v1572
    %v1574 = vsub.f32 1.0, %v1573
    %v1575 = vmul.f32 %v1572, %v1574
    %v1576 = vadd.f32 %v1572, %v1575
    %vm1577 = vweird.f32 %v1556
    %vm1578 = vweird.f32 %v1572
    %vm1579 = vmor %vm1577, %vm1578
    %v1580 = vsel %vm1579, %v1572, %v1576
    %v1581 = vand.u32 2147483647, %v1556
    %vm1582 = vcmp.eq.f32.partialorder %v1581, 8.507059e+37
    %v1583 = vand.u32 %v1556, 2147483648
    %v1584 = vor.u32 1.1754944e-38, %v1583
    %v1585 = vsel %vm1582, %v1584, %v1580
    %v1586 = vmul.f32 1.0, %v1585
    %v1587 = vld [vmem:[%s1530 + $0x8] sm:$0xf]
    %v1588 = vld [vmem:[%s1530 + $0x18] sm:$0xf]
    %v1589 = vunpack.c.l.bf16 %v1587
    %v1590 = vunpack.c.l.bf16 %v1588
    %1591 = vmatpush.bf16.msra.mxu0 %v454
    %1592 = vmatpush.bf16.msra.mxu0 %v453
    %1593 = vmatpush.bf16.msra.mxu0 %v452
    %1594 = vmatpush.bf16.msra.mxu0 %v451
    %1595 = vmatpush.bf16.msra.mxu0 %v450
    %1596 = vmatpush.bf16.msra.mxu0 %v449
    %1597 = vmatpush.bf16.msra.mxu0 %v448
    %1598 = vmatpush.bf16.msra.mxu0 %v447
    %1599 = vmatmul.bf16.gmra.mxu0 %v1529
    %v1600 = vpop.f32.mrf.mxu0
    %v1601 = vadd.f32 %v1589, %v1600
    %v1602 = vpop.f32.mrf.mxu0
    %v1603 = vadd.f32 %v1590, %v1602
    %1604 = vdwg.mxu0
    %v1605 = vtanh.pop %v1601
    %v1606 = vtanh.pop %v1603
    %v1607 = vmul.f32 %v1571, %v1605
    %v1608 = vmul.f32 %v1586, %v1606
    %v1609 = vld [vmem:[%s1530 + $0x4] sm:$0xf]
    %v1610 = vld [vmem:[%s1530 + $0x14] sm:$0xf]
    %v1611 = vunpack.c.l.bf16 %v1609
    %v1612 = vunpack.c.l.bf16 %v1610
    %1613 = vmatpush.bf16.msra.mxu0 %v540
    %1614 = vmatpush.bf16.msra.mxu0 %v539
    %1615 = vmatpush.bf16.msra.mxu0 %v538
    %1616 = vmatpush.bf16.msra.mxu0 %v537
    %1617 = vmatpush.bf16.msra.mxu0 %v536
    %1618 = vmatpush.bf16.msra.mxu0 %v535
    %1619 = vmatpush.bf16.msra.mxu0 %v534
    %1620 = vmatpush.bf16.msra.mxu0 %v533
    %1621 = vmatmul.bf16.gmra.mxu0 %v1529
    %v1622 = vpop.f32.mrf.mxu0
    %v1623 = vadd.f32 %v1611, %v1622
    %v1624 = vpop.f32.mrf.mxu0
    %v1625 = vadd.f32 %v1612, %v1624
    %1626 = vdwg.mxu0
    %v1627 = vxor.u32 %v1623, 2147483648
    %v1628 = vxor.u32 %v1625, 2147483648
    %v1629 = vmul.f32 %v1627, 1.442695
    %v1630 = vpow.pop %v1629
    %v1631 = vmul.f32 %v1628, 1.442695
    %v1632 = vpow.pop %v1631
    %v1633 = vadd.f32 %v1630, 1.0
    %v1634 = vadd.f32 %v1632, 1.0
    %v1635 = vrcp.pop %v1633
    %v1636 = vmul.f32 %v1633, %v1635
    %v1637 = vsub.f32 1.0, %v1636
    %v1638 = vmul.f32 %v1635, %v1637
    %v1639 = vadd.f32 %v1635, %v1638
    %vm1640 = vweird.f32 %v1633
    %vm1641 = vweird.f32 %v1635
    %vm1642 = vmor %vm1640, %vm1641
    %v1643 = vsel %vm1642, %v1635, %v1639
    %v1644 = vand.u32 2147483647, %v1633
    %vm1645 = vcmp.eq.f32.partialorder %v1644, 8.507059e+37
    %v1646 = vand.u32 %v1633, 2147483648
    %v1647 = vor.u32 1.1754944e-38, %v1646
    %v1648 = vsel %vm1645, %v1647, %v1643
    %v1649 = vmul.f32 1.0, %v1648
    %v1650 = vrcp.pop %v1634
    %v1651 = vmul.f32 %v1634, %v1650
    %v1652 = vsub.f32 1.0, %v1651
    %v1653 = vmul.f32 %v1650, %v1652
    %v1654 = vadd.f32 %v1650, %v1653
    %vm1655 = vweird.f32 %v1634
    %vm1656 = vweird.f32 %v1650
    %vm1657 = vmor %vm1655, %vm1656
    %v1658 = vsel %vm1657, %v1650, %v1654
    %v1659 = vand.u32 2147483647, %v1634
    %vm1660 = vcmp.eq.f32.partialorder %v1659, 8.507059e+37
    %v1661 = vand.u32 %v1634, 2147483648
    %v1662 = vor.u32 1.1754944e-38, %v1661
    %v1663 = vsel %vm1660, %v1662, %v1658
    %v1664 = vmul.f32 1.0, %v1663
    %v1665 = vmul.f32 %v1649, %v1467
    %v1666 = vmul.f32 %v1664, %v1468
    %v1667 = vadd.f32 %v1607, %v1665
    %v1668 = vadd.f32 %v1608, %v1666
    %v1669 = vld [vmem:[%s1530 + $0xc] sm:$0xf]
    %v1670 = vld [vmem:[%s1530 + $0x1c] sm:$0xf]
    %v1671 = vunpack.c.l.bf16 %v1669
    %v1672 = vunpack.c.l.bf16 %v1670
    %1673 = vmatpush.bf16.msra.mxu0 %v664
    %1674 = vmatpush.bf16.msra.mxu0 %v663
    %1675 = vmatpush.bf16.msra.mxu0 %v662
    %1676 = vmatpush.bf16.msra.mxu0 %v661
    %1677 = vmatpush.bf16.msra.mxu0 %v660
    %1678 = vmatpush.bf16.msra.mxu0 %v659
    %1679 = vmatpush.bf16.msra.mxu0 %v658
    %1680 = vmatpush.bf16.msra.mxu0 %v657
    %1681 = vmatmul.bf16.gmra.mxu0 %v1529
    %v1682 = vpop.f32.mrf.mxu0
    %v1683 = vadd.f32 %v1671, %v1682
    %v1684 = vpop.f32.mrf.mxu0
    %v1685 = vadd.f32 %v1672, %v1684
    %1686 = vdwg.mxu0
    %v1687 = vxor.u32 %v1683, 2147483648
    %v1688 = vxor.u32 %v1685, 2147483648
    %v1689 = vmul.f32 %v1687, 1.442695
    %v1690 = vpow.pop %v1689
    %v1691 = vmul.f32 %v1688, 1.442695
    %v1692 = vpow.pop %v1691
    %v1693 = vadd.f32 %v1690, 1.0
    %v1694 = vadd.f32 %v1692, 1.0
    %v1695 = vrcp.pop %v1693
    %v1696 = vmul.f32 %v1693, %v1695
    %v1697 = vsub.f32 1.0, %v1696
    %v1698 = vmul.f32 %v1695, %v1697
    %v1699 = vadd.f32 %v1695, %v1698
    %vm1700 = vweird.f32 %v1693
    %vm1701 = vweird.f32 %v1695
    %vm1702 = vmor %vm1700, %vm1701
    %v1703 = vsel %vm1702, %v1695, %v1699
    %v1704 = vand.u32 2147483647, %v1693
    %vm1705 = vcmp.eq.f32.partialorder %v1704, 8.507059e+37
    %v1706 = vand.u32 %v1693, 2147483648
    %v1707 = vor.u32 1.1754944e-38, %v1706
    %v1708 = vsel %vm1705, %v1707, %v1703
    %v1709 = vmul.f32 1.0, %v1708
    %v1710 = vrcp.pop %v1694
    %v1711 = vmul.f32 %v1694, %v1710
    %v1712 = vsub.f32 1.0, %v1711
    %v1713 = vmul.f32 %v1710, %v1712
    %v1714 = vadd.f32 %v1710, %v1713
    %vm1715 = vweird.f32 %v1694
    %vm1716 = vweird.f32 %v1710
    %vm1717 = vmor %vm1715, %vm1716
    %v1718 = vsel %vm1717, %v1710, %v1714
    %v1719 = vand.u32 2147483647, %v1694
    %vm1720 = vcmp.eq.f32.partialorder %v1719, 8.507059e+37
    %v1721 = vand.u32 %v1694, 2147483648
    %v1722 = vor.u32 1.1754944e-38, %v1721
    %v1723 = vsel %vm1720, %v1722, %v1718
    %v1724 = vmul.f32 1.0, %v1723
    %v1725 = vtanh.pop %v1667
    %v1726 = vtanh.pop %v1668
    %v1727 = vmul.f32 %v1709, %v1725
    %v1728 = vmul.f32 %v1724, %v1726
    %v1729 = vpack.c.bf16 %v1728, %v1727
    %s1730 = scalar_lea.vmem [#allocation2], 192
    %v1731 = vld [vmem:[%s1730] sm:$0xf]
    %v1732 = vld [vmem:[%s1730 + $0x10] sm:$0xf]
    %v1733 = vunpack.c.l.bf16 %v1731
    %v1734 = vunpack.c.l.bf16 %v1732
    %1735 = vmatpush.bf16.msra.mxu0 %v334
    %1736 = vmatpush.bf16.msra.mxu0 %v333
    %1737 = vmatpush.bf16.msra.mxu0 %v332
    %1738 = vmatpush.bf16.msra.mxu0 %v331
    %1739 = vmatpush.bf16.msra.mxu0 %v330
    %1740 = vmatpush.bf16.msra.mxu0 %v329
    %1741 = vmatpush.bf16.msra.mxu0 %v328
    %1742 = vmatpush.bf16.msra.mxu0 %v327
    %1743 = vmatmul.bf16.gmra.mxu0 %v1729
    %v1744 = vpop.f32.mrf.mxu0
    %v1745 = vadd.f32 %v1733, %v1744
    %v1746 = vpop.f32.mrf.mxu0
    %v1747 = vadd.f32 %v1734, %v1746
    %1748 = vdwg.mxu0
    %v1749 = vxor.u32 %v1745, 2147483648
    %v1750 = vxor.u32 %v1747, 2147483648
    %v1751 = vmul.f32 %v1749, 1.442695
    %v1752 = vpow.pop %v1751
    %v1753 = vmul.f32 %v1750, 1.442695
    %v1754 = vpow.pop %v1753
    %v1755 = vadd.f32 %v1752, 1.0
    %v1756 = vadd.f32 %v1754, 1.0
    %v1757 = vrcp.pop %v1755
    %v1758 = vmul.f32 %v1755, %v1757
    %v1759 = vsub.f32 1.0, %v1758
    %v1760 = vmul.f32 %v1757, %v1759
    %v1761 = vadd.f32 %v1757, %v1760
    %vm1762 = vweird.f32 %v1755
    %vm1763 = vweird.f32 %v1757
    %vm1764 = vmor %vm1762, %vm1763
    %v1765 = vsel %vm1764, %v1757, %v1761
    %v1766 = vand.u32 2147483647, %v1755
    %vm1767 = vcmp.eq.f32.partialorder %v1766, 8.507059e+37
    %v1768 = vand.u32 %v1755, 2147483648
    %v1769 = vor.u32 1.1754944e-38, %v1768
    %v1770 = vsel %vm1767, %v1769, %v1765
    %v1771 = vmul.f32 1.0, %v1770
    %v1772 = vrcp.pop %v1756
    %v1773 = vmul.f32 %v1756, %v1772
    %v1774 = vsub.f32 1.0, %v1773
    %v1775 = vmul.f32 %v1772, %v1774
    %v1776 = vadd.f32 %v1772, %v1775
    %vm1777 = vweird.f32 %v1756
    %vm1778 = vweird.f32 %v1772
    %vm1779 = vmor %vm1777, %vm1778
    %v1780 = vsel %vm1779, %v1772, %v1776
    %v1781 = vand.u32 2147483647, %v1756
    %vm1782 = vcmp.eq.f32.partialorder %v1781, 8.507059e+37
    %v1783 = vand.u32 %v1756, 2147483648
    %v1784 = vor.u32 1.1754944e-38, %v1783
    %v1785 = vsel %vm1782, %v1784, %v1780
    %v1786 = vmul.f32 1.0, %v1785
    %v1787 = vld [vmem:[%s1730 + $0x8] sm:$0xf]
    %v1788 = vld [vmem:[%s1730 + $0x18] sm:$0xf]
    %v1789 = vunpack.c.l.bf16 %v1787
    %v1790 = vunpack.c.l.bf16 %v1788
    %1791 = vmatpush.bf16.msra.mxu0 %v454
    %1792 = vmatpush.bf16.msra.mxu0 %v453
    %1793 = vmatpush.bf16.msra.mxu0 %v452
    %1794 = vmatpush.bf16.msra.mxu0 %v451
    %1795 = vmatpush.bf16.msra.mxu0 %v450
    %1796 = vmatpush.bf16.msra.mxu0 %v449
    %1797 = vmatpush.bf16.msra.mxu0 %v448
    %1798 = vmatpush.bf16.msra.mxu0 %v447
    %1799 = vmatmul.bf16.gmra.mxu0 %v1729
    %v1800 = vpop.f32.mrf.mxu0
    %v1801 = vadd.f32 %v1789, %v1800
    %v1802 = vpop.f32.mrf.mxu0
    %v1803 = vadd.f32 %v1790, %v1802
    %1804 = vdwg.mxu0
    %v1805 = vtanh.pop %v1801
    %v1806 = vtanh.pop %v1803
    %v1807 = vmul.f32 %v1771, %v1805
    %v1808 = vmul.f32 %v1786, %v1806
    %v1809 = vld [vmem:[%s1730 + $0x4] sm:$0xf]
    %v1810 = vld [vmem:[%s1730 + $0x14] sm:$0xf]
    %v1811 = vunpack.c.l.bf16 %v1809
    %v1812 = vunpack.c.l.bf16 %v1810
    %1813 = vmatpush.bf16.msra.mxu0 %v540
    %1814 = vmatpush.bf16.msra.mxu0 %v539
    %1815 = vmatpush.bf16.msra.mxu0 %v538
    %1816 = vmatpush.bf16.msra.mxu0 %v537
    %1817 = vmatpush.bf16.msra.mxu0 %v536
    %1818 = vmatpush.bf16.msra.mxu0 %v535
    %1819 = vmatpush.bf16.msra.mxu0 %v534
    %1820 = vmatpush.bf16.msra.mxu0 %v533
    %1821 = vmatmul.bf16.gmra.mxu0 %v1729
    %v1822 = vpop.f32.mrf.mxu0
    %v1823 = vadd.f32 %v1811, %v1822
    %v1824 = vpop.f32.mrf.mxu0
    %v1825 = vadd.f32 %v1812, %v1824
    %1826 = vdwg.mxu0
    %v1827 = vxor.u32 %v1823, 2147483648
    %v1828 = vxor.u32 %v1825, 2147483648
    %v1829 = vmul.f32 %v1827, 1.442695
    %v1830 = vpow.pop %v1829
    %v1831 = vmul.f32 %v1828, 1.442695
    %v1832 = vpow.pop %v1831
    %v1833 = vadd.f32 %v1830, 1.0
    %v1834 = vadd.f32 %v1832, 1.0
    %v1835 = vrcp.pop %v1833
    %v1836 = vmul.f32 %v1833, %v1835
    %v1837 = vsub.f32 1.0, %v1836
    %v1838 = vmul.f32 %v1835, %v1837
    %v1839 = vadd.f32 %v1835, %v1838
    %vm1840 = vweird.f32 %v1833
    %vm1841 = vweird.f32 %v1835
    %vm1842 = vmor %vm1840, %vm1841
    %v1843 = vsel %vm1842, %v1835, %v1839
    %v1844 = vand.u32 2147483647, %v1833
    %vm1845 = vcmp.eq.f32.partialorder %v1844, 8.507059e+37
    %v1846 = vand.u32 %v1833, 2147483648
    %v1847 = vor.u32 1.1754944e-38, %v1846
    %v1848 = vsel %vm1845, %v1847, %v1843
    %v1849 = vmul.f32 1.0, %v1848
    %v1850 = vrcp.pop %v1834
    %v1851 = vmul.f32 %v1834, %v1850
    %v1852 = vsub.f32 1.0, %v1851
    %v1853 = vmul.f32 %v1850, %v1852
    %v1854 = vadd.f32 %v1850, %v1853
    %vm1855 = vweird.f32 %v1834
    %vm1856 = vweird.f32 %v1850
    %vm1857 = vmor %vm1855, %vm1856
    %v1858 = vsel %vm1857, %v1850, %v1854
    %v1859 = vand.u32 2147483647, %v1834
    %vm1860 = vcmp.eq.f32.partialorder %v1859, 8.507059e+37
    %v1861 = vand.u32 %v1834, 2147483648
    %v1862 = vor.u32 1.1754944e-38, %v1861
    %v1863 = vsel %vm1860, %v1862, %v1858
    %v1864 = vmul.f32 1.0, %v1863
    %v1865 = vmul.f32 %v1849, %v1667
    %v1866 = vmul.f32 %v1864, %v1668
    %v1867 = vadd.f32 %v1807, %v1865
    %v1868 = vadd.f32 %v1808, %v1866
    %v1869 = vld [vmem:[%s1730 + $0xc] sm:$0xf]
    %v1870 = vld [vmem:[%s1730 + $0x1c] sm:$0xf]
    %v1871 = vunpack.c.l.bf16 %v1869
    %v1872 = vunpack.c.l.bf16 %v1870
    %1873 = vmatpush.bf16.msra.mxu0 %v664
    %1874 = vmatpush.bf16.msra.mxu0 %v663
    %1875 = vmatpush.bf16.msra.mxu0 %v662
    %1876 = vmatpush.bf16.msra.mxu0 %v661
    %1877 = vmatpush.bf16.msra.mxu0 %v660
    %1878 = vmatpush.bf16.msra.mxu0 %v659
    %1879 = vmatpush.bf16.msra.mxu0 %v658
    %1880 = vmatpush.bf16.msra.mxu0 %v657
    %1881 = vmatmul.bf16.gmra.mxu0 %v1729
    %v1882 = vpop.f32.mrf.mxu0
    %v1883 = vadd.f32 %v1871, %v1882
    %v1884 = vpop.f32.mrf.mxu0
    %v1885 = vadd.f32 %v1872, %v1884
    %1886 = vdwg.mxu0
    %v1887 = vxor.u32 %v1883, 2147483648
    %v1888 = vxor.u32 %v1885, 2147483648
    %v1889 = vmul.f32 %v1887, 1.442695
    %v1890 = vpow.pop %v1889
    %v1891 = vmul.f32 %v1888, 1.442695
    %v1892 = vpow.pop %v1891
    %v1893 = vadd.f32 %v1890, 1.0
    %v1894 = vadd.f32 %v1892, 1.0
    %v1895 = vrcp.pop %v1893
    %v1896 = vmul.f32 %v1893, %v1895
    %v1897 = vsub.f32 1.0, %v1896
    %v1898 = vmul.f32 %v1895, %v1897
    %v1899 = vadd.f32 %v1895, %v1898
    %vm1900 = vweird.f32 %v1893
    %vm1901 = vweird.f32 %v1895
    %vm1902 = vmor %vm1900, %vm1901
    %v1903 = vsel %vm1902, %v1895, %v1899
    %v1904 = vand.u32 2147483647, %v1893
    %vm1905 = vcmp.eq.f32.partialorder %v1904, 8.507059e+37
    %v1906 = vand.u32 %v1893, 2147483648
    %v1907 = vor.u32 1.1754944e-38, %v1906
    %v1908 = vsel %vm1905, %v1907, %v1903
    %v1909 = vmul.f32 1.0, %v1908
    %v1910 = vrcp.pop %v1894
    %v1911 = vmul.f32 %v1894, %v1910
    %v1912 = vsub.f32 1.0, %v1911
    %v1913 = vmul.f32 %v1910, %v1912
    %v1914 = vadd.f32 %v1910, %v1913
    %vm1915 = vweird.f32 %v1894
    %vm1916 = vweird.f32 %v1910
    %vm1917 = vmor %vm1915, %vm1916
    %v1918 = vsel %vm1917, %v1910, %v1914
    %v1919 = vand.u32 2147483647, %v1894
    %vm1920 = vcmp.eq.f32.partialorder %v1919, 8.507059e+37
    %v1921 = vand.u32 %v1894, 2147483648
    %v1922 = vor.u32 1.1754944e-38, %v1921
    %v1923 = vsel %vm1920, %v1922, %v1918
    %v1924 = vmul.f32 1.0, %v1923
    %v1925 = vtanh.pop %v1867
    %v1926 = vtanh.pop %v1868
    %v1927 = vmul.f32 %v1909, %v1925
    %v1928 = vmul.f32 %v1924, %v1926
    %v1929 = vpack.c.bf16 %v1928, %v1927
    %s1930 = scalar_lea.vmem [#allocation2], 224
    %v1931 = vld [vmem:[%s1930] sm:$0xf]
    %v1932 = vld [vmem:[%s1930 + $0x10] sm:$0xf]
    %v1933 = vunpack.c.l.bf16 %v1931
    %v1934 = vunpack.c.l.bf16 %v1932
    %1935 = vmatpush.bf16.msra.mxu0 %v334
    %1936 = vmatpush.bf16.msra.mxu0 %v333
    %1937 = vmatpush.bf16.msra.mxu0 %v332
    %1938 = vmatpush.bf16.msra.mxu0 %v331
    %1939 = vmatpush.bf16.msra.mxu0 %v330
    %1940 = vmatpush.bf16.msra.mxu0 %v329
    %1941 = vmatpush.bf16.msra.mxu0 %v328
    %1942 = vmatpush.bf16.msra.mxu0 %v327
    %1943 = vmatmul.bf16.gmra.mxu0 %v1929
    %v1944 = vpop.f32.mrf.mxu0
    %v1945 = vadd.f32 %v1933, %v1944
    %v1946 = vpop.f32.mrf.mxu0
    %v1947 = vadd.f32 %v1934, %v1946
    %1948 = vdwg.mxu0
    %v1949 = vxor.u32 %v1945, 2147483648
    %v1950 = vxor.u32 %v1947, 2147483648
    %v1951 = vmul.f32 %v1949, 1.442695
    %v1952 = vpow.pop %v1951
    %v1953 = vmul.f32 %v1950, 1.442695
    %v1954 = vpow.pop %v1953
    %v1955 = vadd.f32 %v1952, 1.0
    %v1956 = vadd.f32 %v1954, 1.0
    %v1957 = vrcp.pop %v1955
    %v1958 = vmul.f32 %v1955, %v1957
    %v1959 = vsub.f32 1.0, %v1958
    %v1960 = vmul.f32 %v1957, %v1959
    %v1961 = vadd.f32 %v1957, %v1960
    %vm1962 = vweird.f32 %v1955
    %vm1963 = vweird.f32 %v1957
    %vm1964 = vmor %vm1962, %vm1963
    %v1965 = vsel %vm1964, %v1957, %v1961
    %v1966 = vand.u32 2147483647, %v1955
    %vm1967 = vcmp.eq.f32.partialorder %v1966, 8.507059e+37
    %v1968 = vand.u32 %v1955, 2147483648
    %v1969 = vor.u32 1.1754944e-38, %v1968
    %v1970 = vsel %vm1967, %v1969, %v1965
    %v1971 = vmul.f32 1.0, %v1970
    %v1972 = vrcp.pop %v1956
    %v1973 = vmul.f32 %v1956, %v1972
    %v1974 = vsub.f32 1.0, %v1973
    %v1975 = vmul.f32 %v1972, %v1974
    %v1976 = vadd.f32 %v1972, %v1975
    %vm1977 = vweird.f32 %v1956
    %vm1978 = vweird.f32 %v1972
    %vm1979 = vmor %vm1977, %vm1978
    %v1980 = vsel %vm1979, %v1972, %v1976
    %v1981 = vand.u32 2147483647, %v1956
    %vm1982 = vcmp.eq.f32.partialorder %v1981, 8.507059e+37
    %v1983 = vand.u32 %v1956, 2147483648
    %v1984 = vor.u32 1.1754944e-38, %v1983
    %v1985 = vsel %vm1982, %v1984, %v1980
    %v1986 = vmul.f32 1.0, %v1985
    %v1987 = vld [vmem:[%s1930 + $0x8] sm:$0xf]
    %v1988 = vld [vmem:[%s1930 + $0x18] sm:$0xf]
    %v1989 = vunpack.c.l.bf16 %v1987
    %v1990 = vunpack.c.l.bf16 %v1988
    %1991 = vmatpush.bf16.msra.mxu0 %v454
    %1992 = vmatpush.bf16.msra.mxu0 %v453
    %1993 = vmatpush.bf16.msra.mxu0 %v452
    %1994 = vmatpush.bf16.msra.mxu0 %v451
    %1995 = vmatpush.bf16.msra.mxu0 %v450
    %1996 = vmatpush.bf16.msra.mxu0 %v449
    %1997 = vmatpush.bf16.msra.mxu0 %v448
    %1998 = vmatpush.bf16.msra.mxu0 %v447
    %1999 = vmatmul.bf16.gmra.mxu0 %v1929
    %v2000 = vpop.f32.mrf.mxu0
    %v2001 = vadd.f32 %v1989, %v2000
    %v2002 = vpop.f32.mrf.mxu0
    %v2003 = vadd.f32 %v1990, %v2002
    %2004 = vdwg.mxu0
    %v2005 = vtanh.pop %v2001
    %v2006 = vtanh.pop %v2003
    %v2007 = vmul.f32 %v1971, %v2005
    %v2008 = vmul.f32 %v1986, %v2006
    %v2009 = vld [vmem:[%s1930 + $0x4] sm:$0xf]
    %v2010 = vld [vmem:[%s1930 + $0x14] sm:$0xf]
    %v2011 = vunpack.c.l.bf16 %v2009
    %v2012 = vunpack.c.l.bf16 %v2010
    %2013 = vmatpush.bf16.msra.mxu0 %v540
    %2014 = vmatpush.bf16.msra.mxu0 %v539
    %2015 = vmatpush.bf16.msra.mxu0 %v538
    %2016 = vmatpush.bf16.msra.mxu0 %v537
    %2017 = vmatpush.bf16.msra.mxu0 %v536
    %2018 = vmatpush.bf16.msra.mxu0 %v535
    %2019 = vmatpush.bf16.msra.mxu0 %v534
    %2020 = vmatpush.bf16.msra.mxu0 %v533
    %2021 = vmatmul.bf16.gmra.mxu0 %v1929
    %v2022 = vpop.f32.mrf.mxu0
    %v2023 = vadd.f32 %v2011, %v2022
    %v2024 = vpop.f32.mrf.mxu0
    %v2025 = vadd.f32 %v2012, %v2024
    %2026 = vdwg.mxu0
    %v2027 = vxor.u32 %v2023, 2147483648
    %v2028 = vxor.u32 %v2025, 2147483648
    %v2029 = vmul.f32 %v2027, 1.442695
    %v2030 = vpow.pop %v2029
    %v2031 = vmul.f32 %v2028, 1.442695
    %v2032 = vpow.pop %v2031
    %v2033 = vadd.f32 %v2030, 1.0
    %v2034 = vadd.f32 %v2032, 1.0
    %v2035 = vrcp.pop %v2033
    %v2036 = vmul.f32 %v2033, %v2035
    %v2037 = vsub.f32 1.0, %v2036
    %v2038 = vmul.f32 %v2035, %v2037
    %v2039 = vadd.f32 %v2035, %v2038
    %vm2040 = vweird.f32 %v2033
    %vm2041 = vweird.f32 %v2035
    %vm2042 = vmor %vm2040, %vm2041
    %v2043 = vsel %vm2042, %v2035, %v2039
    %v2044 = vand.u32 2147483647, %v2033
    %vm2045 = vcmp.eq.f32.partialorder %v2044, 8.507059e+37
    %v2046 = vand.u32 %v2033, 2147483648
    %v2047 = vor.u32 1.1754944e-38, %v2046
    %v2048 = vsel %vm2045, %v2047, %v2043
    %v2049 = vmul.f32 1.0, %v2048
    %v2050 = vrcp.pop %v2034
    %v2051 = vmul.f32 %v2034, %v2050
    %v2052 = vsub.f32 1.0, %v2051
    %v2053 = vmul.f32 %v2050, %v2052
    %v2054 = vadd.f32 %v2050, %v2053
    %vm2055 = vweird.f32 %v2034
    %vm2056 = vweird.f32 %v2050
    %vm2057 = vmor %vm2055, %vm2056
    %v2058 = vsel %vm2057, %v2050, %v2054
    %v2059 = vand.u32 2147483647, %v2034
    %vm2060 = vcmp.eq.f32.partialorder %v2059, 8.507059e+37
    %v2061 = vand.u32 %v2034, 2147483648
    %v2062 = vor.u32 1.1754944e-38, %v2061
    %v2063 = vsel %vm2060, %v2062, %v2058
    %v2064 = vmul.f32 1.0, %v2063
    %v2065 = vmul.f32 %v2049, %v1867
    %v2066 = vmul.f32 %v2064, %v1868
    %v2067 = vadd.f32 %v2007, %v2065
    %v2068 = vadd.f32 %v2008, %v2066
    %v2069 = vld [vmem:[%s1930 + $0xc] sm:$0xf]
    %v2070 = vld [vmem:[%s1930 + $0x1c] sm:$0xf]
    %v2071 = vunpack.c.l.bf16 %v2069
    %v2072 = vunpack.c.l.bf16 %v2070
    %2073 = vmatpush.bf16.msra.mxu0 %v664
    %2074 = vmatpush.bf16.msra.mxu0 %v663
    %2075 = vmatpush.bf16.msra.mxu0 %v662
    %2076 = vmatpush.bf16.msra.mxu0 %v661
    %2077 = vmatpush.bf16.msra.mxu0 %v660
    %2078 = vmatpush.bf16.msra.mxu0 %v659
    %2079 = vmatpush.bf16.msra.mxu0 %v658
    %2080 = vmatpush.bf16.msra.mxu0 %v657
    %2081 = vmatmul.bf16.gmra.mxu0 %v1929
    %v2082 = vpop.f32.mrf.mxu0
    %v2083 = vadd.f32 %v2071, %v2082
    %v2084 = vpop.f32.mrf.mxu0
    %v2085 = vadd.f32 %v2072, %v2084
    %2086 = vdwg.mxu0
    %v2087 = vxor.u32 %v2083, 2147483648
    %v2088 = vxor.u32 %v2085, 2147483648
    %v2089 = vmul.f32 %v2087, 1.442695
    %v2090 = vpow.pop %v2089
    %v2091 = vmul.f32 %v2088, 1.442695
    %v2092 = vpow.pop %v2091
    %v2093 = vadd.f32 %v2090, 1.0
    %v2094 = vadd.f32 %v2092, 1.0
    %v2095 = vrcp.pop %v2093
    %v2096 = vmul.f32 %v2093, %v2095
    %v2097 = vsub.f32 1.0, %v2096
    %v2098 = vmul.f32 %v2095, %v2097
    %v2099 = vadd.f32 %v2095, %v2098
    %vm2100 = vweird.f32 %v2093
    %vm2101 = vweird.f32 %v2095
    %vm2102 = vmor %vm2100, %vm2101
    %v2103 = vsel %vm2102, %v2095, %v2099
    %v2104 = vand.u32 2147483647, %v2093
    %vm2105 = vcmp.eq.f32.partialorder %v2104, 8.507059e+37
    %v2106 = vand.u32 %v2093, 2147483648
    %v2107 = vor.u32 1.1754944e-38, %v2106
    %v2108 = vsel %vm2105, %v2107, %v2103
    %v2109 = vmul.f32 1.0, %v2108
    %v2110 = vrcp.pop %v2094
    %v2111 = vmul.f32 %v2094, %v2110
    %v2112 = vsub.f32 1.0, %v2111
    %v2113 = vmul.f32 %v2110, %v2112
    %v2114 = vadd.f32 %v2110, %v2113
    %vm2115 = vweird.f32 %v2094
    %vm2116 = vweird.f32 %v2110
    %vm2117 = vmor %vm2115, %vm2116
    %v2118 = vsel %vm2117, %v2110, %v2114
    %v2119 = vand.u32 2147483647, %v2094
    %vm2120 = vcmp.eq.f32.partialorder %v2119, 8.507059e+37
    %v2121 = vand.u32 %v2094, 2147483648
    %v2122 = vor.u32 1.1754944e-38, %v2121
    %v2123 = vsel %vm2120, %v2122, %v2118
    %v2124 = vmul.f32 1.0, %v2123
    %v2125 = vtanh.pop %v2067
    %v2126 = vtanh.pop %v2068
    %v2127 = vmul.f32 %v2109, %v2125
    %v2128 = vmul.f32 %v2124, %v2126
    %v2129 = vpack.c.bf16 %v2128, %v2127
    %v2130 = vld [vmem:[#allocation6] sm:$0xf]
    %v2131 = vld [vmem:[#allocation6 + $0x4] sm:$0xf]
    %v2132 = vld [vmem:[#allocation6 + $0x8] sm:$0xf]
    %v2133 = vld [vmem:[#allocation6 + $0xc] sm:$0xf]
    %v2134 = vld [vmem:[#allocation6 + $0x10] sm:$0xf]
    %v2135 = vld [vmem:[#allocation6 + $0x14] sm:$0xf]
    %v2136 = vld [vmem:[#allocation6 + $0x18] sm:$0xf]
    %v2137 = vld [vmem:[#allocation6 + $0x1c] sm:$0xf]
    %v2138 = vld [vmem:[#allocation6 + $0x20] sm:$0xf]
    %v2139 = vld [vmem:[#allocation6 + $0x24] sm:$0xf]
    %v2140 = vld [vmem:[#allocation6 + $0x28] sm:$0xf]
    %v2141 = vld [vmem:[#allocation6 + $0x2c] sm:$0xf]
    %v2142 = vld [vmem:[#allocation6 + $0x30] sm:$0xf]
    %v2143 = vld [vmem:[#allocation6 + $0x34] sm:$0xf]
    %v2144 = vld [vmem:[#allocation6 + $0x38] sm:$0xf]
    %v2145 = vld [vmem:[#allocation6 + $0x3c] sm:$0xf]
    %v2146 = vpack.c.bf16 %v274, %v273
    %v2147 = vld [vmem:[#allocation8] sm:$0xf]
    %v2148 = vld [vmem:[#allocation8 + $0x4] sm:$0xf]
    %v2149 = vld [vmem:[#allocation8 + $0x8] sm:$0xf]
    %v2150 = vld [vmem:[#allocation8 + $0xc] sm:$0xf]
    %v2151 = vld [vmem:[#allocation8 + $0x10] sm:$0xf]
    %v2152 = vld [vmem:[#allocation8 + $0x14] sm:$0xf]
    %v2153 = vld [vmem:[#allocation8 + $0x18] sm:$0xf]
    %v2154 = vld [vmem:[#allocation8 + $0x1c] sm:$0xf]
    %v2155 = vld [vmem:[#allocation8 + $0x20] sm:$0xf]
    %v2156 = vld [vmem:[#allocation8 + $0x24] sm:$0xf]
    %v2157 = vld [vmem:[#allocation8 + $0x28] sm:$0xf]
    %v2158 = vld [vmem:[#allocation8 + $0x2c] sm:$0xf]
    %v2159 = vld [vmem:[#allocation8 + $0x30] sm:$0xf]
    %v2160 = vld [vmem:[#allocation8 + $0x34] sm:$0xf]
    %v2161 = vld [vmem:[#allocation8 + $0x38] sm:$0xf]
    %v2162 = vld [vmem:[#allocation8 + $0x3c] sm:$0xf]
    %v2179 = vunpack.c.l.b16 %v2147
    %v2180 = vunpack.c.l.b16 %v2148
    %v2181 = vunpack.c.l.b16 %v2149
    %v2182 = vunpack.c.l.b16 %v2150
    %v2183 = vunpack.c.l.b16 %v2151
    %v2184 = vunpack.c.l.b16 %v2152
    %v2185 = vunpack.c.l.b16 %v2153
    %v2186 = vunpack.c.l.b16 %v2154
    %v2187 = vunpack.c.l.b16 %v2155
    %v2188 = vunpack.c.l.b16 %v2156
    %v2189 = vunpack.c.l.b16 %v2157
    %v2190 = vunpack.c.l.b16 %v2158
    %v2191 = vunpack.c.l.b16 %v2159
    %v2192 = vunpack.c.l.b16 %v2160
    %v2193 = vunpack.c.l.b16 %v2161
    %v2194 = vunpack.c.l.b16 %v2162
    %v2195 = vpack.c.b16 %v2180, %v2179
    %v2196 = vpack.c.b16 %v2182, %v2181
    %v2197 = vpack.c.b16 %v2184, %v2183
    %v2198 = vpack.c.b16 %v2186, %v2185
    %v2199 = vpack.c.b16 %v2188, %v2187
    %v2200 = vpack.c.b16 %v2190, %v2189
    %v2201 = vpack.c.b16 %v2192, %v2191
    %v2202 = vpack.c.b16 %v2194, %v2193
    %2211 = vmatpush.bf16.msra.mxu0 %v2202
    %2212 = vmatpush.bf16.msra.mxu0 %v2201
    %2213 = vmatpush.bf16.msra.mxu0 %v2200
    %2214 = vmatpush.bf16.msra.mxu0 %v2199
    %2215 = vmatpush.bf16.msra.mxu0 %v2198
    %2216 = vmatpush.bf16.msra.mxu0 %v2197
    %2217 = vmatpush.bf16.msra.mxu0 %v2196
    %2218 = vmatpush.bf16.msra.mxu0 %v2195
    %2219 = vmatmul.bf16.gmra.mxu0 %v2146
    %v2220 = vpop.f32.mrf.mxu0
    %v2221 = vadd.f32 0.0, %v2220
    %v2222 = vpop.f32.mrf.mxu0
    %v2223 = vadd.f32 0.0, %v2222
    %2224 = vdwg.mxu0
    %v2241 = vunpack.c.l.b16 %v2130
    %v2242 = vunpack.c.l.b16 %v2131
    %v2243 = vunpack.c.l.b16 %v2132
    %v2244 = vunpack.c.l.b16 %v2133
    %v2245 = vunpack.c.l.b16 %v2134
    %v2246 = vunpack.c.l.b16 %v2135
    %v2247 = vunpack.c.l.b16 %v2136
    %v2248 = vunpack.c.l.b16 %v2137
    %v2249 = vunpack.c.l.b16 %v2138
    %v2250 = vunpack.c.l.b16 %v2139
    %v2251 = vunpack.c.l.b16 %v2140
    %v2252 = vunpack.c.l.b16 %v2141
    %v2253 = vunpack.c.l.b16 %v2142
    %v2254 = vunpack.c.l.b16 %v2143
    %v2255 = vunpack.c.l.b16 %v2144
    %v2256 = vunpack.c.l.b16 %v2145
    %v2257 = vpack.c.b16 %v2242, %v2241
    %v2258 = vpack.c.b16 %v2244, %v2243
    %v2259 = vpack.c.b16 %v2246, %v2245
    %v2260 = vpack.c.b16 %v2248, %v2247
    %v2261 = vpack.c.b16 %v2250, %v2249
    %v2262 = vpack.c.b16 %v2252, %v2251
    %v2263 = vpack.c.b16 %v2254, %v2253
    %v2264 = vpack.c.b16 %v2256, %v2255
    %2273 = vmatpush.bf16.msra.mxu0 %v2264
    %2274 = vmatpush.bf16.msra.mxu0 %v2263
    %2275 = vmatpush.bf16.msra.mxu0 %v2262
    %2276 = vmatpush.bf16.msra.mxu0 %v2261
    %2277 = vmatpush.bf16.msra.mxu0 %v2260
    %2278 = vmatpush.bf16.msra.mxu0 %v2259
    %2279 = vmatpush.bf16.msra.mxu0 %v2258
    %2280 = vmatpush.bf16.msra.mxu0 %v2257
    %2281 = vmatmul.bf16.gmra.mxu0 %v2129
    %v2282 = vpop.f32.mrf.mxu0
    %v2283 = vadd.f32 %v2221, %v2282
    %v2284 = vpop.f32.mrf.mxu0
    %v2285 = vadd.f32 %v2223, %v2284
    %2286 = vdwg.mxu0
    %v2287 = vld [vmem:[%s9] sm:$0x1]
    %v2289 = vperm.slane %v2287, 0
    %v2291 = vadd.f32 %v2283, %v2289
    %v2292 = vadd.f32 %v2285, %v2289
    %v2293 = vmax.f32 %v2291, 0.0
    %v2294 = vmax.f32 %v2292, 0.0
    %v2295 = vld [vmem:[%s10] sm:$0x1]
    %v2297 = vperm.slane %v2295, 0
    %v2299 = vmul.f32 %v2293, %v2297
    %v2300 = vmul.f32 %v2294, %v2297
    %2301 = vadd.xlane.f32.xlu0 %v2299
    %v2302 = vpop.xlane.xlu0 %2301
    %2303 = vadd.xlane.f32.xlu0 %v2300
    %v2304 = vpop.xlane.xlu0 %2303
    %v2305 = vld [vmem:[#allocation3] sm:$0x1]
    %v2307 = vperm.slane %v2305, 0
    %v2309 = vadd.f32 %v2302, %v2307
    %v2310 = vadd.f32 %v2304, %v2307
    %v2311 = vxor.u32 %v2309, 2147483648
    %v2312 = vxor.u32 %v2310, 2147483648
    %v2313 = vmul.f32 %v2311, 1.442695
    %v2314 = vpow.pop %v2313
    %v2315 = vmul.f32 %v2312, 1.442695
    %v2316 = vpow.pop %v2315
    %v2317 = vadd.f32 %v2314, 1.0
    %v2318 = vadd.f32 %v2316, 1.0
    %v2319 = vrcp.pop %v2317
    %v2320 = vmul.f32 %v2317, %v2319
    %v2321 = vsub.f32 1.0, %v2320
    %v2322 = vmul.f32 %v2319, %v2321
    %v2323 = vadd.f32 %v2319, %v2322
    %vm2324 = vweird.f32 %v2317
    %vm2325 = vweird.f32 %v2319
    %vm2326 = vmor %vm2324, %vm2325
    %v2327 = vsel %vm2326, %v2319, %v2323
    %v2328 = vand.u32 2147483647, %v2317
    %vm2329 = vcmp.eq.f32.partialorder %v2328, 8.507059e+37
    %v2330 = vand.u32 %v2317, 2147483648
    %v2331 = vor.u32 1.1754944e-38, %v2330
    %v2332 = vsel %vm2329, %v2331, %v2327
    %v2333 = vmul.f32 1.0, %v2332
    %v2334 = vrcp.pop %v2318
    %v2335 = vmul.f32 %v2318, %v2334
    %v2336 = vsub.f32 1.0, %v2335
    %v2337 = vmul.f32 %v2334, %v2336
    %v2338 = vadd.f32 %v2334, %v2337
    %vm2339 = vweird.f32 %v2318
    %vm2340 = vweird.f32 %v2334
    %vm2341 = vmor %vm2339, %vm2340
    %v2342 = vsel %vm2341, %v2334, %v2338
    %v2343 = vand.u32 2147483647, %v2318
    %vm2344 = vcmp.eq.f32.partialorder %v2343, 8.507059e+37
    %v2345 = vand.u32 %v2318, 2147483648
    %v2346 = vor.u32 1.1754944e-38, %v2345
    %v2347 = vsel %vm2344, %v2346, %v2342
    %v2348 = vmul.f32 1.0, %v2347
    %2350 = vset.pattern.permute.xlu0 0
    %2351 = vperm.xlu0 %2350, %v2333
    %v2352 = vpop.permute.xlu0 %2351
    %2355 = vset.pattern.permute.xlu0 0
    %2356 = vperm.xlu0 %2355, %v2348
    %v2357 = vpop.permute.xlu0 %2356
    %2359 = vst [vmem:[%s12] sm:$0xff] %v2352
    %2360 = vst [vmem:[%s12 + $0x8] sm:$0xff] %v2357
    // Predicated region
    $region69: #{multimodal_anomaly_forward.1} parent=1 // pred_check
      _
    $region70: #{multimodal_anomaly_forward.1} parent=1 // pred_check_branch
      %2362 = sbr.rel (0) target = $region72
    $region71: #{multimodal_anomaly_forward.1} parent=1 // pred_region
      _
    $region72: #{multimodal_anomaly_forward.1} parent=1 // pred_fallthru
      _
    // Predicated region
    $region73: #{multimodal_anomaly_forward.1} parent=1 // pred_check
      _
    $region74: #{multimodal_anomaly_forward.1} parent=1 // pred_check_branch
      %2364 = sbr.rel (0) target = $region76
    $region75: #{multimodal_anomaly_forward.1} parent=1 // pred_region
      _
    $region76: #{multimodal_anomaly_forward.1} parent=1 // pred_fallthru
      _
    %2365 = vsyncpa [#allocation5], 1
    %2366 = vsyncpa [#allocation7], 1

</llo_original>
